<compile_context>
chip_gen: v6e
topology: v6e:2x2x1
jax: 0.10.0
libtpu: 0.0.40
codegen_flags: <defaults>
</compile_context>

<pallas_src>
import functools

import numpy as np
import jax
import jax.numpy as jnp
from jax.experimental import pallas as pl
from jax.experimental.pallas import tpu as pltpu

# MORRConfig_20um_MQ-style all-pass microring device constants.
MRR_A = 0.8578   # attenuation factor a
MRR_R = 0.8985   # coupling factor r

DEFAULT_TILE_S = 512     # lane-dim tile (multiple of 128); sweepable
MAX_Q_UNROLL = 16        # if gx <= this, do all q in one grid step


def _round_up(x, m):
    return ((x + m - 1) // m) * m


# ---------------------------------------------------------------------------
# Pallas kernel: circulant block matmul + MORR transfer + differential rails
# ---------------------------------------------------------------------------
def _morr_propagate_kernel(scale_ref, x_ref, w_ref, o_ref, acc_ref, *, q_tile, a, r):
    # grid = (S tiles [parallel], q tiles [arbitrary/reduction, innermost])
    qi = pl.program_id(1)

    @pl.when(qi == 0)
    def _():
        acc_ref[...] = jnp.zeros_like(acc_ref)

    # All-pass MORR roundtrip-phase -> intensity transmission, rewritten as
    #   T(phi) = 1 - (1-a^2)(1-r^2) / (1 + (ar)^2 - 2ar cos(phi))
    c_num = (1.0 - a * a) * (1.0 - r * r)
    c_den = 1.0 + (a * r) ** 2
    c_cos = 2.0 * a * r

    acc = acc_ref[...]                          # (out_pad, TILE_S) f32
    for i in range(q_tile):                     # small static unroll
        wq = w_ref[i]                           # (out_pad, mb)   bf16
        xq = x_ref[i]                           # (mb, TILE_S)    bf16
        # v[o, s] = sum_j C[o, j] * x[q*mb + j, s]   (circulant block matmul)
        v = jnp.dot(wq, xq, preferred_element_type=jnp.float32)   # (out_pad, TILE_S)
        cosv = jnp.cos(v)
        t = 1.0 - c_num * pl.reciprocal(c_den - c_cos * cosv, approx=True)
        # Differential-rail weighted accumulation over input blocks q.
        acc = acc + scale_ref[qi * q_tile + i] * t
    acc_ref[...] = acc

    @pl.when(qi == pl.num_programs(1) - 1)
    def _():
        o_ref[...] = acc_ref[...].astype(o_ref.dtype)


def morr_propagate_pallas(x_blocks, w_blocks, scale, *, tile_s, q_tile):
    """x_blocks: (gx_pad, mb, S_pad) bf16; w_blocks: (gx_pad, out_pad, mb) bf16;
    scale: (gx_pad,) f32 (padded entries are zero). Returns (out_pad, S_pad) f32."""
    gx_pad, mb, S_pad = x_blocks.shape
    out_pad = w_blocks.shape[1]
    n_s = S_pad // tile_s
    n_q = gx_pad // q_tile

    kernel = functools.partial(_morr_propagate_kernel, q_tile=q_tile, a=MRR_A, r=MRR_R)

    # VMEM budget: double-buffered inputs/outputs + resident f32 accumulator.
    x_bytes = 2 * q_tile * mb * tile_s * x_blocks.dtype.itemsize
    w_bytes = 2 * q_tile * out_pad * mb * w_blocks.dtype.itemsize
    o_bytes = 2 * out_pad * tile_s * 4
    acc_bytes = out_pad * tile_s * 4
    # Clamp to 48 MiB so we stay comfortably inside v7x's 64 MiB physical VMEM.
    vmem_limit = int(min(max(2 * (x_bytes + w_bytes + o_bytes + acc_bytes) + (8 << 20),
                             16 << 20), 48 << 20))

    cost = pl.CostEstimate(
        flops=2 * gx_pad * out_pad * mb * S_pad,
        transcendentals=gx_pad * out_pad * S_pad,           # one cos per v element
        bytes_accessed=(gx_pad * mb * S_pad * x_blocks.dtype.itemsize
                        + n_s * gx_pad * out_pad * mb * w_blocks.dtype.itemsize
                        + out_pad * S_pad * 4),
    )

    return pl.pallas_call(
        kernel,
        out_shape=jax.ShapeDtypeStruct((out_pad, S_pad), jnp.float32),
        grid_spec=pltpu.PrefetchScalarGridSpec(
            num_scalar_prefetch=0,
            grid=(n_s, n_q),
            in_specs=[
                pl.BlockSpec(memory_space=pltpu.MemorySpace.SMEM),            # scale (gx_pad,)
                pl.BlockSpec((q_tile, mb, tile_s), lambda s, q: (q, 0, s)),   # x blocks
                pl.BlockSpec((q_tile, out_pad, mb), lambda s, q: (q, 0, 0)),  # w blocks
            ],
            out_specs=pl.BlockSpec((out_pad, tile_s), lambda s, q: (0, s)),   # lane-dense out
            scratch_shapes=[pltpu.VMEM((out_pad, tile_s), jnp.float32)],      # f32 accumulator
        ),
        compiler_params=pltpu.CompilerParams(
            dimension_semantics=("parallel", "arbitrary"),
            vmem_limit_bytes=vmem_limit,
        ),
        cost_estimate=cost,
    )(scale, x_blocks, w_blocks)


# ---------------------------------------------------------------------------
# Glue: im2col (directly in block layout), circulant expansion, scales
# ---------------------------------------------------------------------------
def im2col_blocks(x, k, stride, padding, gx, mb):
    """Matches im2col_2d (F.unfold): rows ordered (c, kh, kw); columns ordered
    (h_out, w_out, n) with batch fastest. Returns blocks of shape (gx, mb, S)
    directly (rows zero-padded to gx*mb) to avoid extra transposes."""
    n, c, h, w = x.shape
    xp = jnp.pad(x, ((0, 0), (0, 0), (padding, padding), (padding, padding)))
    h_out = (h - k + 2 * padding) // stride + 1
    w_out = (w - k + 2 * padding) // stride + 1
    patches = []
    for i in range(k):
        for j in range(k):
            patches.append(xp[:, :, i:i + stride * h_out:stride, j:j + stride * w_out:stride])
    p = jnp.stack(patches, axis=2).reshape(n, c * k * k, h_out * w_out)
    S = h_out * w_out * n
    X = jnp.transpose(p, (1, 2, 0)).reshape(c * k * k, S)   # (c*k*k, S), batch fastest
    wic, wic_pad = c * k * k, gx * mb
    if wic_pad > wic:
        X = jnp.concatenate([X, jnp.zeros((wic_pad - wic, S), X.dtype)], axis=0)
    return X.reshape(gx, mb, S), h_out, w_out, S


def circulant(wvec):
    """wvec: (..., mb) -> (..., mb, mb) circulant with C[..., i, j] = w[..., (i-j) % mb]."""
    mb = wvec.shape[-1]
    idx = (jnp.arange(mb)[:, None] - jnp.arange(mb)[None, :]) % mb
    return wvec[..., idx]


def build_scale(morr_output_scale, gx):
    s_main = morr_output_scale[:-1]
    s_pad = morr_output_scale[-1:]
    if gx % 2 == 0:
        return jnp.concatenate([s_main, -s_main], axis=0)
    elif gx > 1:
        return jnp.concatenate([morr_output_scale, -s_main], axis=0)
    else:
        return s_pad


def allpass_morr_circulant_conv2d(x, weight, morr_output_scale, *, out_channels,
                                  kernel_size, miniblock, stride, padding,
                                  tile_s=DEFAULT_TILE_S):
    n, c, h, w = x.shape
    gy, gx, mb = weight.shape
    out_pad = gy * mb

    # build_weight (w_bit >= 16): weight.abs(); input_modulator: x -> x*x
    W = jnp.abs(weight)
    xm = x * x

    x_blocks, h_out, w_out, S = im2col_blocks(xm, kernel_size, stride, padding, gx, mb)

    # S tiling (lane dim): multiple of 128, padded columns are zero and sliced off.
    tile_s = min(tile_s, _round_up(S, 128))
    S_pad = _round_up(S, tile_s)

    # q tiling: process several miniblock-columns per grid step.
    q_tile = gx if gx <= MAX_Q_UNROLL else 8
    gx_pad = _round_up(gx, q_tile)

    # circulant expansion, transposed so v = w_block @ x_block:
    #   w_blocks[q, p*mb + i, j] = W[p, q, (i - j) % mb]
    Wc = circulant(W)                                            # (gy, gx, mb, mb)
    w_blocks = jnp.transpose(Wc, (1, 0, 2, 3)).reshape(gx, out_pad, mb)

    scale = build_scale(morr_output_scale, gx).astype(jnp.float32)

    # bf16 HBM storage (halves input DMA); padded q blocks have zero scale so
    # their nonzero T(0) contribution is cancelled exactly.
    x_blocks = x_blocks.astype(jnp.bfloat16)
    w_blocks = w_blocks.astype(jnp.bfloat16)
    x_blocks = jnp.pad(x_blocks, ((0, gx_pad - gx), (0, 0), (0, S_pad - S)))
    w_blocks = jnp.pad(w_blocks, ((0, gx_pad - gx), (0, 0), (0, 0)))
    scale = jnp.pad(scale, (0, gx_pad - gx))

    y = morr_propagate_pallas(x_blocks, w_blocks, scale, tile_s=tile_s, q_tile=q_tile)
    y = y[:out_channels, :S]                                     # drop padded channels / cols
    y = y.reshape(out_channels, h_out, w_out, n)                 # S ordered (h, w, n)
    return jnp.transpose(y, (3, 0, 1, 2))                        # NCHW


# ---------------------------------------------------------------------------
# Pure-JAX reference (no Pallas) for validation.  Uses the same bf16 storage
# of x/w blocks so the comparison isolates kernel plumbing + approx reciprocal.
# ---------------------------------------------------------------------------
def reference_forward(x, weight, morr_output_scale, *, out_channels,
                      kernel_size, miniblock, stride, padding):
    n, c, h, w = x.shape
    gy, gx, mb = weight.shape
    W = jnp.abs(weight)
    xm = x * x
    x_blocks, h_out, w_out, S = im2col_blocks(xm, kernel_size, stride, padding, gx, mb)
    xb = x_blocks.astype(jnp.bfloat16)                                   # (gx, mb, S)
    Wc = circulant(W)
    wb = jnp.transpose(Wc, (1, 0, 2, 3)).reshape(gx, gy * mb, mb).astype(jnp.bfloat16)
    v = jnp.einsum('qom,qms->qos', wb, xb, preferred_element_type=jnp.float32)
    a, r = MRR_A, MRR_R
    cosv = jnp.cos(v)
    t = (a * a + r * r - 2 * a * r * cosv) / (1 + (a * r) ** 2 - 2 * a * r * cosv)
    scale = build_scale(morr_output_scale, gx).astype(jnp.float32)
    y = jnp.einsum('q,qos->os', scale, t)[:out_channels, :]              # (out, S)
    y = y.reshape(out_channels, h_out, w_out, n)
    return jnp.transpose(y, (3, 0, 1, 2))


# ---------------------------------------------------------------------------
if __name__ == "__main__":
    key = jax.random.PRNGKey(0)
    in_channels, out_channels, kernel_size = 4, 8, 3
    miniblock, stride, padding = 4, 1, 1
    n, H, Wd = 2, 16, 16

    # module parameter shapes (build_parameters)
    weight_in_channels = kernel_size * kernel_size * in_channels
    weight_in_channels_pad = int(np.ceil(weight_in_channels / miniblock)) * miniblock
    out_channels_pad = int(np.ceil(out_channels / miniblock)) * miniblock
    grid_dim_y = out_channels_pad // miniblock
    grid_dim_x = weight_in_channels_pad // miniblock

    kx, kw, ks = jax.random.split(key, 3)
    x = jax.random.normal(kx, (n, in_channels, H, Wd), dtype=jnp.float32)
    # deterministic synthetic init (kaiming-ish for weight, small normal for scale)
    weight = jax.random.normal(kw, (grid_dim_y, grid_dim_x, miniblock),
                               dtype=jnp.float32) * (2.0 / weight_in_channels) ** 0.5
    morr_output_scale = jax.random.normal(
        ks, (max(1, grid_dim_x // 2) + 1,), dtype=jnp.float32) * 0.1

    out = allpass_morr_circulant_conv2d(
        x, weight, morr_output_scale,
        out_channels=out_channels, kernel_size=kernel_size,
        miniblock=miniblock, stride=stride, padding=padding)
    out = jax.block_until_ready(out)

    ref = reference_forward(
        x, weight, morr_output_scale,
        out_channels=out_channels, kernel_size=kernel_size,
        miniblock=miniblock, stride=stride, padding=padding)

    assert out.shape == (n, out_channels, H, Wd), out.shape
    # bf16 inputs are matched in the reference; residual diff is only the
    # approx reciprocal / transcendental implementation (<< 1e-2).
    np.testing.assert_allclose(np.asarray(out), np.asarray(ref), rtol=1e-2, atol=1e-2)
    print("KERNEL_OK")
</pallas_src>

<mosaic_0001>
module attributes {stable_mosaic.version = 11 : i64} {
  func.func @_morr_propagate_kernel(%arg0: i32, %arg1: i32, %arg2: memref<9xf32, #tpu.memory_space<smem>>, %arg3: memref<9x4x512xbf16, #tpu.memory_space<vmem>>, %arg4: memref<9x8x4xbf16, #tpu.memory_space<vmem>>, %arg5: memref<8x512xf32, #tpu.memory_space<vmem>>, %arg6: memref<8x512xf32, #tpu.memory_space<vmem>>) attributes {dimension_semantics = [#tpu.dimension_semantics<parallel>, #tpu.dimension_semantics<arbitrary>], iteration_bounds = array<i64: 1, 1>, scalar_prefetch = 0 : i64, scratch_operands = 1 : i64, tpu.core_type = #tpu.core_type<tc>, window_params = [{transform_indices = @transform_0, window_bounds = array<i64: 9>}, {transform_indices = @transform_1, window_bounds = array<i64: 9, 4, 512>}, {transform_indices = @transform_2, window_bounds = array<i64: 9, 8, 4>}, {transform_indices = @transform_3, window_bounds = array<i64: 8, 512>}]} {
    %c0_i32 = arith.constant 0 : i32
    %0 = arith.cmpi eq, %arg1, %c0_i32 : i32
    %1 = arith.extui %0 : i1 to i32
    %c0_i32_0 = arith.constant 0 : i32
    %2 = arith.cmpi ne, %1, %c0_i32_0 : i32
    scf.if %2 {
      %cst_105 = arith.constant 0.000000e+00 : f32
      %206 = vector.broadcast %cst_105 : f32 to vector<8x512xf32>
      %c0_106 = arith.constant 0 : index
      %c0_107 = arith.constant 0 : index
      %207 = vector.load %arg6[%c0_106, %c0_107] : memref<8x512xf32, #tpu.memory_space<vmem>>, vector<8x512xf32>
      tpu.vector_store %arg6[%c0_106, %c0_107], %206 {strides = array<i32>} : memref<8x512xf32, #tpu.memory_space<vmem>>, vector<8x512xf32>,
    } else {
    }
    %c0 = arith.constant 0 : index
    %c0_1 = arith.constant 0 : index
    %3 = vector.load %arg6[%c0, %c0_1] : memref<8x512xf32, #tpu.memory_space<vmem>>, vector<8x512xf32>
    %c0_2 = arith.constant 0 : index
    %c0_3 = arith.constant 0 : index
    %c0_4 = arith.constant 0 : index
    %4 = vector.load %arg4[%c0_2, %c0_3, %c0_4] : memref<9x8x4xbf16, #tpu.memory_space<vmem>>, vector<1x8x4xbf16>
    %5 = vector.shape_cast %4 : vector<1x8x4xbf16> to vector<8x4xbf16>
    %c0_5 = arith.constant 0 : index
    %c0_6 = arith.constant 0 : index
    %c0_7 = arith.constant 0 : index
    %6 = vector.load %arg3[%c0_5, %c0_6, %c0_7] : memref<9x4x512xbf16, #tpu.memory_space<vmem>>, vector<1x4x512xbf16>
    %7 = vector.shape_cast %6 : vector<1x4x512xbf16> to vector<4x512xbf16>
    %cst = arith.constant dense<0.000000e+00> : vector<8x512xf32>
    %8 = tpu.matmul %5, %7, %cst {dimension_numbers = #tpu.dot_dimension_numbers<[1], [0], [0], [1], [0, 0, 1, 1], [], []>} : vector<8x4xbf16>, vector<4x512xbf16>, vector<8x512xf32> -> vector<8x512xf32>
    %9 = math.cos %8 : vector<8x512xf32>
    %cst_8 = arith.constant 1.54146659 : f32
    %10 = vector.broadcast %cst_8 : f32 to vector<8x512xf32>
    %11 = arith.mulf %10, %9 : vector<8x512xf32>
    %cst_9 = arith.constant 1.59402978 : f32
    %12 = vector.broadcast %cst_9 : f32 to vector<8x512xf32>
    %13 = arith.subf %12, %11 : vector<8x512xf32>
    %14 = tpu.reciprocal %13 {approx = true} : vector<8x512xf32> -> vector<8x512xf32>
    %cst_10 = arith.constant 0.050906729 : f32
    %15 = vector.broadcast %cst_10 : f32 to vector<8x512xf32>
    %16 = arith.mulf %15, %14 : vector<8x512xf32>
    %cst_11 = arith.constant 1.000000e+00 : f32
    %17 = vector.broadcast %cst_11 : f32 to vector<8x512xf32>
    %18 = arith.subf %17, %16 : vector<8x512xf32>
    %c9_i32 = arith.constant 9 : i32
    %19 = arith.muli %arg1, %c9_i32 : i32
    %c0_i32_12 = arith.constant 0 : i32
    %20 = arith.addi %19, %c0_i32_12 : i32
    %21 = arith.index_cast %20 : i32 to index
    %22 = memref.load %arg2[%21] : memref<9xf32, #tpu.memory_space<smem>>
    %23 = vector.broadcast %22 : f32 to vector<8x512xf32>
    %24 = arith.mulf %23, %18 : vector<8x512xf32>
    %25 = arith.addf %3, %24 : vector<8x512xf32>
    %c1 = arith.constant 1 : index
    %c0_13 = arith.constant 0 : index
    %c0_14 = arith.constant 0 : index
    %26 = vector.load %arg4[%c1, %c0_13, %c0_14] : memref<9x8x4xbf16, #tpu.memory_space<vmem>>, vector<1x8x4xbf16>
    %27 = vector.shape_cast %26 : vector<1x8x4xbf16> to vector<8x4xbf16>
    %c1_15 = arith.constant 1 : index
    %c0_16 = arith.constant 0 : index
    %c0_17 = arith.constant 0 : index
    %28 = vector.load %arg3[%c1_15, %c0_16, %c0_17] : memref<9x4x512xbf16, #tpu.memory_space<vmem>>, vector<1x4x512xbf16>
    %29 = vector.shape_cast %28 : vector<1x4x512xbf16> to vector<4x512xbf16>
    %cst_18 = arith.constant dense<0.000000e+00> : vector<8x512xf32>
    %30 = tpu.matmul %27, %29, %cst_18 {dimension_numbers = #tpu.dot_dimension_numbers<[1], [0], [0], [1], [0, 0, 1, 1], [], []>} : vector<8x4xbf16>, vector<4x512xbf16>, vector<8x512xf32> -> vector<8x512xf32>
    %31 = math.cos %30 : vector<8x512xf32>
    %cst_19 = arith.constant 1.54146659 : f32
    %32 = vector.broadcast %cst_19 : f32 to vector<8x512xf32>
    %33 = arith.mulf %32, %31 : vector<8x512xf32>
    %cst_20 = arith.constant 1.59402978 : f32
    %34 = vector.broadcast %cst_20 : f32 to vector<8x512xf32>
    %35 = arith.subf %34, %33 : vector<8x512xf32>
    %36 = tpu.reciprocal %35 {approx = true} : vector<8x512xf32> -> vector<8x512xf32>
    %cst_21 = arith.constant 0.050906729 : f32
    %37 = vector.broadcast %cst_21 : f32 to vector<8x512xf32>
    %38 = arith.mulf %37, %36 : vector<8x512xf32>
    %cst_22 = arith.constant 1.000000e+00 : f32
    %39 = vector.broadcast %cst_22 : f32 to vector<8x512xf32>
    %40 = arith.subf %39, %38 : vector<8x512xf32>
    %c9_i32_23 = arith.constant 9 : i32
    %41 = arith.muli %arg1, %c9_i32_23 : i32
    %c1_i32 = arith.constant 1 : i32
    %42 = arith.addi %41, %c1_i32 : i32
    %43 = arith.index_cast %42 : i32 to index
    %44 = memref.load %arg2[%43] : memref<9xf32, #tpu.memory_space<smem>>
    %45 = vector.broadcast %44 : f32 to vector<8x512xf32>
    %46 = arith.mulf %45, %40 : vector<8x512xf32>
    %47 = arith.addf %25, %46 : vector<8x512xf32>
    %c2 = arith.constant 2 : index
    %c0_24 = arith.constant 0 : index
    %c0_25 = arith.constant 0 : index
    %48 = vector.load %arg4[%c2, %c0_24, %c0_25] : memref<9x8x4xbf16, #tpu.memory_space<vmem>>, vector<1x8x4xbf16>
    %49 = vector.shape_cast %48 : vector<1x8x4xbf16> to vector<8x4xbf16>
    %c2_26 = arith.constant 2 : index
    %c0_27 = arith.constant 0 : index
    %c0_28 = arith.constant 0 : index
    %50 = vector.load %arg3[%c2_26, %c0_27, %c0_28] : memref<9x4x512xbf16, #tpu.memory_space<vmem>>, vector<1x4x512xbf16>
    %51 = vector.shape_cast %50 : vector<1x4x512xbf16> to vector<4x512xbf16>
    %cst_29 = arith.constant dense<0.000000e+00> : vector<8x512xf32>
    %52 = tpu.matmul %49, %51, %cst_29 {dimension_numbers = #tpu.dot_dimension_numbers<[1], [0], [0], [1], [0, 0, 1, 1], [], []>} : vector<8x4xbf16>, vector<4x512xbf16>, vector<8x512xf32> -> vector<8x512xf32>
    %53 = math.cos %52 : vector<8x512xf32>
    %cst_30 = arith.constant 1.54146659 : f32
    %54 = vector.broadcast %cst_30 : f32 to vector<8x512xf32>
    %55 = arith.mulf %54, %53 : vector<8x512xf32>
    %cst_31 = arith.constant 1.59402978 : f32
    %56 = vector.broadcast %cst_31 : f32 to vector<8x512xf32>
    %57 = arith.subf %56, %55 : vector<8x512xf32>
    %58 = tpu.reciprocal %57 {approx = true} : vector<8x512xf32> -> vector<8x512xf32>
    %cst_32 = arith.constant 0.050906729 : f32
    %59 = vector.broadcast %cst_32 : f32 to vector<8x512xf32>
    %60 = arith.mulf %59, %58 : vector<8x512xf32>
    %cst_33 = arith.constant 1.000000e+00 : f32
    %61 = vector.broadcast %cst_33 : f32 to vector<8x512xf32>
    %62 = arith.subf %61, %60 : vector<8x512xf32>
    %c9_i32_34 = arith.constant 9 : i32
    %63 = arith.muli %arg1, %c9_i32_34 : i32
    %c2_i32 = arith.constant 2 : i32
    %64 = arith.addi %63, %c2_i32 : i32
    %65 = arith.index_cast %64 : i32 to index
    %66 = memref.load %arg2[%65] : memref<9xf32, #tpu.memory_space<smem>>
    %67 = vector.broadcast %66 : f32 to vector<8x512xf32>
    %68 = arith.mulf %67, %62 : vector<8x512xf32>
    %69 = arith.addf %47, %68 : vector<8x512xf32>
    %c3 = arith.constant 3 : index
    %c0_35 = arith.constant 0 : index
    %c0_36 = arith.constant 0 : index
    %70 = vector.load %arg4[%c3, %c0_35, %c0_36] : memref<9x8x4xbf16, #tpu.memory_space<vmem>>, vector<1x8x4xbf16>
    %71 = vector.shape_cast %70 : vector<1x8x4xbf16> to vector<8x4xbf16>
    %c3_37 = arith.constant 3 : index
    %c0_38 = arith.constant 0 : index
    %c0_39 = arith.constant 0 : index
    %72 = vector.load %arg3[%c3_37, %c0_38, %c0_39] : memref<9x4x512xbf16, #tpu.memory_space<vmem>>, vector<1x4x512xbf16>
    %73 = vector.shape_cast %72 : vector<1x4x512xbf16> to vector<4x512xbf16>
    %cst_40 = arith.constant dense<0.000000e+00> : vector<8x512xf32>
    %74 = tpu.matmul %71, %73, %cst_40 {dimension_numbers = #tpu.dot_dimension_numbers<[1], [0], [0], [1], [0, 0, 1, 1], [], []>} : vector<8x4xbf16>, vector<4x512xbf16>, vector<8x512xf32> -> vector<8x512xf32>
    %75 = math.cos %74 : vector<8x512xf32>
    %cst_41 = arith.constant 1.54146659 : f32
    %76 = vector.broadcast %cst_41 : f32 to vector<8x512xf32>
    %77 = arith.mulf %76, %75 : vector<8x512xf32>
    %cst_42 = arith.constant 1.59402978 : f32
    %78 = vector.broadcast %cst_42 : f32 to vector<8x512xf32>
    %79 = arith.subf %78, %77 : vector<8x512xf32>
    %80 = tpu.reciprocal %79 {approx = true} : vector<8x512xf32> -> vector<8x512xf32>
    %cst_43 = arith.constant 0.050906729 : f32
    %81 = vector.broadcast %cst_43 : f32 to vector<8x512xf32>
    %82 = arith.mulf %81, %80 : vector<8x512xf32>
    %cst_44 = arith.constant 1.000000e+00 : f32
    %83 = vector.broadcast %cst_44 : f32 to vector<8x512xf32>
    %84 = arith.subf %83, %82 : vector<8x512xf32>
    %c9_i32_45 = arith.constant 9 : i32
    %85 = arith.muli %arg1, %c9_i32_45 : i32
    %c3_i32 = arith.constant 3 : i32
    %86 = arith.addi %85, %c3_i32 : i32
    %87 = arith.index_cast %86 : i32 to index
    %88 = memref.load %arg2[%87] : memref<9xf32, #tpu.memory_space<smem>>
    %89 = vector.broadcast %88 : f32 to vector<8x512xf32>
    %90 = arith.mulf %89, %84 : vector<8x512xf32>
    %91 = arith.addf %69, %90 : vector<8x512xf32>
    %c4 = arith.constant 4 : index
    %c0_46 = arith.constant 0 : index
    %c0_47 = arith.constant 0 : index
    %92 = vector.load %arg4[%c4, %c0_46, %c0_47] : memref<9x8x4xbf16, #tpu.memory_space<vmem>>, vector<1x8x4xbf16>
    %93 = vector.shape_cast %92 : vector<1x8x4xbf16> to vector<8x4xbf16>
    %c4_48 = arith.constant 4 : index
    %c0_49 = arith.constant 0 : index
    %c0_50 = arith.constant 0 : index
    %94 = vector.load %arg3[%c4_48, %c0_49, %c0_50] : memref<9x4x512xbf16, #tpu.memory_space<vmem>>, vector<1x4x512xbf16>
    %95 = vector.shape_cast %94 : vector<1x4x512xbf16> to vector<4x512xbf16>
    %cst_51 = arith.constant dense<0.000000e+00> : vector<8x512xf32>
    %96 = tpu.matmul %93, %95, %cst_51 {dimension_numbers = #tpu.dot_dimension_numbers<[1], [0], [0], [1], [0, 0, 1, 1], [], []>} : vector<8x4xbf16>, vector<4x512xbf16>, vector<8x512xf32> -> vector<8x512xf32>
    %97 = math.cos %96 : vector<8x512xf32>
    %cst_52 = arith.constant 1.54146659 : f32
    %98 = vector.broadcast %cst_52 : f32 to vector<8x512xf32>
    %99 = arith.mulf %98, %97 : vector<8x512xf32>
    %cst_53 = arith.constant 1.59402978 : f32
    %100 = vector.broadcast %cst_53 : f32 to vector<8x512xf32>
    %101 = arith.subf %100, %99 : vector<8x512xf32>
    %102 = tpu.reciprocal %101 {approx = true} : vector<8x512xf32> -> vector<8x512xf32>
    %cst_54 = arith.constant 0.050906729 : f32
    %103 = vector.broadcast %cst_54 : f32 to vector<8x512xf32>
    %104 = arith.mulf %103, %102 : vector<8x512xf32>
    %cst_55 = arith.constant 1.000000e+00 : f32
    %105 = vector.broadcast %cst_55 : f32 to vector<8x512xf32>
    %106 = arith.subf %105, %104 : vector<8x512xf32>
    %c9_i32_56 = arith.constant 9 : i32
    %107 = arith.muli %arg1, %c9_i32_56 : i32
    %c4_i32 = arith.constant 4 : i32
    %108 = arith.addi %107, %c4_i32 : i32
    %109 = arith.index_cast %108 : i32 to index
    %110 = memref.load %arg2[%109] : memref<9xf32, #tpu.memory_space<smem>>
    %111 = vector.broadcast %110 : f32 to vector<8x512xf32>
    %112 = arith.mulf %111, %106 : vector<8x512xf32>
    %113 = arith.addf %91, %112 : vector<8x512xf32>
    %c5 = arith.constant 5 : index
    %c0_57 = arith.constant 0 : index
    %c0_58 = arith.constant 0 : index
    %114 = vector.load %arg4[%c5, %c0_57, %c0_58] : memref<9x8x4xbf16, #tpu.memory_space<vmem>>, vector<1x8x4xbf16>
    %115 = vector.shape_cast %114 : vector<1x8x4xbf16> to vector<8x4xbf16>
    %c5_59 = arith.constant 5 : index
    %c0_60 = arith.constant 0 : index
    %c0_61 = arith.constant 0 : index
    %116 = vector.load %arg3[%c5_59, %c0_60, %c0_61] : memref<9x4x512xbf16, #tpu.memory_space<vmem>>, vector<1x4x512xbf16>
    %117 = vector.shape_cast %116 : vector<1x4x512xbf16> to vector<4x512xbf16>
    %cst_62 = arith.constant dense<0.000000e+00> : vector<8x512xf32>
    %118 = tpu.matmul %115, %117, %cst_62 {dimension_numbers = #tpu.dot_dimension_numbers<[1], [0], [0], [1], [0, 0, 1, 1], [], []>} : vector<8x4xbf16>, vector<4x512xbf16>, vector<8x512xf32> -> vector<8x512xf32>
    %119 = math.cos %118 : vector<8x512xf32>
    %cst_63 = arith.constant 1.54146659 : f32
    %120 = vector.broadcast %cst_63 : f32 to vector<8x512xf32>
    %121 = arith.mulf %120, %119 : vector<8x512xf32>
    %cst_64 = arith.constant 1.59402978 : f32
    %122 = vector.broadcast %cst_64 : f32 to vector<8x512xf32>
    %123 = arith.subf %122, %121 : vector<8x512xf32>
    %124 = tpu.reciprocal %123 {approx = true} : vector<8x512xf32> -> vector<8x512xf32>
    %cst_65 = arith.constant 0.050906729 : f32
    %125 = vector.broadcast %cst_65 : f32 to vector<8x512xf32>
    %126 = arith.mulf %125, %124 : vector<8x512xf32>
    %cst_66 = arith.constant 1.000000e+00 : f32
    %127 = vector.broadcast %cst_66 : f32 to vector<8x512xf32>
    %128 = arith.subf %127, %126 : vector<8x512xf32>
    %c9_i32_67 = arith.constant 9 : i32
    %129 = arith.muli %arg1, %c9_i32_67 : i32
    %c5_i32 = arith.constant 5 : i32
    %130 = arith.addi %129, %c5_i32 : i32
    %131 = arith.index_cast %130 : i32 to index
    %132 = memref.load %arg2[%131] : memref<9xf32, #tpu.memory_space<smem>>
    %133 = vector.broadcast %132 : f32 to vector<8x512xf32>
    %134 = arith.mulf %133, %128 : vector<8x512xf32>
    %135 = arith.addf %113, %134 : vector<8x512xf32>
    %c6 = arith.constant 6 : index
    %c0_68 = arith.constant 0 : index
    %c0_69 = arith.constant 0 : index
    %136 = vector.load %arg4[%c6, %c0_68, %c0_69] : memref<9x8x4xbf16, #tpu.memory_space<vmem>>, vector<1x8x4xbf16>
    %137 = vector.shape_cast %136 : vector<1x8x4xbf16> to vector<8x4xbf16>
    %c6_70 = arith.constant 6 : index
    %c0_71 = arith.constant 0 : index
    %c0_72 = arith.constant 0 : index
    %138 = vector.load %arg3[%c6_70, %c0_71, %c0_72] : memref<9x4x512xbf16, #tpu.memory_space<vmem>>, vector<1x4x512xbf16>
    %139 = vector.shape_cast %138 : vector<1x4x512xbf16> to vector<4x512xbf16>
    %cst_73 = arith.constant dense<0.000000e+00> : vector<8x512xf32>
    %140 = tpu.matmul %137, %139, %cst_73 {dimension_numbers = #tpu.dot_dimension_numbers<[1], [0], [0], [1], [0, 0, 1, 1], [], []>} : vector<8x4xbf16>, vector<4x512xbf16>, vector<8x512xf32> -> vector<8x512xf32>
    %141 = math.cos %140 : vector<8x512xf32>
    %cst_74 = arith.constant 1.54146659 : f32
    %142 = vector.broadcast %cst_74 : f32 to vector<8x512xf32>
    %143 = arith.mulf %142, %141 : vector<8x512xf32>
    %cst_75 = arith.constant 1.59402978 : f32
    %144 = vector.broadcast %cst_75 : f32 to vector<8x512xf32>
    %145 = arith.subf %144, %143 : vector<8x512xf32>
    %146 = tpu.reciprocal %145 {approx = true} : vector<8x512xf32> -> vector<8x512xf32>
    %cst_76 = arith.constant 0.050906729 : f32
    %147 = vector.broadcast %cst_76 : f32 to vector<8x512xf32>
    %148 = arith.mulf %147, %146 : vector<8x512xf32>
    %cst_77 = arith.constant 1.000000e+00 : f32
    %149 = vector.broadcast %cst_77 : f32 to vector<8x512xf32>
    %150 = arith.subf %149, %148 : vector<8x512xf32>
    %c9_i32_78 = arith.constant 9 : i32
    %151 = arith.muli %arg1, %c9_i32_78 : i32
    %c6_i32 = arith.constant 6 : i32
    %152 = arith.addi %151, %c6_i32 : i32
    %153 = arith.index_cast %152 : i32 to index
    %154 = memref.load %arg2[%153] : memref<9xf32, #tpu.memory_space<smem>>
    %155 = vector.broadcast %154 : f32 to vector<8x512xf32>
    %156 = arith.mulf %155, %150 : vector<8x512xf32>
    %157 = arith.addf %135, %156 : vector<8x512xf32>
    %c7 = arith.constant 7 : index
    %c0_79 = arith.constant 0 : index
    %c0_80 = arith.constant 0 : index
    %158 = vector.load %arg4[%c7, %c0_79, %c0_80] : memref<9x8x4xbf16, #tpu.memory_space<vmem>>, vector<1x8x4xbf16>
    %159 = vector.shape_cast %158 : vector<1x8x4xbf16> to vector<8x4xbf16>
    %c7_81 = arith.constant 7 : index
    %c0_82 = arith.constant 0 : index
    %c0_83 = arith.constant 0 : index
    %160 = vector.load %arg3[%c7_81, %c0_82, %c0_83] : memref<9x4x512xbf16, #tpu.memory_space<vmem>>, vector<1x4x512xbf16>
    %161 = vector.shape_cast %160 : vector<1x4x512xbf16> to vector<4x512xbf16>
    %cst_84 = arith.constant dense<0.000000e+00> : vector<8x512xf32>
    %162 = tpu.matmul %159, %161, %cst_84 {dimension_numbers = #tpu.dot_dimension_numbers<[1], [0], [0], [1], [0, 0, 1, 1], [], []>} : vector<8x4xbf16>, vector<4x512xbf16>, vector<8x512xf32> -> vector<8x512xf32>
    %163 = math.cos %162 : vector<8x512xf32>
    %cst_85 = arith.constant 1.54146659 : f32
    %164 = vector.broadcast %cst_85 : f32 to vector<8x512xf32>
    %165 = arith.mulf %164, %163 : vector<8x512xf32>
    %cst_86 = arith.constant 1.59402978 : f32
    %166 = vector.broadcast %cst_86 : f32 to vector<8x512xf32>
    %167 = arith.subf %166, %165 : vector<8x512xf32>
    %168 = tpu.reciprocal %167 {approx = true} : vector<8x512xf32> -> vector<8x512xf32>
    %cst_87 = arith.constant 0.050906729 : f32
    %169 = vector.broadcast %cst_87 : f32 to vector<8x512xf32>
    %170 = arith.mulf %169, %168 : vector<8x512xf32>
    %cst_88 = arith.constant 1.000000e+00 : f32
    %171 = vector.broadcast %cst_88 : f32 to vector<8x512xf32>
    %172 = arith.subf %171, %170 : vector<8x512xf32>
    %c9_i32_89 = arith.constant 9 : i32
    %173 = arith.muli %arg1, %c9_i32_89 : i32
    %c7_i32 = arith.constant 7 : i32
    %174 = arith.addi %173, %c7_i32 : i32
    %175 = arith.index_cast %174 : i32 to index
    %176 = memref.load %arg2[%175] : memref<9xf32, #tpu.memory_space<smem>>
    %177 = vector.broadcast %176 : f32 to vector<8x512xf32>
    %178 = arith.mulf %177, %172 : vector<8x512xf32>
    %179 = arith.addf %157, %178 : vector<8x512xf32>
    %c8 = arith.constant 8 : index
    %c0_90 = arith.constant 0 : index
    %c0_91 = arith.constant 0 : index
    %180 = vector.load %arg4[%c8, %c0_90, %c0_91] : memref<9x8x4xbf16, #tpu.memory_space<vmem>>, vector<1x8x4xbf16>
    %181 = vector.shape_cast %180 : vector<1x8x4xbf16> to vector<8x4xbf16>
    %c8_92 = arith.constant 8 : index
    %c0_93 = arith.constant 0 : index
    %c0_94 = arith.constant 0 : index
    %182 = vector.load %arg3[%c8_92, %c0_93, %c0_94] : memref<9x4x512xbf16, #tpu.memory_space<vmem>>, vector<1x4x512xbf16>
    %183 = vector.shape_cast %182 : vector<1x4x512xbf16> to vector<4x512xbf16>
    %cst_95 = arith.constant dense<0.000000e+00> : vector<8x512xf32>
    %184 = tpu.matmul %181, %183, %cst_95 {dimension_numbers = #tpu.dot_dimension_numbers<[1], [0], [0], [1], [0, 0, 1, 1], [], []>} : vector<8x4xbf16>, vector<4x512xbf16>, vector<8x512xf32> -> vector<8x512xf32>
    %185 = math.cos %184 : vector<8x512xf32>
    %cst_96 = arith.constant 1.54146659 : f32
    %186 = vector.broadcast %cst_96 : f32 to vector<8x512xf32>
    %187 = arith.mulf %186, %185 : vector<8x512xf32>
    %cst_97 = arith.constant 1.59402978 : f32
    %188 = vector.broadcast %cst_97 : f32 to vector<8x512xf32>
    %189 = arith.subf %188, %187 : vector<8x512xf32>
    %190 = tpu.reciprocal %189 {approx = true} : vector<8x512xf32> -> vector<8x512xf32>
    %cst_98 = arith.constant 0.050906729 : f32
    %191 = vector.broadcast %cst_98 : f32 to vector<8x512xf32>
    %192 = arith.mulf %191, %190 : vector<8x512xf32>
    %cst_99 = arith.constant 1.000000e+00 : f32
    %193 = vector.broadcast %cst_99 : f32 to vector<8x512xf32>
    %194 = arith.subf %193, %192 : vector<8x512xf32>
    %c9_i32_100 = arith.constant 9 : i32
    %195 = arith.muli %arg1, %c9_i32_100 : i32
    %c8_i32 = arith.constant 8 : i32
    %196 = arith.addi %195, %c8_i32 : i32
    %197 = arith.index_cast %196 : i32 to index
    %198 = memref.load %arg2[%197] : memref<9xf32, #tpu.memory_space<smem>>
    %199 = vector.broadcast %198 : f32 to vector<8x512xf32>
    %200 = arith.mulf %199, %194 : vector<8x512xf32>
    %201 = arith.addf %179, %200 : vector<8x512xf32>
    %c0_101 = arith.constant 0 : index
    %c0_102 = arith.constant 0 : index
    %202 = vector.load %arg6[%c0_101, %c0_102] : memref<8x512xf32, #tpu.memory_space<vmem>>, vector<8x512xf32>
    tpu.vector_store %arg6[%c0_101, %c0_102], %201 {strides = array<i32>} : memref<8x512xf32, #tpu.memory_space<vmem>>, vector<8x512xf32>,
    %c0_i32_103 = arith.constant 0 : i32
    %203 = arith.cmpi eq, %arg1, %c0_i32_103 : i32
    %204 = arith.extui %203 : i1 to i32
    %c0_i32_104 = arith.constant 0 : i32
    %205 = arith.cmpi ne, %204, %c0_i32_104 : i32
    scf.if %205 {
      %c0_105 = arith.constant 0 : index
      %c0_106 = arith.constant 0 : index
      %206 = vector.load %arg6[%c0_105, %c0_106] : memref<8x512xf32, #tpu.memory_space<vmem>>, vector<8x512xf32>
      %c0_107 = arith.constant 0 : index
      %c0_108 = arith.constant 0 : index
      %207 = vector.load %arg5[%c0_107, %c0_108] : memref<8x512xf32, #tpu.memory_space<vmem>>, vector<8x512xf32>
      tpu.vector_store %arg5[%c0_107, %c0_108], %206 {strides = array<i32>} : memref<8x512xf32, #tpu.memory_space<vmem>>, vector<8x512xf32>,
    } else {
    }
    return
  }
  func.func @transform_0(%arg0: i32, %arg1: i32) -> i32 {
    %c0_i32 = arith.constant 0 : i32
    %c0_i32_0 = arith.constant 0 : i32
    return %c0_i32 : i32
  }
  func.func @transform_1(%arg0: i32, %arg1: i32) -> (i32, i32, i32) {
    %c0_i32 = arith.constant 0 : i32
    %c0_i32_0 = arith.constant 0 : i32
    return %arg1, %c0_i32, %arg0 : i32, i32, i32
  }
  func.func @transform_2(%arg0: i32, %arg1: i32) -> (i32, i32, i32) {
    %c0_i32 = arith.constant 0 : i32
    %c0_i32_0 = arith.constant 0 : i32
    %c0_i32_1 = arith.constant 0 : i32
    return %arg1, %c0_i32, %c0_i32_0 : i32, i32, i32
  }
  func.func @transform_3(%arg0: i32, %arg1: i32) -> (i32, i32) {
    %c0_i32 = arith.constant 0 : i32
    %c0_i32_0 = arith.constant 0 : i32
    return %c0_i32, %arg0 : i32, i32
  }
}

</mosaic_0001>

<llo_original>
// kernel: tpu_custom_call.1
$region0: #{tpu_custom_call.1}
  #allocation0 [shape = 'u32[]', space=smem, size = 0x4, offset = 0x4, fixed_abs, tag = 'smem constant byte address 0x4 - core index']
  #allocation1 [shape = 'u32[144,128]{1,0:T(1,128)}', space=vmem, size = 0x12000, scoped, tag = 'internal scratch']
  #allocation2 [shape = 'f32[8,512]{1,0:T(8,128)}', space=vmem, size = 0x4000, scoped, tag = 'scratch operand']
  %s0 = inlined_call_operand.vmem [shape: f32[9], index: 0, kind: input, shape index: {}]
  %s1 = inlined_call_operand.hbm [shape: bf16[9,4,512], index: 1, kind: input, shape index: {}]
  %s2 = inlined_call_operand.vmem [shape: bf16[9,8,4], index: 2, kind: input, shape index: {}]
  %s3 = inlined_call_operand.hbm [shape: f32[8,512], index: 3, kind: output, shape index: {}]
  %s4 = sld [smem:[#allocation0]]
  $region38: #{tpu_custom_call.1} parent=0
    _
  %s6 = ssub.s32 1, %s4
  %s7 = scalar_select 0, %s6, %s4
  $region1: #{tpu_custom_call.1} parent=0
    #allocation3 [shape = 'u8[512]{0}', space=smem, size = 0x200, scoped, tag = 'input window, operand 0, single buffered']
    #allocation4 [shape = 's32[1]{0}', space=sflag, size = 0x4, scoped, tag = 'scoped memory for tpu_custom_call.1']
    #allocation5 [shape = 's32[1]{0}', space=sflag, size = 0x4, scoped, tag = 'scoped memory for tpu_custom_call.1']
    #allocation6 [shape = 's32[1]{0}', space=sflag, size = 0x4, scoped, tag = 'scoped memory for tpu_custom_call.1']
    #allocation7 [shape = 'u8[36864]{0}', space=vmem, size = 0x9000, scoped, tag = 'input window, operand 1, single buffered']
    #allocation8 [shape = 'u8[16384]{0}', space=vmem, size = 0x4000, scoped, tag = 'output window, operand 0, single buffered']
    %8 = vsyncpa [#allocation6], 0
    %9 = vsyncpa [#allocation4], 0
    %10 = vsyncpa [#allocation5], 0
    // Predicated region
    $region2: #{tpu_custom_call.1} parent=1 // pred_check
      _
    $region3: #{tpu_custom_call.1} parent=1 // pred_check_branch
      %12 = sbr.rel (0) target = $region5
    $region4: #{tpu_custom_call.1} parent=1 // pred_region
      %s14 = ssub.s32 16, 16
      %15 = vsyncadd [#allocation6], %s14
      %s17 = sshll.u32 %s0, 4
      %s18 = int_to_ptr.vmem [resolvable:$true] %s17
      %20 = dma.vmem_to_smem %s18, 16, [#allocation3], [#allocation6]
    $region5: #{tpu_custom_call.1} parent=1 // pred_fallthru
      _
    // Predicated region
    $region6: #{tpu_custom_call.1} parent=1 // pred_check
      _
    $region7: #{tpu_custom_call.1} parent=1 // pred_check_branch
      %22 = sbr.rel (0) target = $region9
    $region8: #{tpu_custom_call.1} parent=1 // pred_region
      %s24 = ssub.s32 1152, 1152
      %25 = vsyncadd [#allocation4], %s24
      %s26 = sshll.u32 [#allocation7], 4
      %s27 = int_to_ptr.vmem [resolvable:$true] %s26
      %32 = dma.hbm_to_vmem [thread:$0]  %s1, 1152, %s27, [#allocation4], 128, 128, 8
    $region9: #{tpu_custom_call.1} parent=1 // pred_fallthru
      _
    // Predicated region
    $region10: #{tpu_custom_call.1} parent=1 // pred_check
      _
    $region11: #{tpu_custom_call.1} parent=1 // pred_check_branch
      %34 = sbr.rel (0) target = $region13
    $region12: #{tpu_custom_call.1} parent=1 // pred_region
      _
    $region13: #{tpu_custom_call.1} parent=1 // pred_fallthru
      _
    // Predicated region
    $region14: #{tpu_custom_call.1} parent=1 // pred_check
      _
    $region15: #{tpu_custom_call.1} parent=1 // pred_check_branch
      %36 = sbr.rel (0) target = $region17
    $region16: #{tpu_custom_call.1} parent=1 // pred_region
      %37 = dma.done [#allocation6], 16
    $region17: #{tpu_custom_call.1} parent=1 // pred_fallthru
      _
    // Predicated region
    $region18: #{tpu_custom_call.1} parent=1 // pred_check
      _
    $region19: #{tpu_custom_call.1} parent=1 // pred_check_branch
      %39 = sbr.rel (0) target = $region21
    $region20: #{tpu_custom_call.1} parent=1 // pred_region
      %40 = dma.done [#allocation4], 1152
    $region21: #{tpu_custom_call.1} parent=1 // pred_fallthru
      _
    %41 = sfence
    %p43 = scmp.eq.s32.totalorder 0, 0
    // Predicated region
    $region22: #{tpu_custom_call.1} parent=1 // pred_check
      %p44 = pneg %p43
    $region23: #{tpu_custom_call.1} parent=1 // pred_check_branch
      %46 = sbr.rel (%p44) target = $region25
    $region24: #{tpu_custom_call.1} parent=1 // pred_region
      %47 = vst [vmem:[#allocation2] sm:$0xff] 0.0
      %48 = vst [vmem:[#allocation2 + $0x8] sm:$0xff] 0.0
      %49 = vst [vmem:[#allocation2 + $0x10] sm:$0xff] 0.0
      %50 = vst [vmem:[#allocation2 + $0x18] sm:$0xff] 0.0
    $region25: #{tpu_custom_call.1} parent=1 // pred_fallthru
      _
    %v51 = vld [vmem:[#allocation2] sm:$0xff]
    %v52 = vld [vmem:[#allocation2 + $0x8] sm:$0xff]
    %v53 = vld [vmem:[#allocation2 + $0x10] sm:$0xff]
    %v54 = vld [vmem:[#allocation2 + $0x18] sm:$0xff]
    %v55 = vld [vmem:[%s2] sm:$0xf]
    %v56 = vld [vmem:[#allocation7] sm:$0xff]
    %v58 = vcombine.high %v56, %v56
    %v60 = vunpack.c.l.s4 1983009808
    %v61 = vunpack.c.0.s8 %v60
    %v62 = vlaneseq
    %v63 = vshrl.u32 %v62, 7
    %v64 = vsub.s32 %v61, %v63
    %v65 = vrot.slane %v56, %v64
    %v67 = vunpack.c.l.s4 1983009808
    %v68 = vunpack.c.0.s8 %v67
    %v69 = vlaneseq
    %v70 = vshrl.u32 %v69, 7
    %v71 = vsub.s32 %v68, %v70
    %v72 = vrot.slane %v58, %v71
    %v73 = vcombine.high %v65, %v65
    %v74 = vcombine.high %v72, %v72
    %vm75 = vcmask 31744
    %v77 = vsel %vm75, %v55, 0
    %vm79 = vcmask 1041408
    %v81 = vsel %vm79, %v65, 0
    %v84 = vsel %vm79, %v73, 0
    %v87 = vsel %vm79, %v72, 0
    %v90 = vsel %vm79, %v74, 0
    %92 = vmatprep.subr.bf16.mxu0 0
    %93 = vmatpush1.bf16.msra.mxu0 0
    %94 = vmatprep.subr.bf16.mxu0 0
    %95 = vmatpush1.bf16.msra.mxu0 0
    %96 = vmatprep.subr.bf16.mxu0 0
    %97 = vmatpush1.bf16.msra.mxu0 0
    %98 = vmatprep.subr.bf16.mxu0 0
    %99 = vmatpush1.bf16.msra.mxu0 0
    %100 = vmatprep.subr.bf16.mxu0 0
    %101 = vmatpush1.bf16.msra.mxu0 0
    %102 = vmatprep.subr.bf16.mxu0 0
    %103 = vmatpush1.bf16.msra.mxu0 0
    %104 = vmatprep.subr.bf16.mxu0 0
    %105 = vmatpush1.bf16.msra.mxu0 0
    %106 = vmatprep.subr.bf16.mxu0 %v84
    %107 = vmatpush1.bf16.msra.mxu0 %v81
    %108 = vmatprep.subr.bf16.mxu0 0
    %109 = vmatpush2.bf16.msra.mxu0 0
    %110 = vmatprep.subr.bf16.mxu0 0
    %111 = vmatpush2.bf16.msra.mxu0 0
    %112 = vmatprep.subr.bf16.mxu0 0
    %113 = vmatpush2.bf16.msra.mxu0 0
    %114 = vmatprep.subr.bf16.mxu0 0
    %115 = vmatpush2.bf16.msra.mxu0 0
    %116 = vmatprep.subr.bf16.mxu0 0
    %117 = vmatpush2.bf16.msra.mxu0 0
    %118 = vmatprep.subr.bf16.mxu0 0
    %119 = vmatpush2.bf16.msra.mxu0 0
    %120 = vmatprep.subr.bf16.mxu0 0
    %121 = vmatpush2.bf16.msra.mxu0 0
    %122 = vmatprep.subr.bf16.mxu0 0
    %123 = vmatpush2.bf16.msra.mxu0 0
    %124 = vmatprep.mubr.bf16.mxu0 0
    %125 = vmatmul.mubr.bf16.gmra.mxu0 %v77
    %v126 = vpop.f32.mrf.mxu0
    %v127 = vadd.f32 0.0, %v126
    %v128 = vpop.f32.mrf.mxu0
    %v129 = vadd.f32 0.0, %v128
    %v130 = vpop.f32.mrf.mxu0
    %v131 = vpop.f32.mrf.mxu0
    %132 = vdwg.mxu0
    %133 = vmatprep.subr.bf16.mxu0 0
    %134 = vmatpush1.bf16.msra.mxu0 0
    %135 = vmatprep.subr.bf16.mxu0 0
    %136 = vmatpush1.bf16.msra.mxu0 0
    %137 = vmatprep.subr.bf16.mxu0 0
    %138 = vmatpush1.bf16.msra.mxu0 0
    %139 = vmatprep.subr.bf16.mxu0 0
    %140 = vmatpush1.bf16.msra.mxu0 0
    %141 = vmatprep.subr.bf16.mxu0 0
    %142 = vmatpush1.bf16.msra.mxu0 0
    %143 = vmatprep.subr.bf16.mxu0 0
    %144 = vmatpush1.bf16.msra.mxu0 0
    %145 = vmatprep.subr.bf16.mxu0 0
    %146 = vmatpush1.bf16.msra.mxu0 0
    %147 = vmatprep.subr.bf16.mxu0 %v90
    %148 = vmatpush1.bf16.msra.mxu0 %v87
    %149 = vmatprep.subr.bf16.mxu0 0
    %150 = vmatpush2.bf16.msra.mxu0 0
    %151 = vmatprep.subr.bf16.mxu0 0
    %152 = vmatpush2.bf16.msra.mxu0 0
    %153 = vmatprep.subr.bf16.mxu0 0
    %154 = vmatpush2.bf16.msra.mxu0 0
    %155 = vmatprep.subr.bf16.mxu0 0
    %156 = vmatpush2.bf16.msra.mxu0 0
    %157 = vmatprep.subr.bf16.mxu0 0
    %158 = vmatpush2.bf16.msra.mxu0 0
    %159 = vmatprep.subr.bf16.mxu0 0
    %160 = vmatpush2.bf16.msra.mxu0 0
    %161 = vmatprep.subr.bf16.mxu0 0
    %162 = vmatpush2.bf16.msra.mxu0 0
    %163 = vmatprep.subr.bf16.mxu0 0
    %164 = vmatpush2.bf16.msra.mxu0 0
    %165 = vmatprep.mubr.bf16.mxu0 0
    %166 = vmatmul.mubr.bf16.gmra.mxu0 %v77
    %v167 = vpop.f32.mrf.mxu0
    %v168 = vadd.f32 0.0, %v167
    %v169 = vpop.f32.mrf.mxu0
    %v170 = vadd.f32 0.0, %v169
    %v171 = vpop.f32.mrf.mxu0
    %v172 = vpop.f32.mrf.mxu0
    %173 = vdwg.mxu0
    %v174 = vand.u32 2147483647, %v127
    %vm175 = vcmp.le.f32.partialorder %v174, 0.7853982
    %vm176 = vcmp.lt.s32.totalorder %v127, 0
    %v177 = vand.u32 %v127, 2139095040
    %v178 = vshrl.u32 %v177, 23
    %v179 = vsub.s32 %v178, 127
    %v180 = vand.u32 2147483647, %v127
    %v181 = vand.u32 %v180, 8388607
    %v182 = vor.u32 %v181, 8388608
    %v183 = vsub.s32 0, %v182
    %v184 = vadd.s32 %v179, 1
    %vm185 = vcmp.gt.s32.totalorder %v184, 0
    %v186 = vsel %vm185, %v184, 0
    %v187 = vshrl.u32 %v186, 5
    %v188 = vand.u32 %v186, 31
    %v189 = vsub.s32 32, %v188
    %v190 = vshrl.u32 683565275, %v189
    %v191 = vshll.u32 683565275, %v188
    %v192 = vshrl.u32 2475754826, %v189
    %v193 = vor.u32 %v191, %v192
    %v194 = vshll.u32 2475754826, %v188
    %v195 = vshrl.u32 2131351028, %v189
    %v196 = vor.u32 %v194, %v195
    %v197 = vshll.u32 2131351028, %v188
    %v198 = vshrl.u32 2102212464, %v189
    %v199 = vor.u32 %v197, %v198
    %v200 = vshll.u32 2102212464, %v188
    %v201 = vshrl.u32 920167782, %v189
    %v202 = vor.u32 %v200, %v201
    %v203 = vshll.u32 920167782, %v188
    %v204 = vshrl.u32 1326507024, %v189
    %v205 = vor.u32 %v203, %v204
    %vm206 = vcmp.lt.s32.totalorder %v187, 1
    %vm207 = vcmp.lt.s32.totalorder %v187, 2
    %vm208 = vcmp.lt.s32.totalorder %v187, 3
    %vm209 = vcmp.lt.s32.totalorder %v187, 4
    %v210 = vsel %vm206, %v190, %v193
    %v211 = vsel %vm209, %v199, 2102212464
    %v212 = vsel %vm208, %v196, %v211
    %v213 = vsel %vm207, %v210, %v212
    %v214 = vsel %vm206, %v193, %v196
    %v215 = vsel %vm209, %v202, 920167782
    %v216 = vsel %vm208, %v199, %v215
    %v217 = vsel %vm207, %v214, %v216
    %v218 = vsel %vm206, %v196, %v199
    %v219 = vsel %vm209, %v205, 1326507024
    %v220 = vsel %vm208, %v202, %v219
    %v221 = vsel %vm207, %v218, %v220
    %v222 = vshll.u32 %v182, 8
    %v223 = vmul.u32.u64.compose %v222, %v221
    %v224 = vextract.low.u32 %v223
    %v225 = vextract.high.u32 %v223
    %v226 = vmul.u32.u64.compose %v222, %v217
    %v227 = vextract.low.u32 %v226
    %v228 = vextract.high.u32 %v226
    %v229 = vmul.u32 %v222, %v213
    %v230 = vadd.s32 %v225, %v227
    %vm231 = vc.u32 %v225, %v227
    %v232 = vadd.s32 %v228, 1
    %v233 = vsel %vm231, %v232, %v228
    %v234 = vadd.s32 %v229, %v233
    %v235 = vadd.s32 %v234, 536870912
    %v236 = vshrl.u32 %v235, 30
    %v237 = vshll.u32 %v236, 30
    %v238 = vsub.s32 %v234, %v237
    %vm239 = vcmp.lt.s32.totalorder %v238, 0
    %v240 = vsub.s32 0, %v238
    %v241 = vsel %vm239, %v240, %v238
    %v242 = vclz %v241
    %v243 = vsub.s32 %v242, 2
    %vm244 = vcmp.gt.s32.totalorder 0, %v243
    %v245 = vsel %vm244, 0, %v243
    %v246 = vsub.s32 32, %v245
    %v247 = vshll.u32 %v238, %v245
    %v248 = vshrl.u32 %v230, %v246
    %v249 = vor.u32 %v247, %v248
    %v250 = vsub.s32 4294967266, %v245
    %v251 = vadd.s32 %v250, 127
    %v252 = vshll.u32 %v251, 23
    %v253 = vor.u32 4788187, %v252
    %v254 = vand.u32 2147483647, %v253
    %v256 = vcvt.s32.f32 %v249
    %v257 = vmul.f32 %v256, %v254
    %v258 = vxor.u32 %v257, 2147483648
    %v259 = vsel %vm176, %v258, %v257
    %v260 = vsub.s32 4, %v236
    %v261 = vsel %vm176, %v260, %v236
    %v262 = vsel %vm175, %v127, %v259
    %v263 = vsel %vm175, 0, %v261
    %v264 = vcosq.f32.pop %v262
    %v265 = vsinq.f32.pop %v262
    %vm266 = vweird.f32 %v127
    %v267 = vand.u32 %v263, 3
    %vm268 = vcmp.lt.s32.totalorder %v267, 2
    %vm269 = vcmp.eq.s32.totalorder %v267, 0
    %v270 = vxor.u32 %v265, 2147483648
    %v271 = vsel %vm269, %v264, %v270
    %vm272 = vcmp.eq.s32.totalorder %v267, 2
    %v273 = vxor.u32 %v264, 2147483648
    %v274 = vsel %vm272, %v273, %v265
    %v275 = vsel %vm268, %v271, %v274
    %v276 = vsel %vm266, nan, %v275
    %v277 = vand.u32 2147483647, %v129
    %vm278 = vcmp.le.f32.partialorder %v277, 0.7853982
    %vm279 = vcmp.lt.s32.totalorder %v129, 0
    %v280 = vand.u32 %v129, 2139095040
    %v281 = vshrl.u32 %v280, 23
    %v282 = vsub.s32 %v281, 127
    %v283 = vand.u32 2147483647, %v129
    %v284 = vand.u32 %v283, 8388607
    %v285 = vor.u32 %v284, 8388608
    %v286 = vsub.s32 0, %v285
    %v287 = vadd.s32 %v282, 1
    %vm288 = vcmp.gt.s32.totalorder %v287, 0
    %v289 = vsel %vm288, %v287, 0
    %v290 = vshrl.u32 %v289, 5
    %v291 = vand.u32 %v289, 31
    %v292 = vsub.s32 32, %v291
    %v293 = vshrl.u32 683565275, %v292
    %v294 = vshll.u32 683565275, %v291
    %v295 = vshrl.u32 2475754826, %v292
    %v296 = vor.u32 %v294, %v295
    %v297 = vshll.u32 2475754826, %v291
    %v298 = vshrl.u32 2131351028, %v292
    %v299 = vor.u32 %v297, %v298
    %v300 = vshll.u32 2131351028, %v291
    %v301 = vshrl.u32 2102212464, %v292
    %v302 = vor.u32 %v300, %v301
    %v303 = vshll.u32 2102212464, %v291
    %v304 = vshrl.u32 920167782, %v292
    %v305 = vor.u32 %v303, %v304
    %v306 = vshll.u32 920167782, %v291
    %v307 = vshrl.u32 1326507024, %v292
    %v308 = vor.u32 %v306, %v307
    %vm309 = vcmp.lt.s32.totalorder %v290, 1
    %vm310 = vcmp.lt.s32.totalorder %v290, 2
    %vm311 = vcmp.lt.s32.totalorder %v290, 3
    %vm312 = vcmp.lt.s32.totalorder %v290, 4
    %v313 = vsel %vm309, %v293, %v296
    %v314 = vsel %vm312, %v302, 2102212464
    %v315 = vsel %vm311, %v299, %v314
    %v316 = vsel %vm310, %v313, %v315
    %v317 = vsel %vm309, %v296, %v299
    %v318 = vsel %vm312, %v305, 920167782
    %v319 = vsel %vm311, %v302, %v318
    %v320 = vsel %vm310, %v317, %v319
    %v321 = vsel %vm309, %v299, %v302
    %v322 = vsel %vm312, %v308, 1326507024
    %v323 = vsel %vm311, %v305, %v322
    %v324 = vsel %vm310, %v321, %v323
    %v325 = vshll.u32 %v285, 8
    %v326 = vmul.u32.u64.compose %v325, %v324
    %v327 = vextract.low.u32 %v326
    %v328 = vextract.high.u32 %v326
    %v329 = vmul.u32.u64.compose %v325, %v320
    %v330 = vextract.low.u32 %v329
    %v331 = vextract.high.u32 %v329
    %v332 = vmul.u32 %v325, %v316
    %v333 = vadd.s32 %v328, %v330
    %vm334 = vc.u32 %v328, %v330
    %v335 = vadd.s32 %v331, 1
    %v336 = vsel %vm334, %v335, %v331
    %v337 = vadd.s32 %v332, %v336
    %v338 = vadd.s32 %v337, 536870912
    %v339 = vshrl.u32 %v338, 30
    %v340 = vshll.u32 %v339, 30
    %v341 = vsub.s32 %v337, %v340
    %vm342 = vcmp.lt.s32.totalorder %v341, 0
    %v343 = vsub.s32 0, %v341
    %v344 = vsel %vm342, %v343, %v341
    %v345 = vclz %v344
    %v346 = vsub.s32 %v345, 2
    %vm347 = vcmp.gt.s32.totalorder 0, %v346
    %v348 = vsel %vm347, 0, %v346
    %v349 = vsub.s32 32, %v348
    %v350 = vshll.u32 %v341, %v348
    %v351 = vshrl.u32 %v333, %v349
    %v352 = vor.u32 %v350, %v351
    %v353 = vsub.s32 4294967266, %v348
    %v354 = vadd.s32 %v353, 127
    %v355 = vshll.u32 %v354, 23
    %v356 = vor.u32 4788187, %v355
    %v357 = vand.u32 2147483647, %v356
    %v359 = vcvt.s32.f32 %v352
    %v360 = vmul.f32 %v359, %v357
    %v361 = vxor.u32 %v360, 2147483648
    %v362 = vsel %vm279, %v361, %v360
    %v363 = vsub.s32 4, %v339
    %v364 = vsel %vm279, %v363, %v339
    %v365 = vsel %vm278, %v129, %v362
    %v366 = vsel %vm278, 0, %v364
    %v367 = vcosq.f32.pop %v365
    %v368 = vsinq.f32.pop %v365
    %vm369 = vweird.f32 %v129
    %v370 = vand.u32 %v366, 3
    %vm371 = vcmp.lt.s32.totalorder %v370, 2
    %vm372 = vcmp.eq.s32.totalorder %v370, 0
    %v373 = vxor.u32 %v368, 2147483648
    %v374 = vsel %vm372, %v367, %v373
    %vm375 = vcmp.eq.s32.totalorder %v370, 2
    %v376 = vxor.u32 %v367, 2147483648
    %v377 = vsel %vm375, %v376, %v368
    %v378 = vsel %vm371, %v374, %v377
    %v379 = vsel %vm369, nan, %v378
    %v380 = vand.u32 2147483647, %v168
    %vm381 = vcmp.le.f32.partialorder %v380, 0.7853982
    %vm382 = vcmp.lt.s32.totalorder %v168, 0
    %v383 = vand.u32 %v168, 2139095040
    %v384 = vshrl.u32 %v383, 23
    %v385 = vsub.s32 %v384, 127
    %v386 = vand.u32 2147483647, %v168
    %v387 = vand.u32 %v386, 8388607
    %v388 = vor.u32 %v387, 8388608
    %v389 = vsub.s32 0, %v388
    %v390 = vadd.s32 %v385, 1
    %vm391 = vcmp.gt.s32.totalorder %v390, 0
    %v392 = vsel %vm391, %v390, 0
    %v393 = vshrl.u32 %v392, 5
    %v394 = vand.u32 %v392, 31
    %v395 = vsub.s32 32, %v394
    %v396 = vshrl.u32 683565275, %v395
    %v397 = vshll.u32 683565275, %v394
    %v398 = vshrl.u32 2475754826, %v395
    %v399 = vor.u32 %v397, %v398
    %v400 = vshll.u32 2475754826, %v394
    %v401 = vshrl.u32 2131351028, %v395
    %v402 = vor.u32 %v400, %v401
    %v403 = vshll.u32 2131351028, %v394
    %v404 = vshrl.u32 2102212464, %v395
    %v405 = vor.u32 %v403, %v404
    %v406 = vshll.u32 2102212464, %v394
    %v407 = vshrl.u32 920167782, %v395
    %v408 = vor.u32 %v406, %v407
    %v409 = vshll.u32 920167782, %v394
    %v410 = vshrl.u32 1326507024, %v395
    %v411 = vor.u32 %v409, %v410
    %vm412 = vcmp.lt.s32.totalorder %v393, 1
    %vm413 = vcmp.lt.s32.totalorder %v393, 2
    %vm414 = vcmp.lt.s32.totalorder %v393, 3
    %vm415 = vcmp.lt.s32.totalorder %v393, 4
    %v416 = vsel %vm412, %v396, %v399
    %v417 = vsel %vm415, %v405, 2102212464
    %v418 = vsel %vm414, %v402, %v417
    %v419 = vsel %vm413, %v416, %v418
    %v420 = vsel %vm412, %v399, %v402
    %v421 = vsel %vm415, %v408, 920167782
    %v422 = vsel %vm414, %v405, %v421
    %v423 = vsel %vm413, %v420, %v422
    %v424 = vsel %vm412, %v402, %v405
    %v425 = vsel %vm415, %v411, 1326507024
    %v426 = vsel %vm414, %v408, %v425
    %v427 = vsel %vm413, %v424, %v426
    %v428 = vshll.u32 %v388, 8
    %v429 = vmul.u32.u64.compose %v428, %v427
    %v430 = vextract.low.u32 %v429
    %v431 = vextract.high.u32 %v429
    %v432 = vmul.u32.u64.compose %v428, %v423
    %v433 = vextract.low.u32 %v432
    %v434 = vextract.high.u32 %v432
    %v435 = vmul.u32 %v428, %v419
    %v436 = vadd.s32 %v431, %v433
    %vm437 = vc.u32 %v431, %v433
    %v438 = vadd.s32 %v434, 1
    %v439 = vsel %vm437, %v438, %v434
    %v440 = vadd.s32 %v435, %v439
    %v441 = vadd.s32 %v440, 536870912
    %v442 = vshrl.u32 %v441, 30
    %v443 = vshll.u32 %v442, 30
    %v444 = vsub.s32 %v440, %v443
    %vm445 = vcmp.lt.s32.totalorder %v444, 0
    %v446 = vsub.s32 0, %v444
    %v447 = vsel %vm445, %v446, %v444
    %v448 = vclz %v447
    %v449 = vsub.s32 %v448, 2
    %vm450 = vcmp.gt.s32.totalorder 0, %v449
    %v451 = vsel %vm450, 0, %v449
    %v452 = vsub.s32 32, %v451
    %v453 = vshll.u32 %v444, %v451
    %v454 = vshrl.u32 %v436, %v452
    %v455 = vor.u32 %v453, %v454
    %v456 = vsub.s32 4294967266, %v451
    %v457 = vadd.s32 %v456, 127
    %v458 = vshll.u32 %v457, 23
    %v459 = vor.u32 4788187, %v458
    %v460 = vand.u32 2147483647, %v459
    %v462 = vcvt.s32.f32 %v455
    %v463 = vmul.f32 %v462, %v460
    %v464 = vxor.u32 %v463, 2147483648
    %v465 = vsel %vm382, %v464, %v463
    %v466 = vsub.s32 4, %v442
    %v467 = vsel %vm382, %v466, %v442
    %v468 = vsel %vm381, %v168, %v465
    %v469 = vsel %vm381, 0, %v467
    %v470 = vcosq.f32.pop %v468
    %v471 = vsinq.f32.pop %v468
    %vm472 = vweird.f32 %v168
    %v473 = vand.u32 %v469, 3
    %vm474 = vcmp.lt.s32.totalorder %v473, 2
    %vm475 = vcmp.eq.s32.totalorder %v473, 0
    %v476 = vxor.u32 %v471, 2147483648
    %v477 = vsel %vm475, %v470, %v476
    %vm478 = vcmp.eq.s32.totalorder %v473, 2
    %v479 = vxor.u32 %v470, 2147483648
    %v480 = vsel %vm478, %v479, %v471
    %v481 = vsel %vm474, %v477, %v480
    %v482 = vsel %vm472, nan, %v481
    %v483 = vand.u32 2147483647, %v170
    %vm484 = vcmp.le.f32.partialorder %v483, 0.7853982
    %vm485 = vcmp.lt.s32.totalorder %v170, 0
    %v486 = vand.u32 %v170, 2139095040
    %v487 = vshrl.u32 %v486, 23
    %v488 = vsub.s32 %v487, 127
    %v489 = vand.u32 2147483647, %v170
    %v490 = vand.u32 %v489, 8388607
    %v491 = vor.u32 %v490, 8388608
    %v492 = vsub.s32 0, %v491
    %v493 = vadd.s32 %v488, 1
    %vm494 = vcmp.gt.s32.totalorder %v493, 0
    %v495 = vsel %vm494, %v493, 0
    %v496 = vshrl.u32 %v495, 5
    %v497 = vand.u32 %v495, 31
    %v498 = vsub.s32 32, %v497
    %v499 = vshrl.u32 683565275, %v498
    %v500 = vshll.u32 683565275, %v497
    %v501 = vshrl.u32 2475754826, %v498
    %v502 = vor.u32 %v500, %v501
    %v503 = vshll.u32 2475754826, %v497
    %v504 = vshrl.u32 2131351028, %v498
    %v505 = vor.u32 %v503, %v504
    %v506 = vshll.u32 2131351028, %v497
    %v507 = vshrl.u32 2102212464, %v498
    %v508 = vor.u32 %v506, %v507
    %v509 = vshll.u32 2102212464, %v497
    %v510 = vshrl.u32 920167782, %v498
    %v511 = vor.u32 %v509, %v510
    %v512 = vshll.u32 920167782, %v497
    %v513 = vshrl.u32 1326507024, %v498
    %v514 = vor.u32 %v512, %v513
    %vm515 = vcmp.lt.s32.totalorder %v496, 1
    %vm516 = vcmp.lt.s32.totalorder %v496, 2
    %vm517 = vcmp.lt.s32.totalorder %v496, 3
    %vm518 = vcmp.lt.s32.totalorder %v496, 4
    %v519 = vsel %vm515, %v499, %v502
    %v520 = vsel %vm518, %v508, 2102212464
    %v521 = vsel %vm517, %v505, %v520
    %v522 = vsel %vm516, %v519, %v521
    %v523 = vsel %vm515, %v502, %v505
    %v524 = vsel %vm518, %v511, 920167782
    %v525 = vsel %vm517, %v508, %v524
    %v526 = vsel %vm516, %v523, %v525
    %v527 = vsel %vm515, %v505, %v508
    %v528 = vsel %vm518, %v514, 1326507024
    %v529 = vsel %vm517, %v511, %v528
    %v530 = vsel %vm516, %v527, %v529
    %v531 = vshll.u32 %v491, 8
    %v532 = vmul.u32.u64.compose %v531, %v530
    %v533 = vextract.low.u32 %v532
    %v534 = vextract.high.u32 %v532
    %v535 = vmul.u32.u64.compose %v531, %v526
    %v536 = vextract.low.u32 %v535
    %v537 = vextract.high.u32 %v535
    %v538 = vmul.u32 %v531, %v522
    %v539 = vadd.s32 %v534, %v536
    %vm540 = vc.u32 %v534, %v536
    %v541 = vadd.s32 %v537, 1
    %v542 = vsel %vm540, %v541, %v537
    %v543 = vadd.s32 %v538, %v542
    %v544 = vadd.s32 %v543, 536870912
    %v545 = vshrl.u32 %v544, 30
    %v546 = vshll.u32 %v545, 30
    %v547 = vsub.s32 %v543, %v546
    %vm548 = vcmp.lt.s32.totalorder %v547, 0
    %v549 = vsub.s32 0, %v547
    %v550 = vsel %vm548, %v549, %v547
    %v551 = vclz %v550
    %v552 = vsub.s32 %v551, 2
    %vm553 = vcmp.gt.s32.totalorder 0, %v552
    %v554 = vsel %vm553, 0, %v552
    %v555 = vsub.s32 32, %v554
    %v556 = vshll.u32 %v547, %v554
    %v557 = vshrl.u32 %v539, %v555
    %v558 = vor.u32 %v556, %v557
    %v559 = vsub.s32 4294967266, %v554
    %v560 = vadd.s32 %v559, 127
    %v561 = vshll.u32 %v560, 23
    %v562 = vor.u32 4788187, %v561
    %v563 = vand.u32 2147483647, %v562
    %v565 = vcvt.s32.f32 %v558
    %v566 = vmul.f32 %v565, %v563
    %v567 = vxor.u32 %v566, 2147483648
    %v568 = vsel %vm485, %v567, %v566
    %v569 = vsub.s32 4, %v545
    %v570 = vsel %vm485, %v569, %v545
    %v571 = vsel %vm484, %v170, %v568
    %v572 = vsel %vm484, 0, %v570
    %v573 = vcosq.f32.pop %v571
    %v574 = vsinq.f32.pop %v571
    %vm575 = vweird.f32 %v170
    %v576 = vand.u32 %v572, 3
    %vm577 = vcmp.lt.s32.totalorder %v576, 2
    %vm578 = vcmp.eq.s32.totalorder %v576, 0
    %v579 = vxor.u32 %v574, 2147483648
    %v580 = vsel %vm578, %v573, %v579
    %vm581 = vcmp.eq.s32.totalorder %v576, 2
    %v582 = vxor.u32 %v573, 2147483648
    %v583 = vsel %vm581, %v582, %v574
    %v584 = vsel %vm577, %v580, %v583
    %v585 = vsel %vm575, nan, %v584
    %v586 = vmul.f32 %v276, 1.5414666
    %v587 = vmul.f32 %v379, 1.5414666
    %v588 = vmul.f32 %v482, 1.5414666
    %v589 = vmul.f32 %v585, 1.5414666
    %v590 = vsub.f32 1.5940298, %v586
    %v591 = vsub.f32 1.5940298, %v587
    %v592 = vsub.f32 1.5940298, %v588
    %v593 = vsub.f32 1.5940298, %v589
    %v594 = vrcp.pop %v590
    %v595 = vrcp.pop %v591
    %v596 = vrcp.pop %v592
    %v597 = vrcp.pop %v593
    %v598 = vmul.f32 %v594, 0.05090673
    %v599 = vmul.f32 %v595, 0.05090673
    %v600 = vmul.f32 %v596, 0.05090673
    %v601 = vmul.f32 %v597, 0.05090673
    %v602 = vsub.f32 1.0, %v598
    %v603 = vsub.f32 1.0, %v599
    %v604 = vsub.f32 1.0, %v600
    %v605 = vsub.f32 1.0, %v601
    %s606 = smul.u32 0, 9
    %s607 = sld [smem:[#allocation3 + %s606]]
    %v608 = vstv %s607
    %v609 = vmul.f32 %v608, %v602
    %v610 = vmul.f32 %v608, %v603
    %v611 = vmul.f32 %v608, %v604
    %v612 = vmul.f32 %v608, %v605
    %v613 = vadd.f32 %v51, %v609
    %v614 = vadd.f32 %v52, %v610
    %v615 = vadd.f32 %v53, %v611
    %v616 = vadd.f32 %v54, %v612
    %s617 = scalar_lea.vmem %s2, 4
    %v618 = vld [vmem:[%s617] sm:$0xf]
    %s619 = scalar_lea.vmem [#allocation7], 8
    %v620 = vld [vmem:[%s619] sm:$0xff]
    %v622 = vcombine.high %v620, %v620
    %v624 = vunpack.c.l.s4 1983009808
    %v625 = vunpack.c.0.s8 %v624
    %v626 = vlaneseq
    %v627 = vshrl.u32 %v626, 7
    %v628 = vsub.s32 %v625, %v627
    %v629 = vrot.slane %v620, %v628
    %v631 = vunpack.c.l.s4 1983009808
    %v632 = vunpack.c.0.s8 %v631
    %v633 = vlaneseq
    %v634 = vshrl.u32 %v633, 7
    %v635 = vsub.s32 %v632, %v634
    %v636 = vrot.slane %v622, %v635
    %v637 = vcombine.high %v629, %v629
    %v638 = vcombine.high %v636, %v636
    %v640 = vsel %vm75, %v618, 0
    %v643 = vsel %vm79, %v629, 0
    %v646 = vsel %vm79, %v637, 0
    %v649 = vsel %vm79, %v636, 0
    %v652 = vsel %vm79, %v638, 0
    %654 = vmatprep.subr.bf16.mxu0 0
    %655 = vmatpush1.bf16.msra.mxu0 0
    %656 = vmatprep.subr.bf16.mxu0 0
    %657 = vmatpush1.bf16.msra.mxu0 0
    %658 = vmatprep.subr.bf16.mxu0 0
    %659 = vmatpush1.bf16.msra.mxu0 0
    %660 = vmatprep.subr.bf16.mxu0 0
    %661 = vmatpush1.bf16.msra.mxu0 0
    %662 = vmatprep.subr.bf16.mxu0 0
    %663 = vmatpush1.bf16.msra.mxu0 0
    %664 = vmatprep.subr.bf16.mxu0 0
    %665 = vmatpush1.bf16.msra.mxu0 0
    %666 = vmatprep.subr.bf16.mxu0 0
    %667 = vmatpush1.bf16.msra.mxu0 0
    %668 = vmatprep.subr.bf16.mxu0 %v646
    %669 = vmatpush1.bf16.msra.mxu0 %v643
    %670 = vmatprep.subr.bf16.mxu0 0
    %671 = vmatpush2.bf16.msra.mxu0 0
    %672 = vmatprep.subr.bf16.mxu0 0
    %673 = vmatpush2.bf16.msra.mxu0 0
    %674 = vmatprep.subr.bf16.mxu0 0
    %675 = vmatpush2.bf16.msra.mxu0 0
    %676 = vmatprep.subr.bf16.mxu0 0
    %677 = vmatpush2.bf16.msra.mxu0 0
    %678 = vmatprep.subr.bf16.mxu0 0
    %679 = vmatpush2.bf16.msra.mxu0 0
    %680 = vmatprep.subr.bf16.mxu0 0
    %681 = vmatpush2.bf16.msra.mxu0 0
    %682 = vmatprep.subr.bf16.mxu0 0
    %683 = vmatpush2.bf16.msra.mxu0 0
    %684 = vmatprep.subr.bf16.mxu0 0
    %685 = vmatpush2.bf16.msra.mxu0 0
    %686 = vmatprep.mubr.bf16.mxu0 0
    %687 = vmatmul.mubr.bf16.gmra.mxu0 %v640
    %v688 = vpop.f32.mrf.mxu0
    %v689 = vadd.f32 0.0, %v688
    %v690 = vpop.f32.mrf.mxu0
    %v691 = vadd.f32 0.0, %v690
    %v692 = vpop.f32.mrf.mxu0
    %v693 = vpop.f32.mrf.mxu0
    %694 = vdwg.mxu0
    %695 = vmatprep.subr.bf16.mxu0 0
    %696 = vmatpush1.bf16.msra.mxu0 0
    %697 = vmatprep.subr.bf16.mxu0 0
    %698 = vmatpush1.bf16.msra.mxu0 0
    %699 = vmatprep.subr.bf16.mxu0 0
    %700 = vmatpush1.bf16.msra.mxu0 0
    %701 = vmatprep.subr.bf16.mxu0 0
    %702 = vmatpush1.bf16.msra.mxu0 0
    %703 = vmatprep.subr.bf16.mxu0 0
    %704 = vmatpush1.bf16.msra.mxu0 0
    %705 = vmatprep.subr.bf16.mxu0 0
    %706 = vmatpush1.bf16.msra.mxu0 0
    %707 = vmatprep.subr.bf16.mxu0 0
    %708 = vmatpush1.bf16.msra.mxu0 0
    %709 = vmatprep.subr.bf16.mxu0 %v652
    %710 = vmatpush1.bf16.msra.mxu0 %v649
    %711 = vmatprep.subr.bf16.mxu0 0
    %712 = vmatpush2.bf16.msra.mxu0 0
    %713 = vmatprep.subr.bf16.mxu0 0
    %714 = vmatpush2.bf16.msra.mxu0 0
    %715 = vmatprep.subr.bf16.mxu0 0
    %716 = vmatpush2.bf16.msra.mxu0 0
    %717 = vmatprep.subr.bf16.mxu0 0
    %718 = vmatpush2.bf16.msra.mxu0 0
    %719 = vmatprep.subr.bf16.mxu0 0
    %720 = vmatpush2.bf16.msra.mxu0 0
    %721 = vmatprep.subr.bf16.mxu0 0
    %722 = vmatpush2.bf16.msra.mxu0 0
    %723 = vmatprep.subr.bf16.mxu0 0
    %724 = vmatpush2.bf16.msra.mxu0 0
    %725 = vmatprep.subr.bf16.mxu0 0
    %726 = vmatpush2.bf16.msra.mxu0 0
    %727 = vmatprep.mubr.bf16.mxu0 0
    %728 = vmatmul.mubr.bf16.gmra.mxu0 %v640
    %v729 = vpop.f32.mrf.mxu0
    %v730 = vadd.f32 0.0, %v729
    %v731 = vpop.f32.mrf.mxu0
    %v732 = vadd.f32 0.0, %v731
    %v733 = vpop.f32.mrf.mxu0
    %v734 = vpop.f32.mrf.mxu0
    %735 = vdwg.mxu0
    %v736 = vand.u32 2147483647, %v689
    %vm737 = vcmp.le.f32.partialorder %v736, 0.7853982
    %vm738 = vcmp.lt.s32.totalorder %v689, 0
    %v739 = vand.u32 %v689, 2139095040
    %v740 = vshrl.u32 %v739, 23
    %v741 = vsub.s32 %v740, 127
    %v742 = vand.u32 2147483647, %v689
    %v743 = vand.u32 %v742, 8388607
    %v744 = vor.u32 %v743, 8388608
    %v745 = vsub.s32 0, %v744
    %v746 = vadd.s32 %v741, 1
    %vm747 = vcmp.gt.s32.totalorder %v746, 0
    %v748 = vsel %vm747, %v746, 0
    %v749 = vshrl.u32 %v748, 5
    %v750 = vand.u32 %v748, 31
    %v751 = vsub.s32 32, %v750
    %v752 = vshrl.u32 683565275, %v751
    %v753 = vshll.u32 683565275, %v750
    %v754 = vshrl.u32 2475754826, %v751
    %v755 = vor.u32 %v753, %v754
    %v756 = vshll.u32 2475754826, %v750
    %v757 = vshrl.u32 2131351028, %v751
    %v758 = vor.u32 %v756, %v757
    %v759 = vshll.u32 2131351028, %v750
    %v760 = vshrl.u32 2102212464, %v751
    %v761 = vor.u32 %v759, %v760
    %v762 = vshll.u32 2102212464, %v750
    %v763 = vshrl.u32 920167782, %v751
    %v764 = vor.u32 %v762, %v763
    %v765 = vshll.u32 920167782, %v750
    %v766 = vshrl.u32 1326507024, %v751
    %v767 = vor.u32 %v765, %v766
    %vm768 = vcmp.lt.s32.totalorder %v749, 1
    %vm769 = vcmp.lt.s32.totalorder %v749, 2
    %vm770 = vcmp.lt.s32.totalorder %v749, 3
    %vm771 = vcmp.lt.s32.totalorder %v749, 4
    %v772 = vsel %vm768, %v752, %v755
    %v773 = vsel %vm771, %v761, 2102212464
    %v774 = vsel %vm770, %v758, %v773
    %v775 = vsel %vm769, %v772, %v774
    %v776 = vsel %vm768, %v755, %v758
    %v777 = vsel %vm771, %v764, 920167782
    %v778 = vsel %vm770, %v761, %v777
    %v779 = vsel %vm769, %v776, %v778
    %v780 = vsel %vm768, %v758, %v761
    %v781 = vsel %vm771, %v767, 1326507024
    %v782 = vsel %vm770, %v764, %v781
    %v783 = vsel %vm769, %v780, %v782
    %v784 = vshll.u32 %v744, 8
    %v785 = vmul.u32.u64.compose %v784, %v783
    %v786 = vextract.low.u32 %v785
    %v787 = vextract.high.u32 %v785
    %v788 = vmul.u32.u64.compose %v784, %v779
    %v789 = vextract.low.u32 %v788
    %v790 = vextract.high.u32 %v788
    %v791 = vmul.u32 %v784, %v775
    %v792 = vadd.s32 %v787, %v789
    %vm793 = vc.u32 %v787, %v789
    %v794 = vadd.s32 %v790, 1
    %v795 = vsel %vm793, %v794, %v790
    %v796 = vadd.s32 %v791, %v795
    %v797 = vadd.s32 %v796, 536870912
    %v798 = vshrl.u32 %v797, 30
    %v799 = vshll.u32 %v798, 30
    %v800 = vsub.s32 %v796, %v799
    %vm801 = vcmp.lt.s32.totalorder %v800, 0
    %v802 = vsub.s32 0, %v800
    %v803 = vsel %vm801, %v802, %v800
    %v804 = vclz %v803
    %v805 = vsub.s32 %v804, 2
    %vm806 = vcmp.gt.s32.totalorder 0, %v805
    %v807 = vsel %vm806, 0, %v805
    %v808 = vsub.s32 32, %v807
    %v809 = vshll.u32 %v800, %v807
    %v810 = vshrl.u32 %v792, %v808
    %v811 = vor.u32 %v809, %v810
    %v812 = vsub.s32 4294967266, %v807
    %v813 = vadd.s32 %v812, 127
    %v814 = vshll.u32 %v813, 23
    %v815 = vor.u32 4788187, %v814
    %v816 = vand.u32 2147483647, %v815
    %v818 = vcvt.s32.f32 %v811
    %v819 = vmul.f32 %v818, %v816
    %v820 = vxor.u32 %v819, 2147483648
    %v821 = vsel %vm738, %v820, %v819
    %v822 = vsub.s32 4, %v798
    %v823 = vsel %vm738, %v822, %v798
    %v824 = vsel %vm737, %v689, %v821
    %v825 = vsel %vm737, 0, %v823
    %v826 = vcosq.f32.pop %v824
    %v827 = vsinq.f32.pop %v824
    %vm828 = vweird.f32 %v689
    %v829 = vand.u32 %v825, 3
    %vm830 = vcmp.lt.s32.totalorder %v829, 2
    %vm831 = vcmp.eq.s32.totalorder %v829, 0
    %v832 = vxor.u32 %v827, 2147483648
    %v833 = vsel %vm831, %v826, %v832
    %vm834 = vcmp.eq.s32.totalorder %v829, 2
    %v835 = vxor.u32 %v826, 2147483648
    %v836 = vsel %vm834, %v835, %v827
    %v837 = vsel %vm830, %v833, %v836
    %v838 = vsel %vm828, nan, %v837
    %v839 = vand.u32 2147483647, %v691
    %vm840 = vcmp.le.f32.partialorder %v839, 0.7853982
    %vm841 = vcmp.lt.s32.totalorder %v691, 0
    %v842 = vand.u32 %v691, 2139095040
    %v843 = vshrl.u32 %v842, 23
    %v844 = vsub.s32 %v843, 127
    %v845 = vand.u32 2147483647, %v691
    %v846 = vand.u32 %v845, 8388607
    %v847 = vor.u32 %v846, 8388608
    %v848 = vsub.s32 0, %v847
    %v849 = vadd.s32 %v844, 1
    %vm850 = vcmp.gt.s32.totalorder %v849, 0
    %v851 = vsel %vm850, %v849, 0
    %v852 = vshrl.u32 %v851, 5
    %v853 = vand.u32 %v851, 31
    %v854 = vsub.s32 32, %v853
    %v855 = vshrl.u32 683565275, %v854
    %v856 = vshll.u32 683565275, %v853
    %v857 = vshrl.u32 2475754826, %v854
    %v858 = vor.u32 %v856, %v857
    %v859 = vshll.u32 2475754826, %v853
    %v860 = vshrl.u32 2131351028, %v854
    %v861 = vor.u32 %v859, %v860
    %v862 = vshll.u32 2131351028, %v853
    %v863 = vshrl.u32 2102212464, %v854
    %v864 = vor.u32 %v862, %v863
    %v865 = vshll.u32 2102212464, %v853
    %v866 = vshrl.u32 920167782, %v854
    %v867 = vor.u32 %v865, %v866
    %v868 = vshll.u32 920167782, %v853
    %v869 = vshrl.u32 1326507024, %v854
    %v870 = vor.u32 %v868, %v869
    %vm871 = vcmp.lt.s32.totalorder %v852, 1
    %vm872 = vcmp.lt.s32.totalorder %v852, 2
    %vm873 = vcmp.lt.s32.totalorder %v852, 3
    %vm874 = vcmp.lt.s32.totalorder %v852, 4
    %v875 = vsel %vm871, %v855, %v858
    %v876 = vsel %vm874, %v864, 2102212464
    %v877 = vsel %vm873, %v861, %v876
    %v878 = vsel %vm872, %v875, %v877
    %v879 = vsel %vm871, %v858, %v861
    %v880 = vsel %vm874, %v867, 920167782
    %v881 = vsel %vm873, %v864, %v880
    %v882 = vsel %vm872, %v879, %v881
    %v883 = vsel %vm871, %v861, %v864
    %v884 = vsel %vm874, %v870, 1326507024
    %v885 = vsel %vm873, %v867, %v884
    %v886 = vsel %vm872, %v883, %v885
    %v887 = vshll.u32 %v847, 8
    %v888 = vmul.u32.u64.compose %v887, %v886
    %v889 = vextract.low.u32 %v888
    %v890 = vextract.high.u32 %v888
    %v891 = vmul.u32.u64.compose %v887, %v882
    %v892 = vextract.low.u32 %v891
    %v893 = vextract.high.u32 %v891
    %v894 = vmul.u32 %v887, %v878
    %v895 = vadd.s32 %v890, %v892
    %vm896 = vc.u32 %v890, %v892
    %v897 = vadd.s32 %v893, 1
    %v898 = vsel %vm896, %v897, %v893
    %v899 = vadd.s32 %v894, %v898
    %v900 = vadd.s32 %v899, 536870912
    %v901 = vshrl.u32 %v900, 30
    %v902 = vshll.u32 %v901, 30
    %v903 = vsub.s32 %v899, %v902
    %vm904 = vcmp.lt.s32.totalorder %v903, 0
    %v905 = vsub.s32 0, %v903
    %v906 = vsel %vm904, %v905, %v903
    %v907 = vclz %v906
    %v908 = vsub.s32 %v907, 2
    %vm909 = vcmp.gt.s32.totalorder 0, %v908
    %v910 = vsel %vm909, 0, %v908
    %v911 = vsub.s32 32, %v910
    %v912 = vshll.u32 %v903, %v910
    %v913 = vshrl.u32 %v895, %v911
    %v914 = vor.u32 %v912, %v913
    %v915 = vsub.s32 4294967266, %v910
    %v916 = vadd.s32 %v915, 127
    %v917 = vshll.u32 %v916, 23
    %v918 = vor.u32 4788187, %v917
    %v919 = vand.u32 2147483647, %v918
    %v921 = vcvt.s32.f32 %v914
    %v922 = vmul.f32 %v921, %v919
    %v923 = vxor.u32 %v922, 2147483648
    %v924 = vsel %vm841, %v923, %v922
    %v925 = vsub.s32 4, %v901
    %v926 = vsel %vm841, %v925, %v901
    %v927 = vsel %vm840, %v691, %v924
    %v928 = vsel %vm840, 0, %v926
    %v929 = vcosq.f32.pop %v927
    %v930 = vsinq.f32.pop %v927
    %vm931 = vweird.f32 %v691
    %v932 = vand.u32 %v928, 3
    %vm933 = vcmp.lt.s32.totalorder %v932, 2
    %vm934 = vcmp.eq.s32.totalorder %v932, 0
    %v935 = vxor.u32 %v930, 2147483648
    %v936 = vsel %vm934, %v929, %v935
    %vm937 = vcmp.eq.s32.totalorder %v932, 2
    %v938 = vxor.u32 %v929, 2147483648
    %v939 = vsel %vm937, %v938, %v930
    %v940 = vsel %vm933, %v936, %v939
    %v941 = vsel %vm931, nan, %v940
    %v942 = vand.u32 2147483647, %v730
    %vm943 = vcmp.le.f32.partialorder %v942, 0.7853982
    %vm944 = vcmp.lt.s32.totalorder %v730, 0
    %v945 = vand.u32 %v730, 2139095040
    %v946 = vshrl.u32 %v945, 23
    %v947 = vsub.s32 %v946, 127
    %v948 = vand.u32 2147483647, %v730
    %v949 = vand.u32 %v948, 8388607
    %v950 = vor.u32 %v949, 8388608
    %v951 = vsub.s32 0, %v950
    %v952 = vadd.s32 %v947, 1
    %vm953 = vcmp.gt.s32.totalorder %v952, 0
    %v954 = vsel %vm953, %v952, 0
    %v955 = vshrl.u32 %v954, 5
    %v956 = vand.u32 %v954, 31
    %v957 = vsub.s32 32, %v956
    %v958 = vshrl.u32 683565275, %v957
    %v959 = vshll.u32 683565275, %v956
    %v960 = vshrl.u32 2475754826, %v957
    %v961 = vor.u32 %v959, %v960
    %v962 = vshll.u32 2475754826, %v956
    %v963 = vshrl.u32 2131351028, %v957
    %v964 = vor.u32 %v962, %v963
    %v965 = vshll.u32 2131351028, %v956
    %v966 = vshrl.u32 2102212464, %v957
    %v967 = vor.u32 %v965, %v966
    %v968 = vshll.u32 2102212464, %v956
    %v969 = vshrl.u32 920167782, %v957
    %v970 = vor.u32 %v968, %v969
    %v971 = vshll.u32 920167782, %v956
    %v972 = vshrl.u32 1326507024, %v957
    %v973 = vor.u32 %v971, %v972
    %vm974 = vcmp.lt.s32.totalorder %v955, 1
    %vm975 = vcmp.lt.s32.totalorder %v955, 2
    %vm976 = vcmp.lt.s32.totalorder %v955, 3
    %vm977 = vcmp.lt.s32.totalorder %v955, 4
    %v978 = vsel %vm974, %v958, %v961
    %v979 = vsel %vm977, %v967, 2102212464
    %v980 = vsel %vm976, %v964, %v979
    %v981 = vsel %vm975, %v978, %v980
    %v982 = vsel %vm974, %v961, %v964
    %v983 = vsel %vm977, %v970, 920167782
    %v984 = vsel %vm976, %v967, %v983
    %v985 = vsel %vm975, %v982, %v984
    %v986 = vsel %vm974, %v964, %v967
    %v987 = vsel %vm977, %v973, 1326507024
    %v988 = vsel %vm976, %v970, %v987
    %v989 = vsel %vm975, %v986, %v988
    %v990 = vshll.u32 %v950, 8
    %v991 = vmul.u32.u64.compose %v990, %v989
    %v992 = vextract.low.u32 %v991
    %v993 = vextract.high.u32 %v991
    %v994 = vmul.u32.u64.compose %v990, %v985
    %v995 = vextract.low.u32 %v994
    %v996 = vextract.high.u32 %v994
    %v997 = vmul.u32 %v990, %v981
    %v998 = vadd.s32 %v993, %v995
    %vm999 = vc.u32 %v993, %v995
    %v1000 = vadd.s32 %v996, 1
    %v1001 = vsel %vm999, %v1000, %v996
    %v1002 = vadd.s32 %v997, %v1001
    %v1003 = vadd.s32 %v1002, 536870912
    %v1004 = vshrl.u32 %v1003, 30
    %v1005 = vshll.u32 %v1004, 30
    %v1006 = vsub.s32 %v1002, %v1005
    %vm1007 = vcmp.lt.s32.totalorder %v1006, 0
    %v1008 = vsub.s32 0, %v1006
    %v1009 = vsel %vm1007, %v1008, %v1006
    %v1010 = vclz %v1009
    %v1011 = vsub.s32 %v1010, 2
    %vm1012 = vcmp.gt.s32.totalorder 0, %v1011
    %v1013 = vsel %vm1012, 0, %v1011
    %v1014 = vsub.s32 32, %v1013
    %v1015 = vshll.u32 %v1006, %v1013
    %v1016 = vshrl.u32 %v998, %v1014
    %v1017 = vor.u32 %v1015, %v1016
    %v1018 = vsub.s32 4294967266, %v1013
    %v1019 = vadd.s32 %v1018, 127
    %v1020 = vshll.u32 %v1019, 23
    %v1021 = vor.u32 4788187, %v1020
    %v1022 = vand.u32 2147483647, %v1021
    %v1024 = vcvt.s32.f32 %v1017
    %v1025 = vmul.f32 %v1024, %v1022
    %v1026 = vxor.u32 %v1025, 2147483648
    %v1027 = vsel %vm944, %v1026, %v1025
    %v1028 = vsub.s32 4, %v1004
    %v1029 = vsel %vm944, %v1028, %v1004
    %v1030 = vsel %vm943, %v730, %v1027
    %v1031 = vsel %vm943, 0, %v1029
    %v1032 = vcosq.f32.pop %v1030
    %v1033 = vsinq.f32.pop %v1030
    %vm1034 = vweird.f32 %v730
    %v1035 = vand.u32 %v1031, 3
    %vm1036 = vcmp.lt.s32.totalorder %v1035, 2
    %vm1037 = vcmp.eq.s32.totalorder %v1035, 0
    %v1038 = vxor.u32 %v1033, 2147483648
    %v1039 = vsel %vm1037, %v1032, %v1038
    %vm1040 = vcmp.eq.s32.totalorder %v1035, 2
    %v1041 = vxor.u32 %v1032, 2147483648
    %v1042 = vsel %vm1040, %v1041, %v1033
    %v1043 = vsel %vm1036, %v1039, %v1042
    %v1044 = vsel %vm1034, nan, %v1043
    %v1045 = vand.u32 2147483647, %v732
    %vm1046 = vcmp.le.f32.partialorder %v1045, 0.7853982
    %vm1047 = vcmp.lt.s32.totalorder %v732, 0
    %v1048 = vand.u32 %v732, 2139095040
    %v1049 = vshrl.u32 %v1048, 23
    %v1050 = vsub.s32 %v1049, 127
    %v1051 = vand.u32 2147483647, %v732
    %v1052 = vand.u32 %v1051, 8388607
    %v1053 = vor.u32 %v1052, 8388608
    %v1054 = vsub.s32 0, %v1053
    %v1055 = vadd.s32 %v1050, 1
    %vm1056 = vcmp.gt.s32.totalorder %v1055, 0
    %v1057 = vsel %vm1056, %v1055, 0
    %v1058 = vshrl.u32 %v1057, 5
    %v1059 = vand.u32 %v1057, 31
    %v1060 = vsub.s32 32, %v1059
    %v1061 = vshrl.u32 683565275, %v1060
    %v1062 = vshll.u32 683565275, %v1059
    %v1063 = vshrl.u32 2475754826, %v1060
    %v1064 = vor.u32 %v1062, %v1063
    %v1065 = vshll.u32 2475754826, %v1059
    %v1066 = vshrl.u32 2131351028, %v1060
    %v1067 = vor.u32 %v1065, %v1066
    %v1068 = vshll.u32 2131351028, %v1059
    %v1069 = vshrl.u32 2102212464, %v1060
    %v1070 = vor.u32 %v1068, %v1069
    %v1071 = vshll.u32 2102212464, %v1059
    %v1072 = vshrl.u32 920167782, %v1060
    %v1073 = vor.u32 %v1071, %v1072
    %v1074 = vshll.u32 920167782, %v1059
    %v1075 = vshrl.u32 1326507024, %v1060
    %v1076 = vor.u32 %v1074, %v1075
    %vm1077 = vcmp.lt.s32.totalorder %v1058, 1
    %vm1078 = vcmp.lt.s32.totalorder %v1058, 2
    %vm1079 = vcmp.lt.s32.totalorder %v1058, 3
    %vm1080 = vcmp.lt.s32.totalorder %v1058, 4
    %v1081 = vsel %vm1077, %v1061, %v1064
    %v1082 = vsel %vm1080, %v1070, 2102212464
    %v1083 = vsel %vm1079, %v1067, %v1082
    %v1084 = vsel %vm1078, %v1081, %v1083
    %v1085 = vsel %vm1077, %v1064, %v1067
    %v1086 = vsel %vm1080, %v1073, 920167782
    %v1087 = vsel %vm1079, %v1070, %v1086
    %v1088 = vsel %vm1078, %v1085, %v1087
    %v1089 = vsel %vm1077, %v1067, %v1070
    %v1090 = vsel %vm1080, %v1076, 1326507024
    %v1091 = vsel %vm1079, %v1073, %v1090
    %v1092 = vsel %vm1078, %v1089, %v1091
    %v1093 = vshll.u32 %v1053, 8
    %v1094 = vmul.u32.u64.compose %v1093, %v1092
    %v1095 = vextract.low.u32 %v1094
    %v1096 = vextract.high.u32 %v1094
    %v1097 = vmul.u32.u64.compose %v1093, %v1088
    %v1098 = vextract.low.u32 %v1097
    %v1099 = vextract.high.u32 %v1097
    %v1100 = vmul.u32 %v1093, %v1084
    %v1101 = vadd.s32 %v1096, %v1098
    %vm1102 = vc.u32 %v1096, %v1098
    %v1103 = vadd.s32 %v1099, 1
    %v1104 = vsel %vm1102, %v1103, %v1099
    %v1105 = vadd.s32 %v1100, %v1104
    %v1106 = vadd.s32 %v1105, 536870912
    %v1107 = vshrl.u32 %v1106, 30
    %v1108 = vshll.u32 %v1107, 30
    %v1109 = vsub.s32 %v1105, %v1108
    %vm1110 = vcmp.lt.s32.totalorder %v1109, 0
    %v1111 = vsub.s32 0, %v1109
    %v1112 = vsel %vm1110, %v1111, %v1109
    %v1113 = vclz %v1112
    %v1114 = vsub.s32 %v1113, 2
    %vm1115 = vcmp.gt.s32.totalorder 0, %v1114
    %v1116 = vsel %vm1115, 0, %v1114
    %v1117 = vsub.s32 32, %v1116
    %v1118 = vshll.u32 %v1109, %v1116
    %v1119 = vshrl.u32 %v1101, %v1117
    %v1120 = vor.u32 %v1118, %v1119
    %v1121 = vsub.s32 4294967266, %v1116
    %v1122 = vadd.s32 %v1121, 127
    %v1123 = vshll.u32 %v1122, 23
    %v1124 = vor.u32 4788187, %v1123
    %v1125 = vand.u32 2147483647, %v1124
    %v1127 = vcvt.s32.f32 %v1120
    %v1128 = vmul.f32 %v1127, %v1125
    %v1129 = vxor.u32 %v1128, 2147483648
    %v1130 = vsel %vm1047, %v1129, %v1128
    %v1131 = vsub.s32 4, %v1107
    %v1132 = vsel %vm1047, %v1131, %v1107
    %v1133 = vsel %vm1046, %v732, %v1130
    %v1134 = vsel %vm1046, 0, %v1132
    %v1135 = vcosq.f32.pop %v1133
    %v1136 = vsinq.f32.pop %v1133
    %vm1137 = vweird.f32 %v732
    %v1138 = vand.u32 %v1134, 3
    %vm1139 = vcmp.lt.s32.totalorder %v1138, 2
    %vm1140 = vcmp.eq.s32.totalorder %v1138, 0
    %v1141 = vxor.u32 %v1136, 2147483648
    %v1142 = vsel %vm1140, %v1135, %v1141
    %vm1143 = vcmp.eq.s32.totalorder %v1138, 2
    %v1144 = vxor.u32 %v1135, 2147483648
    %v1145 = vsel %vm1143, %v1144, %v1136
    %v1146 = vsel %vm1139, %v1142, %v1145
    %v1147 = vsel %vm1137, nan, %v1146
    %v1148 = vmul.f32 %v838, 1.5414666
    %v1149 = vmul.f32 %v941, 1.5414666
    %v1150 = vmul.f32 %v1044, 1.5414666
    %v1151 = vmul.f32 %v1147, 1.5414666
    %v1152 = vsub.f32 1.5940298, %v1148
    %v1153 = vsub.f32 1.5940298, %v1149
    %v1154 = vsub.f32 1.5940298, %v1150
    %v1155 = vsub.f32 1.5940298, %v1151
    %v1156 = vrcp.pop %v1152
    %v1157 = vrcp.pop %v1153
    %v1158 = vrcp.pop %v1154
    %v1159 = vrcp.pop %v1155
    %v1160 = vmul.f32 %v1156, 0.05090673
    %v1161 = vmul.f32 %v1157, 0.05090673
    %v1162 = vmul.f32 %v1158, 0.05090673
    %v1163 = vmul.f32 %v1159, 0.05090673
    %v1164 = vsub.f32 1.0, %v1160
    %v1165 = vsub.f32 1.0, %v1161
    %v1166 = vsub.f32 1.0, %v1162
    %v1167 = vsub.f32 1.0, %v1163
    %s1168 = sadd.s32 %s606, 1
    %s1169 = sld [smem:[#allocation3 + %s1168]]
    %v1170 = vstv %s1169
    %v1171 = vmul.f32 %v1170, %v1164
    %v1172 = vmul.f32 %v1170, %v1165
    %v1173 = vmul.f32 %v1170, %v1166
    %v1174 = vmul.f32 %v1170, %v1167
    %v1175 = vadd.f32 %v613, %v1171
    %v1176 = vadd.f32 %v614, %v1172
    %v1177 = vadd.f32 %v615, %v1173
    %v1178 = vadd.f32 %v616, %v1174
    %s1179 = scalar_lea.vmem %s2, 8
    %v1180 = vld [vmem:[%s1179] sm:$0xf]
    %s1181 = scalar_lea.vmem [#allocation7], 16
    %v1182 = vld [vmem:[%s1181] sm:$0xff]
    %v1184 = vcombine.high %v1182, %v1182
    %v1186 = vunpack.c.l.s4 1983009808
    %v1187 = vunpack.c.0.s8 %v1186
    %v1188 = vlaneseq
    %v1189 = vshrl.u32 %v1188, 7
    %v1190 = vsub.s32 %v1187, %v1189
    %v1191 = vrot.slane %v1182, %v1190
    %v1193 = vunpack.c.l.s4 1983009808
    %v1194 = vunpack.c.0.s8 %v1193
    %v1195 = vlaneseq
    %v1196 = vshrl.u32 %v1195, 7
    %v1197 = vsub.s32 %v1194, %v1196
    %v1198 = vrot.slane %v1184, %v1197
    %v1199 = vcombine.high %v1191, %v1191
    %v1200 = vcombine.high %v1198, %v1198
    %v1202 = vsel %vm75, %v1180, 0
    %v1205 = vsel %vm79, %v1191, 0
    %v1208 = vsel %vm79, %v1199, 0
    %v1211 = vsel %vm79, %v1198, 0
    %v1214 = vsel %vm79, %v1200, 0
    %1216 = vmatprep.subr.bf16.mxu0 0
    %1217 = vmatpush1.bf16.msra.mxu0 0
    %1218 = vmatprep.subr.bf16.mxu0 0
    %1219 = vmatpush1.bf16.msra.mxu0 0
    %1220 = vmatprep.subr.bf16.mxu0 0
    %1221 = vmatpush1.bf16.msra.mxu0 0
    %1222 = vmatprep.subr.bf16.mxu0 0
    %1223 = vmatpush1.bf16.msra.mxu0 0
    %1224 = vmatprep.subr.bf16.mxu0 0
    %1225 = vmatpush1.bf16.msra.mxu0 0
    %1226 = vmatprep.subr.bf16.mxu0 0
    %1227 = vmatpush1.bf16.msra.mxu0 0
    %1228 = vmatprep.subr.bf16.mxu0 0
    %1229 = vmatpush1.bf16.msra.mxu0 0
    %1230 = vmatprep.subr.bf16.mxu0 %v1208
    %1231 = vmatpush1.bf16.msra.mxu0 %v1205
    %1232 = vmatprep.subr.bf16.mxu0 0
    %1233 = vmatpush2.bf16.msra.mxu0 0
    %1234 = vmatprep.subr.bf16.mxu0 0
    %1235 = vmatpush2.bf16.msra.mxu0 0
    %1236 = vmatprep.subr.bf16.mxu0 0
    %1237 = vmatpush2.bf16.msra.mxu0 0
    %1238 = vmatprep.subr.bf16.mxu0 0
    %1239 = vmatpush2.bf16.msra.mxu0 0
    %1240 = vmatprep.subr.bf16.mxu0 0
    %1241 = vmatpush2.bf16.msra.mxu0 0
    %1242 = vmatprep.subr.bf16.mxu0 0
    %1243 = vmatpush2.bf16.msra.mxu0 0
    %1244 = vmatprep.subr.bf16.mxu0 0
    %1245 = vmatpush2.bf16.msra.mxu0 0
    %1246 = vmatprep.subr.bf16.mxu0 0
    %1247 = vmatpush2.bf16.msra.mxu0 0
    %1248 = vmatprep.mubr.bf16.mxu0 0
    %1249 = vmatmul.mubr.bf16.gmra.mxu0 %v1202
    %v1250 = vpop.f32.mrf.mxu0
    %v1251 = vadd.f32 0.0, %v1250
    %v1252 = vpop.f32.mrf.mxu0
    %v1253 = vadd.f32 0.0, %v1252
    %v1254 = vpop.f32.mrf.mxu0
    %v1255 = vpop.f32.mrf.mxu0
    %1256 = vdwg.mxu0
    %1257 = vmatprep.subr.bf16.mxu0 0
    %1258 = vmatpush1.bf16.msra.mxu0 0
    %1259 = vmatprep.subr.bf16.mxu0 0
    %1260 = vmatpush1.bf16.msra.mxu0 0
    %1261 = vmatprep.subr.bf16.mxu0 0
    %1262 = vmatpush1.bf16.msra.mxu0 0
    %1263 = vmatprep.subr.bf16.mxu0 0
    %1264 = vmatpush1.bf16.msra.mxu0 0
    %1265 = vmatprep.subr.bf16.mxu0 0
    %1266 = vmatpush1.bf16.msra.mxu0 0
    %1267 = vmatprep.subr.bf16.mxu0 0
    %1268 = vmatpush1.bf16.msra.mxu0 0
    %1269 = vmatprep.subr.bf16.mxu0 0
    %1270 = vmatpush1.bf16.msra.mxu0 0
    %1271 = vmatprep.subr.bf16.mxu0 %v1214
    %1272 = vmatpush1.bf16.msra.mxu0 %v1211
    %1273 = vmatprep.subr.bf16.mxu0 0
    %1274 = vmatpush2.bf16.msra.mxu0 0
    %1275 = vmatprep.subr.bf16.mxu0 0
    %1276 = vmatpush2.bf16.msra.mxu0 0
    %1277 = vmatprep.subr.bf16.mxu0 0
    %1278 = vmatpush2.bf16.msra.mxu0 0
    %1279 = vmatprep.subr.bf16.mxu0 0
    %1280 = vmatpush2.bf16.msra.mxu0 0
    %1281 = vmatprep.subr.bf16.mxu0 0
    %1282 = vmatpush2.bf16.msra.mxu0 0
    %1283 = vmatprep.subr.bf16.mxu0 0
    %1284 = vmatpush2.bf16.msra.mxu0 0
    %1285 = vmatprep.subr.bf16.mxu0 0
    %1286 = vmatpush2.bf16.msra.mxu0 0
    %1287 = vmatprep.subr.bf16.mxu0 0
    %1288 = vmatpush2.bf16.msra.mxu0 0
    %1289 = vmatprep.mubr.bf16.mxu0 0
    %1290 = vmatmul.mubr.bf16.gmra.mxu0 %v1202
    %v1291 = vpop.f32.mrf.mxu0
    %v1292 = vadd.f32 0.0, %v1291
    %v1293 = vpop.f32.mrf.mxu0
    %v1294 = vadd.f32 0.0, %v1293
    %v1295 = vpop.f32.mrf.mxu0
    %v1296 = vpop.f32.mrf.mxu0
    %1297 = vdwg.mxu0
    %v1298 = vand.u32 2147483647, %v1251
    %vm1299 = vcmp.le.f32.partialorder %v1298, 0.7853982
    %vm1300 = vcmp.lt.s32.totalorder %v1251, 0
    %v1301 = vand.u32 %v1251, 2139095040
    %v1302 = vshrl.u32 %v1301, 23
    %v1303 = vsub.s32 %v1302, 127
    %v1304 = vand.u32 2147483647, %v1251
    %v1305 = vand.u32 %v1304, 8388607
    %v1306 = vor.u32 %v1305, 8388608
    %v1307 = vsub.s32 0, %v1306
    %v1308 = vadd.s32 %v1303, 1
    %vm1309 = vcmp.gt.s32.totalorder %v1308, 0
    %v1310 = vsel %vm1309, %v1308, 0
    %v1311 = vshrl.u32 %v1310, 5
    %v1312 = vand.u32 %v1310, 31
    %v1313 = vsub.s32 32, %v1312
    %v1314 = vshrl.u32 683565275, %v1313
    %v1315 = vshll.u32 683565275, %v1312
    %v1316 = vshrl.u32 2475754826, %v1313
    %v1317 = vor.u32 %v1315, %v1316
    %v1318 = vshll.u32 2475754826, %v1312
    %v1319 = vshrl.u32 2131351028, %v1313
    %v1320 = vor.u32 %v1318, %v1319
    %v1321 = vshll.u32 2131351028, %v1312
    %v1322 = vshrl.u32 2102212464, %v1313
    %v1323 = vor.u32 %v1321, %v1322
    %v1324 = vshll.u32 2102212464, %v1312
    %v1325 = vshrl.u32 920167782, %v1313
    %v1326 = vor.u32 %v1324, %v1325
    %v1327 = vshll.u32 920167782, %v1312
    %v1328 = vshrl.u32 1326507024, %v1313
    %v1329 = vor.u32 %v1327, %v1328
    %vm1330 = vcmp.lt.s32.totalorder %v1311, 1
    %vm1331 = vcmp.lt.s32.totalorder %v1311, 2
    %vm1332 = vcmp.lt.s32.totalorder %v1311, 3
    %vm1333 = vcmp.lt.s32.totalorder %v1311, 4
    %v1334 = vsel %vm1330, %v1314, %v1317
    %v1335 = vsel %vm1333, %v1323, 2102212464
    %v1336 = vsel %vm1332, %v1320, %v1335
    %v1337 = vsel %vm1331, %v1334, %v1336
    %v1338 = vsel %vm1330, %v1317, %v1320
    %v1339 = vsel %vm1333, %v1326, 920167782
    %v1340 = vsel %vm1332, %v1323, %v1339
    %v1341 = vsel %vm1331, %v1338, %v1340
    %v1342 = vsel %vm1330, %v1320, %v1323
    %v1343 = vsel %vm1333, %v1329, 1326507024
    %v1344 = vsel %vm1332, %v1326, %v1343
    %v1345 = vsel %vm1331, %v1342, %v1344
    %v1346 = vshll.u32 %v1306, 8
    %v1347 = vmul.u32.u64.compose %v1346, %v1345
    %v1348 = vextract.low.u32 %v1347
    %v1349 = vextract.high.u32 %v1347
    %v1350 = vmul.u32.u64.compose %v1346, %v1341
    %v1351 = vextract.low.u32 %v1350
    %v1352 = vextract.high.u32 %v1350
    %v1353 = vmul.u32 %v1346, %v1337
    %v1354 = vadd.s32 %v1349, %v1351
    %vm1355 = vc.u32 %v1349, %v1351
    %v1356 = vadd.s32 %v1352, 1
    %v1357 = vsel %vm1355, %v1356, %v1352
    %v1358 = vadd.s32 %v1353, %v1357
    %v1359 = vadd.s32 %v1358, 536870912
    %v1360 = vshrl.u32 %v1359, 30
    %v1361 = vshll.u32 %v1360, 30
    %v1362 = vsub.s32 %v1358, %v1361
    %vm1363 = vcmp.lt.s32.totalorder %v1362, 0
    %v1364 = vsub.s32 0, %v1362
    %v1365 = vsel %vm1363, %v1364, %v1362
    %v1366 = vclz %v1365
    %v1367 = vsub.s32 %v1366, 2
    %vm1368 = vcmp.gt.s32.totalorder 0, %v1367
    %v1369 = vsel %vm1368, 0, %v1367
    %v1370 = vsub.s32 32, %v1369
    %v1371 = vshll.u32 %v1362, %v1369
    %v1372 = vshrl.u32 %v1354, %v1370
    %v1373 = vor.u32 %v1371, %v1372
    %v1374 = vsub.s32 4294967266, %v1369
    %v1375 = vadd.s32 %v1374, 127
    %v1376 = vshll.u32 %v1375, 23
    %v1377 = vor.u32 4788187, %v1376
    %v1378 = vand.u32 2147483647, %v1377
    %v1380 = vcvt.s32.f32 %v1373
    %v1381 = vmul.f32 %v1380, %v1378
    %v1382 = vxor.u32 %v1381, 2147483648
    %v1383 = vsel %vm1300, %v1382, %v1381
    %v1384 = vsub.s32 4, %v1360
    %v1385 = vsel %vm1300, %v1384, %v1360
    %v1386 = vsel %vm1299, %v1251, %v1383
    %v1387 = vsel %vm1299, 0, %v1385
    %v1388 = vcosq.f32.pop %v1386
    %v1389 = vsinq.f32.pop %v1386
    %vm1390 = vweird.f32 %v1251
    %v1391 = vand.u32 %v1387, 3
    %vm1392 = vcmp.lt.s32.totalorder %v1391, 2
    %vm1393 = vcmp.eq.s32.totalorder %v1391, 0
    %v1394 = vxor.u32 %v1389, 2147483648
    %v1395 = vsel %vm1393, %v1388, %v1394
    %vm1396 = vcmp.eq.s32.totalorder %v1391, 2
    %v1397 = vxor.u32 %v1388, 2147483648
    %v1398 = vsel %vm1396, %v1397, %v1389
    %v1399 = vsel %vm1392, %v1395, %v1398
    %v1400 = vsel %vm1390, nan, %v1399
    %v1401 = vand.u32 2147483647, %v1253
    %vm1402 = vcmp.le.f32.partialorder %v1401, 0.7853982
    %vm1403 = vcmp.lt.s32.totalorder %v1253, 0
    %v1404 = vand.u32 %v1253, 2139095040
    %v1405 = vshrl.u32 %v1404, 23
    %v1406 = vsub.s32 %v1405, 127
    %v1407 = vand.u32 2147483647, %v1253
    %v1408 = vand.u32 %v1407, 8388607
    %v1409 = vor.u32 %v1408, 8388608
    %v1410 = vsub.s32 0, %v1409
    %v1411 = vadd.s32 %v1406, 1
    %vm1412 = vcmp.gt.s32.totalorder %v1411, 0
    %v1413 = vsel %vm1412, %v1411, 0
    %v1414 = vshrl.u32 %v1413, 5
    %v1415 = vand.u32 %v1413, 31
    %v1416 = vsub.s32 32, %v1415
    %v1417 = vshrl.u32 683565275, %v1416
    %v1418 = vshll.u32 683565275, %v1415
    %v1419 = vshrl.u32 2475754826, %v1416
    %v1420 = vor.u32 %v1418, %v1419
    %v1421 = vshll.u32 2475754826, %v1415
    %v1422 = vshrl.u32 2131351028, %v1416
    %v1423 = vor.u32 %v1421, %v1422
    %v1424 = vshll.u32 2131351028, %v1415
    %v1425 = vshrl.u32 2102212464, %v1416
    %v1426 = vor.u32 %v1424, %v1425
    %v1427 = vshll.u32 2102212464, %v1415
    %v1428 = vshrl.u32 920167782, %v1416
    %v1429 = vor.u32 %v1427, %v1428
    %v1430 = vshll.u32 920167782, %v1415
    %v1431 = vshrl.u32 1326507024, %v1416
    %v1432 = vor.u32 %v1430, %v1431
    %vm1433 = vcmp.lt.s32.totalorder %v1414, 1
    %vm1434 = vcmp.lt.s32.totalorder %v1414, 2
    %vm1435 = vcmp.lt.s32.totalorder %v1414, 3
    %vm1436 = vcmp.lt.s32.totalorder %v1414, 4
    %v1437 = vsel %vm1433, %v1417, %v1420
    %v1438 = vsel %vm1436, %v1426, 2102212464
    %v1439 = vsel %vm1435, %v1423, %v1438
    %v1440 = vsel %vm1434, %v1437, %v1439
    %v1441 = vsel %vm1433, %v1420, %v1423
    %v1442 = vsel %vm1436, %v1429, 920167782
    %v1443 = vsel %vm1435, %v1426, %v1442
    %v1444 = vsel %vm1434, %v1441, %v1443
    %v1445 = vsel %vm1433, %v1423, %v1426
    %v1446 = vsel %vm1436, %v1432, 1326507024
    %v1447 = vsel %vm1435, %v1429, %v1446
    %v1448 = vsel %vm1434, %v1445, %v1447
    %v1449 = vshll.u32 %v1409, 8
    %v1450 = vmul.u32.u64.compose %v1449, %v1448
    %v1451 = vextract.low.u32 %v1450
    %v1452 = vextract.high.u32 %v1450
    %v1453 = vmul.u32.u64.compose %v1449, %v1444
    %v1454 = vextract.low.u32 %v1453
    %v1455 = vextract.high.u32 %v1453
    %v1456 = vmul.u32 %v1449, %v1440
    %v1457 = vadd.s32 %v1452, %v1454
    %vm1458 = vc.u32 %v1452, %v1454
    %v1459 = vadd.s32 %v1455, 1
    %v1460 = vsel %vm1458, %v1459, %v1455
    %v1461 = vadd.s32 %v1456, %v1460
    %v1462 = vadd.s32 %v1461, 536870912
    %v1463 = vshrl.u32 %v1462, 30
    %v1464 = vshll.u32 %v1463, 30
    %v1465 = vsub.s32 %v1461, %v1464
    %vm1466 = vcmp.lt.s32.totalorder %v1465, 0
    %v1467 = vsub.s32 0, %v1465
    %v1468 = vsel %vm1466, %v1467, %v1465
    %v1469 = vclz %v1468
    %v1470 = vsub.s32 %v1469, 2
    %vm1471 = vcmp.gt.s32.totalorder 0, %v1470
    %v1472 = vsel %vm1471, 0, %v1470
    %v1473 = vsub.s32 32, %v1472
    %v1474 = vshll.u32 %v1465, %v1472
    %v1475 = vshrl.u32 %v1457, %v1473
    %v1476 = vor.u32 %v1474, %v1475
    %v1477 = vsub.s32 4294967266, %v1472
    %v1478 = vadd.s32 %v1477, 127
    %v1479 = vshll.u32 %v1478, 23
    %v1480 = vor.u32 4788187, %v1479
    %v1481 = vand.u32 2147483647, %v1480
    %v1483 = vcvt.s32.f32 %v1476
    %v1484 = vmul.f32 %v1483, %v1481
    %v1485 = vxor.u32 %v1484, 2147483648
    %v1486 = vsel %vm1403, %v1485, %v1484
    %v1487 = vsub.s32 4, %v1463
    %v1488 = vsel %vm1403, %v1487, %v1463
    %v1489 = vsel %vm1402, %v1253, %v1486
    %v1490 = vsel %vm1402, 0, %v1488
    %v1491 = vcosq.f32.pop %v1489
    %v1492 = vsinq.f32.pop %v1489
    %vm1493 = vweird.f32 %v1253
    %v1494 = vand.u32 %v1490, 3
    %vm1495 = vcmp.lt.s32.totalorder %v1494, 2
    %vm1496 = vcmp.eq.s32.totalorder %v1494, 0
    %v1497 = vxor.u32 %v1492, 2147483648
    %v1498 = vsel %vm1496, %v1491, %v1497
    %vm1499 = vcmp.eq.s32.totalorder %v1494, 2
    %v1500 = vxor.u32 %v1491, 2147483648
    %v1501 = vsel %vm1499, %v1500, %v1492
    %v1502 = vsel %vm1495, %v1498, %v1501
    %v1503 = vsel %vm1493, nan, %v1502
    %v1504 = vand.u32 2147483647, %v1292
    %vm1505 = vcmp.le.f32.partialorder %v1504, 0.7853982
    %vm1506 = vcmp.lt.s32.totalorder %v1292, 0
    %v1507 = vand.u32 %v1292, 2139095040
    %v1508 = vshrl.u32 %v1507, 23
    %v1509 = vsub.s32 %v1508, 127
    %v1510 = vand.u32 2147483647, %v1292
    %v1511 = vand.u32 %v1510, 8388607
    %v1512 = vor.u32 %v1511, 8388608
    %v1513 = vsub.s32 0, %v1512
    %v1514 = vadd.s32 %v1509, 1
    %vm1515 = vcmp.gt.s32.totalorder %v1514, 0
    %v1516 = vsel %vm1515, %v1514, 0
    %v1517 = vshrl.u32 %v1516, 5
    %v1518 = vand.u32 %v1516, 31
    %v1519 = vsub.s32 32, %v1518
    %v1520 = vshrl.u32 683565275, %v1519
    %v1521 = vshll.u32 683565275, %v1518
    %v1522 = vshrl.u32 2475754826, %v1519
    %v1523 = vor.u32 %v1521, %v1522
    %v1524 = vshll.u32 2475754826, %v1518
    %v1525 = vshrl.u32 2131351028, %v1519
    %v1526 = vor.u32 %v1524, %v1525
    %v1527 = vshll.u32 2131351028, %v1518
    %v1528 = vshrl.u32 2102212464, %v1519
    %v1529 = vor.u32 %v1527, %v1528
    %v1530 = vshll.u32 2102212464, %v1518
    %v1531 = vshrl.u32 920167782, %v1519
    %v1532 = vor.u32 %v1530, %v1531
    %v1533 = vshll.u32 920167782, %v1518
    %v1534 = vshrl.u32 1326507024, %v1519
    %v1535 = vor.u32 %v1533, %v1534
    %vm1536 = vcmp.lt.s32.totalorder %v1517, 1
    %vm1537 = vcmp.lt.s32.totalorder %v1517, 2
    %vm1538 = vcmp.lt.s32.totalorder %v1517, 3
    %vm1539 = vcmp.lt.s32.totalorder %v1517, 4
    %v1540 = vsel %vm1536, %v1520, %v1523
    %v1541 = vsel %vm1539, %v1529, 2102212464
    %v1542 = vsel %vm1538, %v1526, %v1541
    %v1543 = vsel %vm1537, %v1540, %v1542
    %v1544 = vsel %vm1536, %v1523, %v1526
    %v1545 = vsel %vm1539, %v1532, 920167782
    %v1546 = vsel %vm1538, %v1529, %v1545
    %v1547 = vsel %vm1537, %v1544, %v1546
    %v1548 = vsel %vm1536, %v1526, %v1529
    %v1549 = vsel %vm1539, %v1535, 1326507024
    %v1550 = vsel %vm1538, %v1532, %v1549
    %v1551 = vsel %vm1537, %v1548, %v1550
    %v1552 = vshll.u32 %v1512, 8
    %v1553 = vmul.u32.u64.compose %v1552, %v1551
    %v1554 = vextract.low.u32 %v1553
    %v1555 = vextract.high.u32 %v1553
    %v1556 = vmul.u32.u64.compose %v1552, %v1547
    %v1557 = vextract.low.u32 %v1556
    %v1558 = vextract.high.u32 %v1556
    %v1559 = vmul.u32 %v1552, %v1543
    %v1560 = vadd.s32 %v1555, %v1557
    %vm1561 = vc.u32 %v1555, %v1557
    %v1562 = vadd.s32 %v1558, 1
    %v1563 = vsel %vm1561, %v1562, %v1558
    %v1564 = vadd.s32 %v1559, %v1563
    %v1565 = vadd.s32 %v1564, 536870912
    %v1566 = vshrl.u32 %v1565, 30
    %v1567 = vshll.u32 %v1566, 30
    %v1568 = vsub.s32 %v1564, %v1567
    %vm1569 = vcmp.lt.s32.totalorder %v1568, 0
    %v1570 = vsub.s32 0, %v1568
    %v1571 = vsel %vm1569, %v1570, %v1568
    %v1572 = vclz %v1571
    %v1573 = vsub.s32 %v1572, 2
    %vm1574 = vcmp.gt.s32.totalorder 0, %v1573
    %v1575 = vsel %vm1574, 0, %v1573
    %v1576 = vsub.s32 32, %v1575
    %v1577 = vshll.u32 %v1568, %v1575
    %v1578 = vshrl.u32 %v1560, %v1576
    %v1579 = vor.u32 %v1577, %v1578
    %v1580 = vsub.s32 4294967266, %v1575
    %v1581 = vadd.s32 %v1580, 127
    %v1582 = vshll.u32 %v1581, 23
    %v1583 = vor.u32 4788187, %v1582
    %v1584 = vand.u32 2147483647, %v1583
    %v1586 = vcvt.s32.f32 %v1579
    %v1587 = vmul.f32 %v1586, %v1584
    %v1588 = vxor.u32 %v1587, 2147483648
    %v1589 = vsel %vm1506, %v1588, %v1587
    %v1590 = vsub.s32 4, %v1566
    %v1591 = vsel %vm1506, %v1590, %v1566
    %v1592 = vsel %vm1505, %v1292, %v1589
    %v1593 = vsel %vm1505, 0, %v1591
    %v1594 = vcosq.f32.pop %v1592
    %v1595 = vsinq.f32.pop %v1592
    %vm1596 = vweird.f32 %v1292
    %v1597 = vand.u32 %v1593, 3
    %vm1598 = vcmp.lt.s32.totalorder %v1597, 2
    %vm1599 = vcmp.eq.s32.totalorder %v1597, 0
    %v1600 = vxor.u32 %v1595, 2147483648
    %v1601 = vsel %vm1599, %v1594, %v1600
    %vm1602 = vcmp.eq.s32.totalorder %v1597, 2
    %v1603 = vxor.u32 %v1594, 2147483648
    %v1604 = vsel %vm1602, %v1603, %v1595
    %v1605 = vsel %vm1598, %v1601, %v1604
    %v1606 = vsel %vm1596, nan, %v1605
    %v1607 = vand.u32 2147483647, %v1294
    %vm1608 = vcmp.le.f32.partialorder %v1607, 0.7853982
    %vm1609 = vcmp.lt.s32.totalorder %v1294, 0
    %v1610 = vand.u32 %v1294, 2139095040
    %v1611 = vshrl.u32 %v1610, 23
    %v1612 = vsub.s32 %v1611, 127
    %v1613 = vand.u32 2147483647, %v1294
    %v1614 = vand.u32 %v1613, 8388607
    %v1615 = vor.u32 %v1614, 8388608
    %v1616 = vsub.s32 0, %v1615
    %v1617 = vadd.s32 %v1612, 1
    %vm1618 = vcmp.gt.s32.totalorder %v1617, 0
    %v1619 = vsel %vm1618, %v1617, 0
    %v1620 = vshrl.u32 %v1619, 5
    %v1621 = vand.u32 %v1619, 31
    %v1622 = vsub.s32 32, %v1621
    %v1623 = vshrl.u32 683565275, %v1622
    %v1624 = vshll.u32 683565275, %v1621
    %v1625 = vshrl.u32 2475754826, %v1622
    %v1626 = vor.u32 %v1624, %v1625
    %v1627 = vshll.u32 2475754826, %v1621
    %v1628 = vshrl.u32 2131351028, %v1622
    %v1629 = vor.u32 %v1627, %v1628
    %v1630 = vshll.u32 2131351028, %v1621
    %v1631 = vshrl.u32 2102212464, %v1622
    %v1632 = vor.u32 %v1630, %v1631
    %v1633 = vshll.u32 2102212464, %v1621
    %v1634 = vshrl.u32 920167782, %v1622
    %v1635 = vor.u32 %v1633, %v1634
    %v1636 = vshll.u32 920167782, %v1621
    %v1637 = vshrl.u32 1326507024, %v1622
    %v1638 = vor.u32 %v1636, %v1637
    %vm1639 = vcmp.lt.s32.totalorder %v1620, 1
    %vm1640 = vcmp.lt.s32.totalorder %v1620, 2
    %vm1641 = vcmp.lt.s32.totalorder %v1620, 3
    %vm1642 = vcmp.lt.s32.totalorder %v1620, 4
    %v1643 = vsel %vm1639, %v1623, %v1626
    %v1644 = vsel %vm1642, %v1632, 2102212464
    %v1645 = vsel %vm1641, %v1629, %v1644
    %v1646 = vsel %vm1640, %v1643, %v1645
    %v1647 = vsel %vm1639, %v1626, %v1629
    %v1648 = vsel %vm1642, %v1635, 920167782
    %v1649 = vsel %vm1641, %v1632, %v1648
    %v1650 = vsel %vm1640, %v1647, %v1649
    %v1651 = vsel %vm1639, %v1629, %v1632
    %v1652 = vsel %vm1642, %v1638, 1326507024
    %v1653 = vsel %vm1641, %v1635, %v1652
    %v1654 = vsel %vm1640, %v1651, %v1653
    %v1655 = vshll.u32 %v1615, 8
    %v1656 = vmul.u32.u64.compose %v1655, %v1654
    %v1657 = vextract.low.u32 %v1656
    %v1658 = vextract.high.u32 %v1656
    %v1659 = vmul.u32.u64.compose %v1655, %v1650
    %v1660 = vextract.low.u32 %v1659
    %v1661 = vextract.high.u32 %v1659
    %v1662 = vmul.u32 %v1655, %v1646
    %v1663 = vadd.s32 %v1658, %v1660
    %vm1664 = vc.u32 %v1658, %v1660
    %v1665 = vadd.s32 %v1661, 1
    %v1666 = vsel %vm1664, %v1665, %v1661
    %v1667 = vadd.s32 %v1662, %v1666
    %v1668 = vadd.s32 %v1667, 536870912
    %v1669 = vshrl.u32 %v1668, 30
    %v1670 = vshll.u32 %v1669, 30
    %v1671 = vsub.s32 %v1667, %v1670
    %vm1672 = vcmp.lt.s32.totalorder %v1671, 0
    %v1673 = vsub.s32 0, %v1671
    %v1674 = vsel %vm1672, %v1673, %v1671
    %v1675 = vclz %v1674
    %v1676 = vsub.s32 %v1675, 2
    %vm1677 = vcmp.gt.s32.totalorder 0, %v1676
    %v1678 = vsel %vm1677, 0, %v1676
    %v1679 = vsub.s32 32, %v1678
    %v1680 = vshll.u32 %v1671, %v1678
    %v1681 = vshrl.u32 %v1663, %v1679
    %v1682 = vor.u32 %v1680, %v1681
    %v1683 = vsub.s32 4294967266, %v1678
    %v1684 = vadd.s32 %v1683, 127
    %v1685 = vshll.u32 %v1684, 23
    %v1686 = vor.u32 4788187, %v1685
    %v1687 = vand.u32 2147483647, %v1686
    %v1689 = vcvt.s32.f32 %v1682
    %v1690 = vmul.f32 %v1689, %v1687
    %v1691 = vxor.u32 %v1690, 2147483648
    %v1692 = vsel %vm1609, %v1691, %v1690
    %v1693 = vsub.s32 4, %v1669
    %v1694 = vsel %vm1609, %v1693, %v1669
    %v1695 = vsel %vm1608, %v1294, %v1692
    %v1696 = vsel %vm1608, 0, %v1694
    %v1697 = vcosq.f32.pop %v1695
    %v1698 = vsinq.f32.pop %v1695
    %vm1699 = vweird.f32 %v1294
    %v1700 = vand.u32 %v1696, 3
    %vm1701 = vcmp.lt.s32.totalorder %v1700, 2
    %vm1702 = vcmp.eq.s32.totalorder %v1700, 0
    %v1703 = vxor.u32 %v1698, 2147483648
    %v1704 = vsel %vm1702, %v1697, %v1703
    %vm1705 = vcmp.eq.s32.totalorder %v1700, 2
    %v1706 = vxor.u32 %v1697, 2147483648
    %v1707 = vsel %vm1705, %v1706, %v1698
    %v1708 = vsel %vm1701, %v1704, %v1707
    %v1709 = vsel %vm1699, nan, %v1708
    %v1710 = vmul.f32 %v1400, 1.5414666
    %v1711 = vmul.f32 %v1503, 1.5414666
    %v1712 = vmul.f32 %v1606, 1.5414666
    %v1713 = vmul.f32 %v1709, 1.5414666
    %v1714 = vsub.f32 1.5940298, %v1710
    %v1715 = vsub.f32 1.5940298, %v1711
    %v1716 = vsub.f32 1.5940298, %v1712
    %v1717 = vsub.f32 1.5940298, %v1713
    %v1718 = vrcp.pop %v1714
    %v1719 = vrcp.pop %v1715
    %v1720 = vrcp.pop %v1716
    %v1721 = vrcp.pop %v1717
    %v1722 = vmul.f32 %v1718, 0.05090673
    %v1723 = vmul.f32 %v1719, 0.05090673
    %v1724 = vmul.f32 %v1720, 0.05090673
    %v1725 = vmul.f32 %v1721, 0.05090673
    %v1726 = vsub.f32 1.0, %v1722
    %v1727 = vsub.f32 1.0, %v1723
    %v1728 = vsub.f32 1.0, %v1724
    %v1729 = vsub.f32 1.0, %v1725
    %s1730 = sadd.s32 %s606, 2
    %s1731 = sld [smem:[#allocation3 + %s1730]]
    %v1732 = vstv %s1731
    %v1733 = vmul.f32 %v1732, %v1726
    %v1734 = vmul.f32 %v1732, %v1727
    %v1735 = vmul.f32 %v1732, %v1728
    %v1736 = vmul.f32 %v1732, %v1729
    %v1737 = vadd.f32 %v1175, %v1733
    %v1738 = vadd.f32 %v1176, %v1734
    %v1739 = vadd.f32 %v1177, %v1735
    %v1740 = vadd.f32 %v1178, %v1736
    %s1741 = scalar_lea.vmem %s2, 12
    %v1742 = vld [vmem:[%s1741] sm:$0xf]
    %s1743 = scalar_lea.vmem [#allocation7], 24
    %v1744 = vld [vmem:[%s1743] sm:$0xff]
    %v1746 = vcombine.high %v1744, %v1744
    %v1748 = vunpack.c.l.s4 1983009808
    %v1749 = vunpack.c.0.s8 %v1748
    %v1750 = vlaneseq
    %v1751 = vshrl.u32 %v1750, 7
    %v1752 = vsub.s32 %v1749, %v1751
    %v1753 = vrot.slane %v1744, %v1752
    %v1755 = vunpack.c.l.s4 1983009808
    %v1756 = vunpack.c.0.s8 %v1755
    %v1757 = vlaneseq
    %v1758 = vshrl.u32 %v1757, 7
    %v1759 = vsub.s32 %v1756, %v1758
    %v1760 = vrot.slane %v1746, %v1759
    %v1761 = vcombine.high %v1753, %v1753
    %v1762 = vcombine.high %v1760, %v1760
    %v1764 = vsel %vm75, %v1742, 0
    %v1767 = vsel %vm79, %v1753, 0
    %v1770 = vsel %vm79, %v1761, 0
    %v1773 = vsel %vm79, %v1760, 0
    %v1776 = vsel %vm79, %v1762, 0
    %1778 = vmatprep.subr.bf16.mxu0 0
    %1779 = vmatpush1.bf16.msra.mxu0 0
    %1780 = vmatprep.subr.bf16.mxu0 0
    %1781 = vmatpush1.bf16.msra.mxu0 0
    %1782 = vmatprep.subr.bf16.mxu0 0
    %1783 = vmatpush1.bf16.msra.mxu0 0
    %1784 = vmatprep.subr.bf16.mxu0 0
    %1785 = vmatpush1.bf16.msra.mxu0 0
    %1786 = vmatprep.subr.bf16.mxu0 0
    %1787 = vmatpush1.bf16.msra.mxu0 0
    %1788 = vmatprep.subr.bf16.mxu0 0
    %1789 = vmatpush1.bf16.msra.mxu0 0
    %1790 = vmatprep.subr.bf16.mxu0 0
    %1791 = vmatpush1.bf16.msra.mxu0 0
    %1792 = vmatprep.subr.bf16.mxu0 %v1770
    %1793 = vmatpush1.bf16.msra.mxu0 %v1767
    %1794 = vmatprep.subr.bf16.mxu0 0
    %1795 = vmatpush2.bf16.msra.mxu0 0
    %1796 = vmatprep.subr.bf16.mxu0 0
    %1797 = vmatpush2.bf16.msra.mxu0 0
    %1798 = vmatprep.subr.bf16.mxu0 0
    %1799 = vmatpush2.bf16.msra.mxu0 0
    %1800 = vmatprep.subr.bf16.mxu0 0
    %1801 = vmatpush2.bf16.msra.mxu0 0
    %1802 = vmatprep.subr.bf16.mxu0 0
    %1803 = vmatpush2.bf16.msra.mxu0 0
    %1804 = vmatprep.subr.bf16.mxu0 0
    %1805 = vmatpush2.bf16.msra.mxu0 0
    %1806 = vmatprep.subr.bf16.mxu0 0
    %1807 = vmatpush2.bf16.msra.mxu0 0
    %1808 = vmatprep.subr.bf16.mxu0 0
    %1809 = vmatpush2.bf16.msra.mxu0 0
    %1810 = vmatprep.mubr.bf16.mxu0 0
    %1811 = vmatmul.mubr.bf16.gmra.mxu0 %v1764
    %v1812 = vpop.f32.mrf.mxu0
    %v1813 = vadd.f32 0.0, %v1812
    %v1814 = vpop.f32.mrf.mxu0
    %v1815 = vadd.f32 0.0, %v1814
    %v1816 = vpop.f32.mrf.mxu0
    %v1817 = vpop.f32.mrf.mxu0
    %1818 = vdwg.mxu0
    %1819 = vmatprep.subr.bf16.mxu0 0
    %1820 = vmatpush1.bf16.msra.mxu0 0
    %1821 = vmatprep.subr.bf16.mxu0 0
    %1822 = vmatpush1.bf16.msra.mxu0 0
    %1823 = vmatprep.subr.bf16.mxu0 0
    %1824 = vmatpush1.bf16.msra.mxu0 0
    %1825 = vmatprep.subr.bf16.mxu0 0
    %1826 = vmatpush1.bf16.msra.mxu0 0
    %1827 = vmatprep.subr.bf16.mxu0 0
    %1828 = vmatpush1.bf16.msra.mxu0 0
    %1829 = vmatprep.subr.bf16.mxu0 0
    %1830 = vmatpush1.bf16.msra.mxu0 0
    %1831 = vmatprep.subr.bf16.mxu0 0
    %1832 = vmatpush1.bf16.msra.mxu0 0
    %1833 = vmatprep.subr.bf16.mxu0 %v1776
    %1834 = vmatpush1.bf16.msra.mxu0 %v1773
    %1835 = vmatprep.subr.bf16.mxu0 0
    %1836 = vmatpush2.bf16.msra.mxu0 0
    %1837 = vmatprep.subr.bf16.mxu0 0
    %1838 = vmatpush2.bf16.msra.mxu0 0
    %1839 = vmatprep.subr.bf16.mxu0 0
    %1840 = vmatpush2.bf16.msra.mxu0 0
    %1841 = vmatprep.subr.bf16.mxu0 0
    %1842 = vmatpush2.bf16.msra.mxu0 0
    %1843 = vmatprep.subr.bf16.mxu0 0
    %1844 = vmatpush2.bf16.msra.mxu0 0
    %1845 = vmatprep.subr.bf16.mxu0 0
    %1846 = vmatpush2.bf16.msra.mxu0 0
    %1847 = vmatprep.subr.bf16.mxu0 0
    %1848 = vmatpush2.bf16.msra.mxu0 0
    %1849 = vmatprep.subr.bf16.mxu0 0
    %1850 = vmatpush2.bf16.msra.mxu0 0
    %1851 = vmatprep.mubr.bf16.mxu0 0
    %1852 = vmatmul.mubr.bf16.gmra.mxu0 %v1764
    %v1853 = vpop.f32.mrf.mxu0
    %v1854 = vadd.f32 0.0, %v1853
    %v1855 = vpop.f32.mrf.mxu0
    %v1856 = vadd.f32 0.0, %v1855
    %v1857 = vpop.f32.mrf.mxu0
    %v1858 = vpop.f32.mrf.mxu0
    %1859 = vdwg.mxu0
    %v1860 = vand.u32 2147483647, %v1813
    %vm1861 = vcmp.le.f32.partialorder %v1860, 0.7853982
    %vm1862 = vcmp.lt.s32.totalorder %v1813, 0
    %v1863 = vand.u32 %v1813, 2139095040
    %v1864 = vshrl.u32 %v1863, 23
    %v1865 = vsub.s32 %v1864, 127
    %v1866 = vand.u32 2147483647, %v1813
    %v1867 = vand.u32 %v1866, 8388607
    %v1868 = vor.u32 %v1867, 8388608
    %v1869 = vsub.s32 0, %v1868
    %v1870 = vadd.s32 %v1865, 1
    %vm1871 = vcmp.gt.s32.totalorder %v1870, 0
    %v1872 = vsel %vm1871, %v1870, 0
    %v1873 = vshrl.u32 %v1872, 5
    %v1874 = vand.u32 %v1872, 31
    %v1875 = vsub.s32 32, %v1874
    %v1876 = vshrl.u32 683565275, %v1875
    %v1877 = vshll.u32 683565275, %v1874
    %v1878 = vshrl.u32 2475754826, %v1875
    %v1879 = vor.u32 %v1877, %v1878
    %v1880 = vshll.u32 2475754826, %v1874
    %v1881 = vshrl.u32 2131351028, %v1875
    %v1882 = vor.u32 %v1880, %v1881
    %v1883 = vshll.u32 2131351028, %v1874
    %v1884 = vshrl.u32 2102212464, %v1875
    %v1885 = vor.u32 %v1883, %v1884
    %v1886 = vshll.u32 2102212464, %v1874
    %v1887 = vshrl.u32 920167782, %v1875
    %v1888 = vor.u32 %v1886, %v1887
    %v1889 = vshll.u32 920167782, %v1874
    %v1890 = vshrl.u32 1326507024, %v1875
    %v1891 = vor.u32 %v1889, %v1890
    %vm1892 = vcmp.lt.s32.totalorder %v1873, 1
    %vm1893 = vcmp.lt.s32.totalorder %v1873, 2
    %vm1894 = vcmp.lt.s32.totalorder %v1873, 3
    %vm1895 = vcmp.lt.s32.totalorder %v1873, 4
    %v1896 = vsel %vm1892, %v1876, %v1879
    %v1897 = vsel %vm1895, %v1885, 2102212464
    %v1898 = vsel %vm1894, %v1882, %v1897
    %v1899 = vsel %vm1893, %v1896, %v1898
    %v1900 = vsel %vm1892, %v1879, %v1882
    %v1901 = vsel %vm1895, %v1888, 920167782
    %v1902 = vsel %vm1894, %v1885, %v1901
    %v1903 = vsel %vm1893, %v1900, %v1902
    %v1904 = vsel %vm1892, %v1882, %v1885
    %v1905 = vsel %vm1895, %v1891, 1326507024
    %v1906 = vsel %vm1894, %v1888, %v1905
    %v1907 = vsel %vm1893, %v1904, %v1906
    %v1908 = vshll.u32 %v1868, 8
    %v1909 = vmul.u32.u64.compose %v1908, %v1907
    %v1910 = vextract.low.u32 %v1909
    %v1911 = vextract.high.u32 %v1909
    %v1912 = vmul.u32.u64.compose %v1908, %v1903
    %v1913 = vextract.low.u32 %v1912
    %v1914 = vextract.high.u32 %v1912
    %v1915 = vmul.u32 %v1908, %v1899
    %v1916 = vadd.s32 %v1911, %v1913
    %vm1917 = vc.u32 %v1911, %v1913
    %v1918 = vadd.s32 %v1914, 1
    %v1919 = vsel %vm1917, %v1918, %v1914
    %v1920 = vadd.s32 %v1915, %v1919
    %v1921 = vadd.s32 %v1920, 536870912
    %v1922 = vshrl.u32 %v1921, 30
    %v1923 = vshll.u32 %v1922, 30
    %v1924 = vsub.s32 %v1920, %v1923
    %vm1925 = vcmp.lt.s32.totalorder %v1924, 0
    %v1926 = vsub.s32 0, %v1924
    %v1927 = vsel %vm1925, %v1926, %v1924
    %v1928 = vclz %v1927
    %v1929 = vsub.s32 %v1928, 2
    %vm1930 = vcmp.gt.s32.totalorder 0, %v1929
    %v1931 = vsel %vm1930, 0, %v1929
    %v1932 = vsub.s32 32, %v1931
    %v1933 = vshll.u32 %v1924, %v1931
    %v1934 = vshrl.u32 %v1916, %v1932
    %v1935 = vor.u32 %v1933, %v1934
    %v1936 = vsub.s32 4294967266, %v1931
    %v1937 = vadd.s32 %v1936, 127
    %v1938 = vshll.u32 %v1937, 23
    %v1939 = vor.u32 4788187, %v1938
    %v1940 = vand.u32 2147483647, %v1939
    %v1942 = vcvt.s32.f32 %v1935
    %v1943 = vmul.f32 %v1942, %v1940
    %v1944 = vxor.u32 %v1943, 2147483648
    %v1945 = vsel %vm1862, %v1944, %v1943
    %v1946 = vsub.s32 4, %v1922
    %v1947 = vsel %vm1862, %v1946, %v1922
    %v1948 = vsel %vm1861, %v1813, %v1945
    %v1949 = vsel %vm1861, 0, %v1947
    %v1950 = vcosq.f32.pop %v1948
    %v1951 = vsinq.f32.pop %v1948
    %vm1952 = vweird.f32 %v1813
    %v1953 = vand.u32 %v1949, 3
    %vm1954 = vcmp.lt.s32.totalorder %v1953, 2
    %vm1955 = vcmp.eq.s32.totalorder %v1953, 0
    %v1956 = vxor.u32 %v1951, 2147483648
    %v1957 = vsel %vm1955, %v1950, %v1956
    %vm1958 = vcmp.eq.s32.totalorder %v1953, 2
    %v1959 = vxor.u32 %v1950, 2147483648
    %v1960 = vsel %vm1958, %v1959, %v1951
    %v1961 = vsel %vm1954, %v1957, %v1960
    %v1962 = vsel %vm1952, nan, %v1961
    %v1963 = vand.u32 2147483647, %v1815
    %vm1964 = vcmp.le.f32.partialorder %v1963, 0.7853982
    %vm1965 = vcmp.lt.s32.totalorder %v1815, 0
    %v1966 = vand.u32 %v1815, 2139095040
    %v1967 = vshrl.u32 %v1966, 23
    %v1968 = vsub.s32 %v1967, 127
    %v1969 = vand.u32 2147483647, %v1815
    %v1970 = vand.u32 %v1969, 8388607
    %v1971 = vor.u32 %v1970, 8388608
    %v1972 = vsub.s32 0, %v1971
    %v1973 = vadd.s32 %v1968, 1
    %vm1974 = vcmp.gt.s32.totalorder %v1973, 0
    %v1975 = vsel %vm1974, %v1973, 0
    %v1976 = vshrl.u32 %v1975, 5
    %v1977 = vand.u32 %v1975, 31
    %v1978 = vsub.s32 32, %v1977
    %v1979 = vshrl.u32 683565275, %v1978
    %v1980 = vshll.u32 683565275, %v1977
    %v1981 = vshrl.u32 2475754826, %v1978
    %v1982 = vor.u32 %v1980, %v1981
    %v1983 = vshll.u32 2475754826, %v1977
    %v1984 = vshrl.u32 2131351028, %v1978
    %v1985 = vor.u32 %v1983, %v1984
    %v1986 = vshll.u32 2131351028, %v1977
    %v1987 = vshrl.u32 2102212464, %v1978
    %v1988 = vor.u32 %v1986, %v1987
    %v1989 = vshll.u32 2102212464, %v1977
    %v1990 = vshrl.u32 920167782, %v1978
    %v1991 = vor.u32 %v1989, %v1990
    %v1992 = vshll.u32 920167782, %v1977
    %v1993 = vshrl.u32 1326507024, %v1978
    %v1994 = vor.u32 %v1992, %v1993
    %vm1995 = vcmp.lt.s32.totalorder %v1976, 1
    %vm1996 = vcmp.lt.s32.totalorder %v1976, 2
    %vm1997 = vcmp.lt.s32.totalorder %v1976, 3
    %vm1998 = vcmp.lt.s32.totalorder %v1976, 4
    %v1999 = vsel %vm1995, %v1979, %v1982
    %v2000 = vsel %vm1998, %v1988, 2102212464
    %v2001 = vsel %vm1997, %v1985, %v2000
    %v2002 = vsel %vm1996, %v1999, %v2001
    %v2003 = vsel %vm1995, %v1982, %v1985
    %v2004 = vsel %vm1998, %v1991, 920167782
    %v2005 = vsel %vm1997, %v1988, %v2004
    %v2006 = vsel %vm1996, %v2003, %v2005
    %v2007 = vsel %vm1995, %v1985, %v1988
    %v2008 = vsel %vm1998, %v1994, 1326507024
    %v2009 = vsel %vm1997, %v1991, %v2008
    %v2010 = vsel %vm1996, %v2007, %v2009
    %v2011 = vshll.u32 %v1971, 8
    %v2012 = vmul.u32.u64.compose %v2011, %v2010
    %v2013 = vextract.low.u32 %v2012
    %v2014 = vextract.high.u32 %v2012
    %v2015 = vmul.u32.u64.compose %v2011, %v2006
    %v2016 = vextract.low.u32 %v2015
    %v2017 = vextract.high.u32 %v2015
    %v2018 = vmul.u32 %v2011, %v2002
    %v2019 = vadd.s32 %v2014, %v2016
    %vm2020 = vc.u32 %v2014, %v2016
    %v2021 = vadd.s32 %v2017, 1
    %v2022 = vsel %vm2020, %v2021, %v2017
    %v2023 = vadd.s32 %v2018, %v2022
    %v2024 = vadd.s32 %v2023, 536870912
    %v2025 = vshrl.u32 %v2024, 30
    %v2026 = vshll.u32 %v2025, 30
    %v2027 = vsub.s32 %v2023, %v2026
    %vm2028 = vcmp.lt.s32.totalorder %v2027, 0
    %v2029 = vsub.s32 0, %v2027
    %v2030 = vsel %vm2028, %v2029, %v2027
    %v2031 = vclz %v2030
    %v2032 = vsub.s32 %v2031, 2
    %vm2033 = vcmp.gt.s32.totalorder 0, %v2032
    %v2034 = vsel %vm2033, 0, %v2032
    %v2035 = vsub.s32 32, %v2034
    %v2036 = vshll.u32 %v2027, %v2034
    %v2037 = vshrl.u32 %v2019, %v2035
    %v2038 = vor.u32 %v2036, %v2037
    %v2039 = vsub.s32 4294967266, %v2034
    %v2040 = vadd.s32 %v2039, 127
    %v2041 = vshll.u32 %v2040, 23
    %v2042 = vor.u32 4788187, %v2041
    %v2043 = vand.u32 2147483647, %v2042
    %v2045 = vcvt.s32.f32 %v2038
    %v2046 = vmul.f32 %v2045, %v2043
    %v2047 = vxor.u32 %v2046, 2147483648
    %v2048 = vsel %vm1965, %v2047, %v2046
    %v2049 = vsub.s32 4, %v2025
    %v2050 = vsel %vm1965, %v2049, %v2025
    %v2051 = vsel %vm1964, %v1815, %v2048
    %v2052 = vsel %vm1964, 0, %v2050
    %v2053 = vcosq.f32.pop %v2051
    %v2054 = vsinq.f32.pop %v2051
    %vm2055 = vweird.f32 %v1815
    %v2056 = vand.u32 %v2052, 3
    %vm2057 = vcmp.lt.s32.totalorder %v2056, 2
    %vm2058 = vcmp.eq.s32.totalorder %v2056, 0
    %v2059 = vxor.u32 %v2054, 2147483648
    %v2060 = vsel %vm2058, %v2053, %v2059
    %vm2061 = vcmp.eq.s32.totalorder %v2056, 2
    %v2062 = vxor.u32 %v2053, 2147483648
    %v2063 = vsel %vm2061, %v2062, %v2054
    %v2064 = vsel %vm2057, %v2060, %v2063
    %v2065 = vsel %vm2055, nan, %v2064
    %v2066 = vand.u32 2147483647, %v1854
    %vm2067 = vcmp.le.f32.partialorder %v2066, 0.7853982
    %vm2068 = vcmp.lt.s32.totalorder %v1854, 0
    %v2069 = vand.u32 %v1854, 2139095040
    %v2070 = vshrl.u32 %v2069, 23
    %v2071 = vsub.s32 %v2070, 127
    %v2072 = vand.u32 2147483647, %v1854
    %v2073 = vand.u32 %v2072, 8388607
    %v2074 = vor.u32 %v2073, 8388608
    %v2075 = vsub.s32 0, %v2074
    %v2076 = vadd.s32 %v2071, 1
    %vm2077 = vcmp.gt.s32.totalorder %v2076, 0
    %v2078 = vsel %vm2077, %v2076, 0
    %v2079 = vshrl.u32 %v2078, 5
    %v2080 = vand.u32 %v2078, 31
    %v2081 = vsub.s32 32, %v2080
    %v2082 = vshrl.u32 683565275, %v2081
    %v2083 = vshll.u32 683565275, %v2080
    %v2084 = vshrl.u32 2475754826, %v2081
    %v2085 = vor.u32 %v2083, %v2084
    %v2086 = vshll.u32 2475754826, %v2080
    %v2087 = vshrl.u32 2131351028, %v2081
    %v2088 = vor.u32 %v2086, %v2087
    %v2089 = vshll.u32 2131351028, %v2080
    %v2090 = vshrl.u32 2102212464, %v2081
    %v2091 = vor.u32 %v2089, %v2090
    %v2092 = vshll.u32 2102212464, %v2080
    %v2093 = vshrl.u32 920167782, %v2081
    %v2094 = vor.u32 %v2092, %v2093
    %v2095 = vshll.u32 920167782, %v2080
    %v2096 = vshrl.u32 1326507024, %v2081
    %v2097 = vor.u32 %v2095, %v2096
    %vm2098 = vcmp.lt.s32.totalorder %v2079, 1
    %vm2099 = vcmp.lt.s32.totalorder %v2079, 2
    %vm2100 = vcmp.lt.s32.totalorder %v2079, 3
    %vm2101 = vcmp.lt.s32.totalorder %v2079, 4
    %v2102 = vsel %vm2098, %v2082, %v2085
    %v2103 = vsel %vm2101, %v2091, 2102212464
    %v2104 = vsel %vm2100, %v2088, %v2103
    %v2105 = vsel %vm2099, %v2102, %v2104
    %v2106 = vsel %vm2098, %v2085, %v2088
    %v2107 = vsel %vm2101, %v2094, 920167782
    %v2108 = vsel %vm2100, %v2091, %v2107
    %v2109 = vsel %vm2099, %v2106, %v2108
    %v2110 = vsel %vm2098, %v2088, %v2091
    %v2111 = vsel %vm2101, %v2097, 1326507024
    %v2112 = vsel %vm2100, %v2094, %v2111
    %v2113 = vsel %vm2099, %v2110, %v2112
    %v2114 = vshll.u32 %v2074, 8
    %v2115 = vmul.u32.u64.compose %v2114, %v2113
    %v2116 = vextract.low.u32 %v2115
    %v2117 = vextract.high.u32 %v2115
    %v2118 = vmul.u32.u64.compose %v2114, %v2109
    %v2119 = vextract.low.u32 %v2118
    %v2120 = vextract.high.u32 %v2118
    %v2121 = vmul.u32 %v2114, %v2105
    %v2122 = vadd.s32 %v2117, %v2119
    %vm2123 = vc.u32 %v2117, %v2119
    %v2124 = vadd.s32 %v2120, 1
    %v2125 = vsel %vm2123, %v2124, %v2120
    %v2126 = vadd.s32 %v2121, %v2125
    %v2127 = vadd.s32 %v2126, 536870912
    %v2128 = vshrl.u32 %v2127, 30
    %v2129 = vshll.u32 %v2128, 30
    %v2130 = vsub.s32 %v2126, %v2129
    %vm2131 = vcmp.lt.s32.totalorder %v2130, 0
    %v2132 = vsub.s32 0, %v2130
    %v2133 = vsel %vm2131, %v2132, %v2130
    %v2134 = vclz %v2133
    %v2135 = vsub.s32 %v2134, 2
    %vm2136 = vcmp.gt.s32.totalorder 0, %v2135
    %v2137 = vsel %vm2136, 0, %v2135
    %v2138 = vsub.s32 32, %v2137
    %v2139 = vshll.u32 %v2130, %v2137
    %v2140 = vshrl.u32 %v2122, %v2138
    %v2141 = vor.u32 %v2139, %v2140
    %v2142 = vsub.s32 4294967266, %v2137
    %v2143 = vadd.s32 %v2142, 127
    %v2144 = vshll.u32 %v2143, 23
    %v2145 = vor.u32 4788187, %v2144
    %v2146 = vand.u32 2147483647, %v2145
    %v2148 = vcvt.s32.f32 %v2141
    %v2149 = vmul.f32 %v2148, %v2146
    %v2150 = vxor.u32 %v2149, 2147483648
    %v2151 = vsel %vm2068, %v2150, %v2149
    %v2152 = vsub.s32 4, %v2128
    %v2153 = vsel %vm2068, %v2152, %v2128
    %v2154 = vsel %vm2067, %v1854, %v2151
    %v2155 = vsel %vm2067, 0, %v2153
    %v2156 = vcosq.f32.pop %v2154
    %v2157 = vsinq.f32.pop %v2154
    %vm2158 = vweird.f32 %v1854
    %v2159 = vand.u32 %v2155, 3
    %vm2160 = vcmp.lt.s32.totalorder %v2159, 2
    %vm2161 = vcmp.eq.s32.totalorder %v2159, 0
    %v2162 = vxor.u32 %v2157, 2147483648
    %v2163 = vsel %vm2161, %v2156, %v2162
    %vm2164 = vcmp.eq.s32.totalorder %v2159, 2
    %v2165 = vxor.u32 %v2156, 2147483648
    %v2166 = vsel %vm2164, %v2165, %v2157
    %v2167 = vsel %vm2160, %v2163, %v2166
    %v2168 = vsel %vm2158, nan, %v2167
    %v2169 = vand.u32 2147483647, %v1856
    %vm2170 = vcmp.le.f32.partialorder %v2169, 0.7853982
    %vm2171 = vcmp.lt.s32.totalorder %v1856, 0
    %v2172 = vand.u32 %v1856, 2139095040
    %v2173 = vshrl.u32 %v2172, 23
    %v2174 = vsub.s32 %v2173, 127
    %v2175 = vand.u32 2147483647, %v1856
    %v2176 = vand.u32 %v2175, 8388607
    %v2177 = vor.u32 %v2176, 8388608
    %v2178 = vsub.s32 0, %v2177
    %v2179 = vadd.s32 %v2174, 1
    %vm2180 = vcmp.gt.s32.totalorder %v2179, 0
    %v2181 = vsel %vm2180, %v2179, 0
    %v2182 = vshrl.u32 %v2181, 5
    %v2183 = vand.u32 %v2181, 31
    %v2184 = vsub.s32 32, %v2183
    %v2185 = vshrl.u32 683565275, %v2184
    %v2186 = vshll.u32 683565275, %v2183
    %v2187 = vshrl.u32 2475754826, %v2184
    %v2188 = vor.u32 %v2186, %v2187
    %v2189 = vshll.u32 2475754826, %v2183
    %v2190 = vshrl.u32 2131351028, %v2184
    %v2191 = vor.u32 %v2189, %v2190
    %v2192 = vshll.u32 2131351028, %v2183
    %v2193 = vshrl.u32 2102212464, %v2184
    %v2194 = vor.u32 %v2192, %v2193
    %v2195 = vshll.u32 2102212464, %v2183
    %v2196 = vshrl.u32 920167782, %v2184
    %v2197 = vor.u32 %v2195, %v2196
    %v2198 = vshll.u32 920167782, %v2183
    %v2199 = vshrl.u32 1326507024, %v2184
    %v2200 = vor.u32 %v2198, %v2199
    %vm2201 = vcmp.lt.s32.totalorder %v2182, 1
    %vm2202 = vcmp.lt.s32.totalorder %v2182, 2
    %vm2203 = vcmp.lt.s32.totalorder %v2182, 3
    %vm2204 = vcmp.lt.s32.totalorder %v2182, 4
    %v2205 = vsel %vm2201, %v2185, %v2188
    %v2206 = vsel %vm2204, %v2194, 2102212464
    %v2207 = vsel %vm2203, %v2191, %v2206
    %v2208 = vsel %vm2202, %v2205, %v2207
    %v2209 = vsel %vm2201, %v2188, %v2191
    %v2210 = vsel %vm2204, %v2197, 920167782
    %v2211 = vsel %vm2203, %v2194, %v2210
    %v2212 = vsel %vm2202, %v2209, %v2211
    %v2213 = vsel %vm2201, %v2191, %v2194
    %v2214 = vsel %vm2204, %v2200, 1326507024
    %v2215 = vsel %vm2203, %v2197, %v2214
    %v2216 = vsel %vm2202, %v2213, %v2215
    %v2217 = vshll.u32 %v2177, 8
    %v2218 = vmul.u32.u64.compose %v2217, %v2216
    %v2219 = vextract.low.u32 %v2218
    %v2220 = vextract.high.u32 %v2218
    %v2221 = vmul.u32.u64.compose %v2217, %v2212
    %v2222 = vextract.low.u32 %v2221
    %v2223 = vextract.high.u32 %v2221
    %v2224 = vmul.u32 %v2217, %v2208
    %v2225 = vadd.s32 %v2220, %v2222
    %vm2226 = vc.u32 %v2220, %v2222
    %v2227 = vadd.s32 %v2223, 1
    %v2228 = vsel %vm2226, %v2227, %v2223
    %v2229 = vadd.s32 %v2224, %v2228
    %v2230 = vadd.s32 %v2229, 536870912
    %v2231 = vshrl.u32 %v2230, 30
    %v2232 = vshll.u32 %v2231, 30
    %v2233 = vsub.s32 %v2229, %v2232
    %vm2234 = vcmp.lt.s32.totalorder %v2233, 0
    %v2235 = vsub.s32 0, %v2233
    %v2236 = vsel %vm2234, %v2235, %v2233
    %v2237 = vclz %v2236
    %v2238 = vsub.s32 %v2237, 2
    %vm2239 = vcmp.gt.s32.totalorder 0, %v2238
    %v2240 = vsel %vm2239, 0, %v2238
    %v2241 = vsub.s32 32, %v2240
    %v2242 = vshll.u32 %v2233, %v2240
    %v2243 = vshrl.u32 %v2225, %v2241
    %v2244 = vor.u32 %v2242, %v2243
    %v2245 = vsub.s32 4294967266, %v2240
    %v2246 = vadd.s32 %v2245, 127
    %v2247 = vshll.u32 %v2246, 23
    %v2248 = vor.u32 4788187, %v2247
    %v2249 = vand.u32 2147483647, %v2248
    %v2251 = vcvt.s32.f32 %v2244
    %v2252 = vmul.f32 %v2251, %v2249
    %v2253 = vxor.u32 %v2252, 2147483648
    %v2254 = vsel %vm2171, %v2253, %v2252
    %v2255 = vsub.s32 4, %v2231
    %v2256 = vsel %vm2171, %v2255, %v2231
    %v2257 = vsel %vm2170, %v1856, %v2254
    %v2258 = vsel %vm2170, 0, %v2256
    %v2259 = vcosq.f32.pop %v2257
    %v2260 = vsinq.f32.pop %v2257
    %vm2261 = vweird.f32 %v1856
    %v2262 = vand.u32 %v2258, 3
    %vm2263 = vcmp.lt.s32.totalorder %v2262, 2
    %vm2264 = vcmp.eq.s32.totalorder %v2262, 0
    %v2265 = vxor.u32 %v2260, 2147483648
    %v2266 = vsel %vm2264, %v2259, %v2265
    %vm2267 = vcmp.eq.s32.totalorder %v2262, 2
    %v2268 = vxor.u32 %v2259, 2147483648
    %v2269 = vsel %vm2267, %v2268, %v2260
    %v2270 = vsel %vm2263, %v2266, %v2269
    %v2271 = vsel %vm2261, nan, %v2270
    %v2272 = vmul.f32 %v1962, 1.5414666
    %v2273 = vmul.f32 %v2065, 1.5414666
    %v2274 = vmul.f32 %v2168, 1.5414666
    %v2275 = vmul.f32 %v2271, 1.5414666
    %v2276 = vsub.f32 1.5940298, %v2272
    %v2277 = vsub.f32 1.5940298, %v2273
    %v2278 = vsub.f32 1.5940298, %v2274
    %v2279 = vsub.f32 1.5940298, %v2275
    %v2280 = vrcp.pop %v2276
    %v2281 = vrcp.pop %v2277
    %v2282 = vrcp.pop %v2278
    %v2283 = vrcp.pop %v2279
    %v2284 = vmul.f32 %v2280, 0.05090673
    %v2285 = vmul.f32 %v2281, 0.05090673
    %v2286 = vmul.f32 %v2282, 0.05090673
    %v2287 = vmul.f32 %v2283, 0.05090673
    %v2288 = vsub.f32 1.0, %v2284
    %v2289 = vsub.f32 1.0, %v2285
    %v2290 = vsub.f32 1.0, %v2286
    %v2291 = vsub.f32 1.0, %v2287
    %s2292 = sadd.s32 %s606, 3
    %s2293 = sld [smem:[#allocation3 + %s2292]]
    %v2294 = vstv %s2293
    %v2295 = vmul.f32 %v2294, %v2288
    %v2296 = vmul.f32 %v2294, %v2289
    %v2297 = vmul.f32 %v2294, %v2290
    %v2298 = vmul.f32 %v2294, %v2291
    %v2299 = vadd.f32 %v1737, %v2295
    %v2300 = vadd.f32 %v1738, %v2296
    %v2301 = vadd.f32 %v1739, %v2297
    %v2302 = vadd.f32 %v1740, %v2298
    %s2303 = scalar_lea.vmem %s2, 16
    %v2304 = vld [vmem:[%s2303] sm:$0xf]
    %s2305 = scalar_lea.vmem [#allocation7], 32
    %v2306 = vld [vmem:[%s2305] sm:$0xff]
    %v2308 = vcombine.high %v2306, %v2306
    %v2310 = vunpack.c.l.s4 1983009808
    %v2311 = vunpack.c.0.s8 %v2310
    %v2312 = vlaneseq
    %v2313 = vshrl.u32 %v2312, 7
    %v2314 = vsub.s32 %v2311, %v2313
    %v2315 = vrot.slane %v2306, %v2314
    %v2317 = vunpack.c.l.s4 1983009808
    %v2318 = vunpack.c.0.s8 %v2317
    %v2319 = vlaneseq
    %v2320 = vshrl.u32 %v2319, 7
    %v2321 = vsub.s32 %v2318, %v2320
    %v2322 = vrot.slane %v2308, %v2321
    %v2323 = vcombine.high %v2315, %v2315
    %v2324 = vcombine.high %v2322, %v2322
    %v2326 = vsel %vm75, %v2304, 0
    %v2329 = vsel %vm79, %v2315, 0
    %v2332 = vsel %vm79, %v2323, 0
    %v2335 = vsel %vm79, %v2322, 0
    %v2338 = vsel %vm79, %v2324, 0
    %2340 = vmatprep.subr.bf16.mxu0 0
    %2341 = vmatpush1.bf16.msra.mxu0 0
    %2342 = vmatprep.subr.bf16.mxu0 0
    %2343 = vmatpush1.bf16.msra.mxu0 0
    %2344 = vmatprep.subr.bf16.mxu0 0
    %2345 = vmatpush1.bf16.msra.mxu0 0
    %2346 = vmatprep.subr.bf16.mxu0 0
    %2347 = vmatpush1.bf16.msra.mxu0 0
    %2348 = vmatprep.subr.bf16.mxu0 0
    %2349 = vmatpush1.bf16.msra.mxu0 0
    %2350 = vmatprep.subr.bf16.mxu0 0
    %2351 = vmatpush1.bf16.msra.mxu0 0
    %2352 = vmatprep.subr.bf16.mxu0 0
    %2353 = vmatpush1.bf16.msra.mxu0 0
    %2354 = vmatprep.subr.bf16.mxu0 %v2332
    %2355 = vmatpush1.bf16.msra.mxu0 %v2329
    %2356 = vmatprep.subr.bf16.mxu0 0
    %2357 = vmatpush2.bf16.msra.mxu0 0
    %2358 = vmatprep.subr.bf16.mxu0 0
    %2359 = vmatpush2.bf16.msra.mxu0 0
    %2360 = vmatprep.subr.bf16.mxu0 0
    %2361 = vmatpush2.bf16.msra.mxu0 0
    %2362 = vmatprep.subr.bf16.mxu0 0
    %2363 = vmatpush2.bf16.msra.mxu0 0
    %2364 = vmatprep.subr.bf16.mxu0 0
    %2365 = vmatpush2.bf16.msra.mxu0 0
    %2366 = vmatprep.subr.bf16.mxu0 0
    %2367 = vmatpush2.bf16.msra.mxu0 0
    %2368 = vmatprep.subr.bf16.mxu0 0
    %2369 = vmatpush2.bf16.msra.mxu0 0
    %2370 = vmatprep.subr.bf16.mxu0 0
    %2371 = vmatpush2.bf16.msra.mxu0 0
    %2372 = vmatprep.mubr.bf16.mxu0 0
    %2373 = vmatmul.mubr.bf16.gmra.mxu0 %v2326
    %v2374 = vpop.f32.mrf.mxu0
    %v2375 = vadd.f32 0.0, %v2374
    %v2376 = vpop.f32.mrf.mxu0
    %v2377 = vadd.f32 0.0, %v2376
    %v2378 = vpop.f32.mrf.mxu0
    %v2379 = vpop.f32.mrf.mxu0
    %2380 = vdwg.mxu0
    %2381 = vmatprep.subr.bf16.mxu0 0
    %2382 = vmatpush1.bf16.msra.mxu0 0
    %2383 = vmatprep.subr.bf16.mxu0 0
    %2384 = vmatpush1.bf16.msra.mxu0 0
    %2385 = vmatprep.subr.bf16.mxu0 0
    %2386 = vmatpush1.bf16.msra.mxu0 0
    %2387 = vmatprep.subr.bf16.mxu0 0
    %2388 = vmatpush1.bf16.msra.mxu0 0
    %2389 = vmatprep.subr.bf16.mxu0 0
    %2390 = vmatpush1.bf16.msra.mxu0 0
    %2391 = vmatprep.subr.bf16.mxu0 0
    %2392 = vmatpush1.bf16.msra.mxu0 0
    %2393 = vmatprep.subr.bf16.mxu0 0
    %2394 = vmatpush1.bf16.msra.mxu0 0
    %2395 = vmatprep.subr.bf16.mxu0 %v2338
    %2396 = vmatpush1.bf16.msra.mxu0 %v2335
    %2397 = vmatprep.subr.bf16.mxu0 0
    %2398 = vmatpush2.bf16.msra.mxu0 0
    %2399 = vmatprep.subr.bf16.mxu0 0
    %2400 = vmatpush2.bf16.msra.mxu0 0
    %2401 = vmatprep.subr.bf16.mxu0 0
    %2402 = vmatpush2.bf16.msra.mxu0 0
    %2403 = vmatprep.subr.bf16.mxu0 0
    %2404 = vmatpush2.bf16.msra.mxu0 0
    %2405 = vmatprep.subr.bf16.mxu0 0
    %2406 = vmatpush2.bf16.msra.mxu0 0
    %2407 = vmatprep.subr.bf16.mxu0 0
    %2408 = vmatpush2.bf16.msra.mxu0 0
    %2409 = vmatprep.subr.bf16.mxu0 0
    %2410 = vmatpush2.bf16.msra.mxu0 0
    %2411 = vmatprep.subr.bf16.mxu0 0
    %2412 = vmatpush2.bf16.msra.mxu0 0
    %2413 = vmatprep.mubr.bf16.mxu0 0
    %2414 = vmatmul.mubr.bf16.gmra.mxu0 %v2326
    %v2415 = vpop.f32.mrf.mxu0
    %v2416 = vadd.f32 0.0, %v2415
    %v2417 = vpop.f32.mrf.mxu0
    %v2418 = vadd.f32 0.0, %v2417
    %v2419 = vpop.f32.mrf.mxu0
    %v2420 = vpop.f32.mrf.mxu0
    %2421 = vdwg.mxu0
    %v2422 = vand.u32 2147483647, %v2375
    %vm2423 = vcmp.le.f32.partialorder %v2422, 0.7853982
    %vm2424 = vcmp.lt.s32.totalorder %v2375, 0
    %v2425 = vand.u32 %v2375, 2139095040
    %v2426 = vshrl.u32 %v2425, 23
    %v2427 = vsub.s32 %v2426, 127
    %v2428 = vand.u32 2147483647, %v2375
    %v2429 = vand.u32 %v2428, 8388607
    %v2430 = vor.u32 %v2429, 8388608
    %v2431 = vsub.s32 0, %v2430
    %v2432 = vadd.s32 %v2427, 1
    %vm2433 = vcmp.gt.s32.totalorder %v2432, 0
    %v2434 = vsel %vm2433, %v2432, 0
    %v2435 = vshrl.u32 %v2434, 5
    %v2436 = vand.u32 %v2434, 31
    %v2437 = vsub.s32 32, %v2436
    %v2438 = vshrl.u32 683565275, %v2437
    %v2439 = vshll.u32 683565275, %v2436
    %v2440 = vshrl.u32 2475754826, %v2437
    %v2441 = vor.u32 %v2439, %v2440
    %v2442 = vshll.u32 2475754826, %v2436
    %v2443 = vshrl.u32 2131351028, %v2437
    %v2444 = vor.u32 %v2442, %v2443
    %v2445 = vshll.u32 2131351028, %v2436
    %v2446 = vshrl.u32 2102212464, %v2437
    %v2447 = vor.u32 %v2445, %v2446
    %v2448 = vshll.u32 2102212464, %v2436
    %v2449 = vshrl.u32 920167782, %v2437
    %v2450 = vor.u32 %v2448, %v2449
    %v2451 = vshll.u32 920167782, %v2436
    %v2452 = vshrl.u32 1326507024, %v2437
    %v2453 = vor.u32 %v2451, %v2452
    %vm2454 = vcmp.lt.s32.totalorder %v2435, 1
    %vm2455 = vcmp.lt.s32.totalorder %v2435, 2
    %vm2456 = vcmp.lt.s32.totalorder %v2435, 3
    %vm2457 = vcmp.lt.s32.totalorder %v2435, 4
    %v2458 = vsel %vm2454, %v2438, %v2441
    %v2459 = vsel %vm2457, %v2447, 2102212464
    %v2460 = vsel %vm2456, %v2444, %v2459
    %v2461 = vsel %vm2455, %v2458, %v2460
    %v2462 = vsel %vm2454, %v2441, %v2444
    %v2463 = vsel %vm2457, %v2450, 920167782
    %v2464 = vsel %vm2456, %v2447, %v2463
    %v2465 = vsel %vm2455, %v2462, %v2464
    %v2466 = vsel %vm2454, %v2444, %v2447
    %v2467 = vsel %vm2457, %v2453, 1326507024
    %v2468 = vsel %vm2456, %v2450, %v2467
    %v2469 = vsel %vm2455, %v2466, %v2468
    %v2470 = vshll.u32 %v2430, 8
    %v2471 = vmul.u32.u64.compose %v2470, %v2469
    %v2472 = vextract.low.u32 %v2471
    %v2473 = vextract.high.u32 %v2471
    %v2474 = vmul.u32.u64.compose %v2470, %v2465
    %v2475 = vextract.low.u32 %v2474
    %v2476 = vextract.high.u32 %v2474
    %v2477 = vmul.u32 %v2470, %v2461
    %v2478 = vadd.s32 %v2473, %v2475
    %vm2479 = vc.u32 %v2473, %v2475
    %v2480 = vadd.s32 %v2476, 1
    %v2481 = vsel %vm2479, %v2480, %v2476
    %v2482 = vadd.s32 %v2477, %v2481
    %v2483 = vadd.s32 %v2482, 536870912
    %v2484 = vshrl.u32 %v2483, 30
    %v2485 = vshll.u32 %v2484, 30
    %v2486 = vsub.s32 %v2482, %v2485
    %vm2487 = vcmp.lt.s32.totalorder %v2486, 0
    %v2488 = vsub.s32 0, %v2486
    %v2489 = vsel %vm2487, %v2488, %v2486
    %v2490 = vclz %v2489
    %v2491 = vsub.s32 %v2490, 2
    %vm2492 = vcmp.gt.s32.totalorder 0, %v2491
    %v2493 = vsel %vm2492, 0, %v2491
    %v2494 = vsub.s32 32, %v2493
    %v2495 = vshll.u32 %v2486, %v2493
    %v2496 = vshrl.u32 %v2478, %v2494
    %v2497 = vor.u32 %v2495, %v2496
    %v2498 = vsub.s32 4294967266, %v2493
    %v2499 = vadd.s32 %v2498, 127
    %v2500 = vshll.u32 %v2499, 23
    %v2501 = vor.u32 4788187, %v2500
    %v2502 = vand.u32 2147483647, %v2501
    %v2504 = vcvt.s32.f32 %v2497
    %v2505 = vmul.f32 %v2504, %v2502
    %v2506 = vxor.u32 %v2505, 2147483648
    %v2507 = vsel %vm2424, %v2506, %v2505
    %v2508 = vsub.s32 4, %v2484
    %v2509 = vsel %vm2424, %v2508, %v2484
    %v2510 = vsel %vm2423, %v2375, %v2507
    %v2511 = vsel %vm2423, 0, %v2509
    %v2512 = vcosq.f32.pop %v2510
    %v2513 = vsinq.f32.pop %v2510
    %vm2514 = vweird.f32 %v2375
    %v2515 = vand.u32 %v2511, 3
    %vm2516 = vcmp.lt.s32.totalorder %v2515, 2
    %vm2517 = vcmp.eq.s32.totalorder %v2515, 0
    %v2518 = vxor.u32 %v2513, 2147483648
    %v2519 = vsel %vm2517, %v2512, %v2518
    %vm2520 = vcmp.eq.s32.totalorder %v2515, 2
    %v2521 = vxor.u32 %v2512, 2147483648
    %v2522 = vsel %vm2520, %v2521, %v2513
    %v2523 = vsel %vm2516, %v2519, %v2522
    %v2524 = vsel %vm2514, nan, %v2523
    %v2525 = vand.u32 2147483647, %v2377
    %vm2526 = vcmp.le.f32.partialorder %v2525, 0.7853982
    %vm2527 = vcmp.lt.s32.totalorder %v2377, 0
    %v2528 = vand.u32 %v2377, 2139095040
    %v2529 = vshrl.u32 %v2528, 23
    %v2530 = vsub.s32 %v2529, 127
    %v2531 = vand.u32 2147483647, %v2377
    %v2532 = vand.u32 %v2531, 8388607
    %v2533 = vor.u32 %v2532, 8388608
    %v2534 = vsub.s32 0, %v2533
    %v2535 = vadd.s32 %v2530, 1
    %vm2536 = vcmp.gt.s32.totalorder %v2535, 0
    %v2537 = vsel %vm2536, %v2535, 0
    %v2538 = vshrl.u32 %v2537, 5
    %v2539 = vand.u32 %v2537, 31
    %v2540 = vsub.s32 32, %v2539
    %v2541 = vshrl.u32 683565275, %v2540
    %v2542 = vshll.u32 683565275, %v2539
    %v2543 = vshrl.u32 2475754826, %v2540
    %v2544 = vor.u32 %v2542, %v2543
    %v2545 = vshll.u32 2475754826, %v2539
    %v2546 = vshrl.u32 2131351028, %v2540
    %v2547 = vor.u32 %v2545, %v2546
    %v2548 = vshll.u32 2131351028, %v2539
    %v2549 = vshrl.u32 2102212464, %v2540
    %v2550 = vor.u32 %v2548, %v2549
    %v2551 = vshll.u32 2102212464, %v2539
    %v2552 = vshrl.u32 920167782, %v2540
    %v2553 = vor.u32 %v2551, %v2552
    %v2554 = vshll.u32 920167782, %v2539
    %v2555 = vshrl.u32 1326507024, %v2540
    %v2556 = vor.u32 %v2554, %v2555
    %vm2557 = vcmp.lt.s32.totalorder %v2538, 1
    %vm2558 = vcmp.lt.s32.totalorder %v2538, 2
    %vm2559 = vcmp.lt.s32.totalorder %v2538, 3
    %vm2560 = vcmp.lt.s32.totalorder %v2538, 4
    %v2561 = vsel %vm2557, %v2541, %v2544
    %v2562 = vsel %vm2560, %v2550, 2102212464
    %v2563 = vsel %vm2559, %v2547, %v2562
    %v2564 = vsel %vm2558, %v2561, %v2563
    %v2565 = vsel %vm2557, %v2544, %v2547
    %v2566 = vsel %vm2560, %v2553, 920167782
    %v2567 = vsel %vm2559, %v2550, %v2566
    %v2568 = vsel %vm2558, %v2565, %v2567
    %v2569 = vsel %vm2557, %v2547, %v2550
    %v2570 = vsel %vm2560, %v2556, 1326507024
    %v2571 = vsel %vm2559, %v2553, %v2570
    %v2572 = vsel %vm2558, %v2569, %v2571
    %v2573 = vshll.u32 %v2533, 8
    %v2574 = vmul.u32.u64.compose %v2573, %v2572
    %v2575 = vextract.low.u32 %v2574
    %v2576 = vextract.high.u32 %v2574
    %v2577 = vmul.u32.u64.compose %v2573, %v2568
    %v2578 = vextract.low.u32 %v2577
    %v2579 = vextract.high.u32 %v2577
    %v2580 = vmul.u32 %v2573, %v2564
    %v2581 = vadd.s32 %v2576, %v2578
    %vm2582 = vc.u32 %v2576, %v2578
    %v2583 = vadd.s32 %v2579, 1
    %v2584 = vsel %vm2582, %v2583, %v2579
    %v2585 = vadd.s32 %v2580, %v2584
    %v2586 = vadd.s32 %v2585, 536870912
    %v2587 = vshrl.u32 %v2586, 30
    %v2588 = vshll.u32 %v2587, 30
    %v2589 = vsub.s32 %v2585, %v2588
    %vm2590 = vcmp.lt.s32.totalorder %v2589, 0
    %v2591 = vsub.s32 0, %v2589
    %v2592 = vsel %vm2590, %v2591, %v2589
    %v2593 = vclz %v2592
    %v2594 = vsub.s32 %v2593, 2
    %vm2595 = vcmp.gt.s32.totalorder 0, %v2594
    %v2596 = vsel %vm2595, 0, %v2594
    %v2597 = vsub.s32 32, %v2596
    %v2598 = vshll.u32 %v2589, %v2596
    %v2599 = vshrl.u32 %v2581, %v2597
    %v2600 = vor.u32 %v2598, %v2599
    %v2601 = vsub.s32 4294967266, %v2596
    %v2602 = vadd.s32 %v2601, 127
    %v2603 = vshll.u32 %v2602, 23
    %v2604 = vor.u32 4788187, %v2603
    %v2605 = vand.u32 2147483647, %v2604
    %v2607 = vcvt.s32.f32 %v2600
    %v2608 = vmul.f32 %v2607, %v2605
    %v2609 = vxor.u32 %v2608, 2147483648
    %v2610 = vsel %vm2527, %v2609, %v2608
    %v2611 = vsub.s32 4, %v2587
    %v2612 = vsel %vm2527, %v2611, %v2587
    %v2613 = vsel %vm2526, %v2377, %v2610
    %v2614 = vsel %vm2526, 0, %v2612
    %v2615 = vcosq.f32.pop %v2613
    %v2616 = vsinq.f32.pop %v2613
    %vm2617 = vweird.f32 %v2377
    %v2618 = vand.u32 %v2614, 3
    %vm2619 = vcmp.lt.s32.totalorder %v2618, 2
    %vm2620 = vcmp.eq.s32.totalorder %v2618, 0
    %v2621 = vxor.u32 %v2616, 2147483648
    %v2622 = vsel %vm2620, %v2615, %v2621
    %vm2623 = vcmp.eq.s32.totalorder %v2618, 2
    %v2624 = vxor.u32 %v2615, 2147483648
    %v2625 = vsel %vm2623, %v2624, %v2616
    %v2626 = vsel %vm2619, %v2622, %v2625
    %v2627 = vsel %vm2617, nan, %v2626
    %v2628 = vand.u32 2147483647, %v2416
    %vm2629 = vcmp.le.f32.partialorder %v2628, 0.7853982
    %vm2630 = vcmp.lt.s32.totalorder %v2416, 0
    %v2631 = vand.u32 %v2416, 2139095040
    %v2632 = vshrl.u32 %v2631, 23
    %v2633 = vsub.s32 %v2632, 127
    %v2634 = vand.u32 2147483647, %v2416
    %v2635 = vand.u32 %v2634, 8388607
    %v2636 = vor.u32 %v2635, 8388608
    %v2637 = vsub.s32 0, %v2636
    %v2638 = vadd.s32 %v2633, 1
    %vm2639 = vcmp.gt.s32.totalorder %v2638, 0
    %v2640 = vsel %vm2639, %v2638, 0
    %v2641 = vshrl.u32 %v2640, 5
    %v2642 = vand.u32 %v2640, 31
    %v2643 = vsub.s32 32, %v2642
    %v2644 = vshrl.u32 683565275, %v2643
    %v2645 = vshll.u32 683565275, %v2642
    %v2646 = vshrl.u32 2475754826, %v2643
    %v2647 = vor.u32 %v2645, %v2646
    %v2648 = vshll.u32 2475754826, %v2642
    %v2649 = vshrl.u32 2131351028, %v2643
    %v2650 = vor.u32 %v2648, %v2649
    %v2651 = vshll.u32 2131351028, %v2642
    %v2652 = vshrl.u32 2102212464, %v2643
    %v2653 = vor.u32 %v2651, %v2652
    %v2654 = vshll.u32 2102212464, %v2642
    %v2655 = vshrl.u32 920167782, %v2643
    %v2656 = vor.u32 %v2654, %v2655
    %v2657 = vshll.u32 920167782, %v2642
    %v2658 = vshrl.u32 1326507024, %v2643
    %v2659 = vor.u32 %v2657, %v2658
    %vm2660 = vcmp.lt.s32.totalorder %v2641, 1
    %vm2661 = vcmp.lt.s32.totalorder %v2641, 2
    %vm2662 = vcmp.lt.s32.totalorder %v2641, 3
    %vm2663 = vcmp.lt.s32.totalorder %v2641, 4
    %v2664 = vsel %vm2660, %v2644, %v2647
    %v2665 = vsel %vm2663, %v2653, 2102212464
    %v2666 = vsel %vm2662, %v2650, %v2665
    %v2667 = vsel %vm2661, %v2664, %v2666
    %v2668 = vsel %vm2660, %v2647, %v2650
    %v2669 = vsel %vm2663, %v2656, 920167782
    %v2670 = vsel %vm2662, %v2653, %v2669
    %v2671 = vsel %vm2661, %v2668, %v2670
    %v2672 = vsel %vm2660, %v2650, %v2653
    %v2673 = vsel %vm2663, %v2659, 1326507024
    %v2674 = vsel %vm2662, %v2656, %v2673
    %v2675 = vsel %vm2661, %v2672, %v2674
    %v2676 = vshll.u32 %v2636, 8
    %v2677 = vmul.u32.u64.compose %v2676, %v2675
    %v2678 = vextract.low.u32 %v2677
    %v2679 = vextract.high.u32 %v2677
    %v2680 = vmul.u32.u64.compose %v2676, %v2671
    %v2681 = vextract.low.u32 %v2680
    %v2682 = vextract.high.u32 %v2680
    %v2683 = vmul.u32 %v2676, %v2667
    %v2684 = vadd.s32 %v2679, %v2681
    %vm2685 = vc.u32 %v2679, %v2681
    %v2686 = vadd.s32 %v2682, 1
    %v2687 = vsel %vm2685, %v2686, %v2682
    %v2688 = vadd.s32 %v2683, %v2687
    %v2689 = vadd.s32 %v2688, 536870912
    %v2690 = vshrl.u32 %v2689, 30
    %v2691 = vshll.u32 %v2690, 30
    %v2692 = vsub.s32 %v2688, %v2691
    %vm2693 = vcmp.lt.s32.totalorder %v2692, 0
    %v2694 = vsub.s32 0, %v2692
    %v2695 = vsel %vm2693, %v2694, %v2692
    %v2696 = vclz %v2695
    %v2697 = vsub.s32 %v2696, 2
    %vm2698 = vcmp.gt.s32.totalorder 0, %v2697
    %v2699 = vsel %vm2698, 0, %v2697
    %v2700 = vsub.s32 32, %v2699
    %v2701 = vshll.u32 %v2692, %v2699
    %v2702 = vshrl.u32 %v2684, %v2700
    %v2703 = vor.u32 %v2701, %v2702
    %v2704 = vsub.s32 4294967266, %v2699
    %v2705 = vadd.s32 %v2704, 127
    %v2706 = vshll.u32 %v2705, 23
    %v2707 = vor.u32 4788187, %v2706
    %v2708 = vand.u32 2147483647, %v2707
    %v2710 = vcvt.s32.f32 %v2703
    %v2711 = vmul.f32 %v2710, %v2708
    %v2712 = vxor.u32 %v2711, 2147483648
    %v2713 = vsel %vm2630, %v2712, %v2711
    %v2714 = vsub.s32 4, %v2690
    %v2715 = vsel %vm2630, %v2714, %v2690
    %v2716 = vsel %vm2629, %v2416, %v2713
    %v2717 = vsel %vm2629, 0, %v2715
    %v2718 = vcosq.f32.pop %v2716
    %v2719 = vsinq.f32.pop %v2716
    %vm2720 = vweird.f32 %v2416
    %v2721 = vand.u32 %v2717, 3
    %vm2722 = vcmp.lt.s32.totalorder %v2721, 2
    %vm2723 = vcmp.eq.s32.totalorder %v2721, 0
    %v2724 = vxor.u32 %v2719, 2147483648
    %v2725 = vsel %vm2723, %v2718, %v2724
    %vm2726 = vcmp.eq.s32.totalorder %v2721, 2
    %v2727 = vxor.u32 %v2718, 2147483648
    %v2728 = vsel %vm2726, %v2727, %v2719
    %v2729 = vsel %vm2722, %v2725, %v2728
    %v2730 = vsel %vm2720, nan, %v2729
    %v2731 = vand.u32 2147483647, %v2418
    %vm2732 = vcmp.le.f32.partialorder %v2731, 0.7853982
    %vm2733 = vcmp.lt.s32.totalorder %v2418, 0
    %v2734 = vand.u32 %v2418, 2139095040
    %v2735 = vshrl.u32 %v2734, 23
    %v2736 = vsub.s32 %v2735, 127
    %v2737 = vand.u32 2147483647, %v2418
    %v2738 = vand.u32 %v2737, 8388607
    %v2739 = vor.u32 %v2738, 8388608
    %v2740 = vsub.s32 0, %v2739
    %v2741 = vadd.s32 %v2736, 1
    %vm2742 = vcmp.gt.s32.totalorder %v2741, 0
    %v2743 = vsel %vm2742, %v2741, 0
    %v2744 = vshrl.u32 %v2743, 5
    %v2745 = vand.u32 %v2743, 31
    %v2746 = vsub.s32 32, %v2745
    %v2747 = vshrl.u32 683565275, %v2746
    %v2748 = vshll.u32 683565275, %v2745
    %v2749 = vshrl.u32 2475754826, %v2746
    %v2750 = vor.u32 %v2748, %v2749
    %v2751 = vshll.u32 2475754826, %v2745
    %v2752 = vshrl.u32 2131351028, %v2746
    %v2753 = vor.u32 %v2751, %v2752
    %v2754 = vshll.u32 2131351028, %v2745
    %v2755 = vshrl.u32 2102212464, %v2746
    %v2756 = vor.u32 %v2754, %v2755
    %v2757 = vshll.u32 2102212464, %v2745
    %v2758 = vshrl.u32 920167782, %v2746
    %v2759 = vor.u32 %v2757, %v2758
    %v2760 = vshll.u32 920167782, %v2745
    %v2761 = vshrl.u32 1326507024, %v2746
    %v2762 = vor.u32 %v2760, %v2761
    %vm2763 = vcmp.lt.s32.totalorder %v2744, 1
    %vm2764 = vcmp.lt.s32.totalorder %v2744, 2
    %vm2765 = vcmp.lt.s32.totalorder %v2744, 3
    %vm2766 = vcmp.lt.s32.totalorder %v2744, 4
    %v2767 = vsel %vm2763, %v2747, %v2750
    %v2768 = vsel %vm2766, %v2756, 2102212464
    %v2769 = vsel %vm2765, %v2753, %v2768
    %v2770 = vsel %vm2764, %v2767, %v2769
    %v2771 = vsel %vm2763, %v2750, %v2753
    %v2772 = vsel %vm2766, %v2759, 920167782
    %v2773 = vsel %vm2765, %v2756, %v2772
    %v2774 = vsel %vm2764, %v2771, %v2773
    %v2775 = vsel %vm2763, %v2753, %v2756
    %v2776 = vsel %vm2766, %v2762, 1326507024
    %v2777 = vsel %vm2765, %v2759, %v2776
    %v2778 = vsel %vm2764, %v2775, %v2777
    %v2779 = vshll.u32 %v2739, 8
    %v2780 = vmul.u32.u64.compose %v2779, %v2778
    %v2781 = vextract.low.u32 %v2780
    %v2782 = vextract.high.u32 %v2780
    %v2783 = vmul.u32.u64.compose %v2779, %v2774
    %v2784 = vextract.low.u32 %v2783
    %v2785 = vextract.high.u32 %v2783
    %v2786 = vmul.u32 %v2779, %v2770
    %v2787 = vadd.s32 %v2782, %v2784
    %vm2788 = vc.u32 %v2782, %v2784
    %v2789 = vadd.s32 %v2785, 1
    %v2790 = vsel %vm2788, %v2789, %v2785
    %v2791 = vadd.s32 %v2786, %v2790
    %v2792 = vadd.s32 %v2791, 536870912
    %v2793 = vshrl.u32 %v2792, 30
    %v2794 = vshll.u32 %v2793, 30
    %v2795 = vsub.s32 %v2791, %v2794
    %vm2796 = vcmp.lt.s32.totalorder %v2795, 0
    %v2797 = vsub.s32 0, %v2795
    %v2798 = vsel %vm2796, %v2797, %v2795
    %v2799 = vclz %v2798
    %v2800 = vsub.s32 %v2799, 2
    %vm2801 = vcmp.gt.s32.totalorder 0, %v2800
    %v2802 = vsel %vm2801, 0, %v2800
    %v2803 = vsub.s32 32, %v2802
    %v2804 = vshll.u32 %v2795, %v2802
    %v2805 = vshrl.u32 %v2787, %v2803
    %v2806 = vor.u32 %v2804, %v2805
    %v2807 = vsub.s32 4294967266, %v2802
    %v2808 = vadd.s32 %v2807, 127
    %v2809 = vshll.u32 %v2808, 23
    %v2810 = vor.u32 4788187, %v2809
    %v2811 = vand.u32 2147483647, %v2810
    %v2813 = vcvt.s32.f32 %v2806
    %v2814 = vmul.f32 %v2813, %v2811
    %v2815 = vxor.u32 %v2814, 2147483648
    %v2816 = vsel %vm2733, %v2815, %v2814
    %v2817 = vsub.s32 4, %v2793
    %v2818 = vsel %vm2733, %v2817, %v2793
    %v2819 = vsel %vm2732, %v2418, %v2816
    %v2820 = vsel %vm2732, 0, %v2818
    %v2821 = vcosq.f32.pop %v2819
    %v2822 = vsinq.f32.pop %v2819
    %vm2823 = vweird.f32 %v2418
    %v2824 = vand.u32 %v2820, 3
    %vm2825 = vcmp.lt.s32.totalorder %v2824, 2
    %vm2826 = vcmp.eq.s32.totalorder %v2824, 0
    %v2827 = vxor.u32 %v2822, 2147483648
    %v2828 = vsel %vm2826, %v2821, %v2827
    %vm2829 = vcmp.eq.s32.totalorder %v2824, 2
    %v2830 = vxor.u32 %v2821, 2147483648
    %v2831 = vsel %vm2829, %v2830, %v2822
    %v2832 = vsel %vm2825, %v2828, %v2831
    %v2833 = vsel %vm2823, nan, %v2832
    %v2834 = vmul.f32 %v2524, 1.5414666
    %v2835 = vmul.f32 %v2627, 1.5414666
    %v2836 = vmul.f32 %v2730, 1.5414666
    %v2837 = vmul.f32 %v2833, 1.5414666
    %v2838 = vsub.f32 1.5940298, %v2834
    %v2839 = vsub.f32 1.5940298, %v2835
    %v2840 = vsub.f32 1.5940298, %v2836
    %v2841 = vsub.f32 1.5940298, %v2837
    %v2842 = vrcp.pop %v2838
    %v2843 = vrcp.pop %v2839
    %v2844 = vrcp.pop %v2840
    %v2845 = vrcp.pop %v2841
    %v2846 = vmul.f32 %v2842, 0.05090673
    %v2847 = vmul.f32 %v2843, 0.05090673
    %v2848 = vmul.f32 %v2844, 0.05090673
    %v2849 = vmul.f32 %v2845, 0.05090673
    %v2850 = vsub.f32 1.0, %v2846
    %v2851 = vsub.f32 1.0, %v2847
    %v2852 = vsub.f32 1.0, %v2848
    %v2853 = vsub.f32 1.0, %v2849
    %s2854 = sadd.s32 %s606, 4
    %s2855 = sld [smem:[#allocation3 + %s2854]]
    %v2856 = vstv %s2855
    %v2857 = vmul.f32 %v2856, %v2850
    %v2858 = vmul.f32 %v2856, %v2851
    %v2859 = vmul.f32 %v2856, %v2852
    %v2860 = vmul.f32 %v2856, %v2853
    %v2861 = vadd.f32 %v2299, %v2857
    %v2862 = vadd.f32 %v2300, %v2858
    %v2863 = vadd.f32 %v2301, %v2859
    %v2864 = vadd.f32 %v2302, %v2860
    %s2865 = scalar_lea.vmem %s2, 20
    %v2866 = vld [vmem:[%s2865] sm:$0xf]
    %s2867 = scalar_lea.vmem [#allocation7], 40
    %v2868 = vld [vmem:[%s2867] sm:$0xff]
    %v2870 = vcombine.high %v2868, %v2868
    %v2872 = vunpack.c.l.s4 1983009808
    %v2873 = vunpack.c.0.s8 %v2872
    %v2874 = vlaneseq
    %v2875 = vshrl.u32 %v2874, 7
    %v2876 = vsub.s32 %v2873, %v2875
    %v2877 = vrot.slane %v2868, %v2876
    %v2879 = vunpack.c.l.s4 1983009808
    %v2880 = vunpack.c.0.s8 %v2879
    %v2881 = vlaneseq
    %v2882 = vshrl.u32 %v2881, 7
    %v2883 = vsub.s32 %v2880, %v2882
    %v2884 = vrot.slane %v2870, %v2883
    %v2885 = vcombine.high %v2877, %v2877
    %v2886 = vcombine.high %v2884, %v2884
    %v2888 = vsel %vm75, %v2866, 0
    %v2891 = vsel %vm79, %v2877, 0
    %v2894 = vsel %vm79, %v2885, 0
    %v2897 = vsel %vm79, %v2884, 0
    %v2900 = vsel %vm79, %v2886, 0
    %2902 = vmatprep.subr.bf16.mxu0 0
    %2903 = vmatpush1.bf16.msra.mxu0 0
    %2904 = vmatprep.subr.bf16.mxu0 0
    %2905 = vmatpush1.bf16.msra.mxu0 0
    %2906 = vmatprep.subr.bf16.mxu0 0
    %2907 = vmatpush1.bf16.msra.mxu0 0
    %2908 = vmatprep.subr.bf16.mxu0 0
    %2909 = vmatpush1.bf16.msra.mxu0 0
    %2910 = vmatprep.subr.bf16.mxu0 0
    %2911 = vmatpush1.bf16.msra.mxu0 0
    %2912 = vmatprep.subr.bf16.mxu0 0
    %2913 = vmatpush1.bf16.msra.mxu0 0
    %2914 = vmatprep.subr.bf16.mxu0 0
    %2915 = vmatpush1.bf16.msra.mxu0 0
    %2916 = vmatprep.subr.bf16.mxu0 %v2894
    %2917 = vmatpush1.bf16.msra.mxu0 %v2891
    %2918 = vmatprep.subr.bf16.mxu0 0
    %2919 = vmatpush2.bf16.msra.mxu0 0
    %2920 = vmatprep.subr.bf16.mxu0 0
    %2921 = vmatpush2.bf16.msra.mxu0 0
    %2922 = vmatprep.subr.bf16.mxu0 0
    %2923 = vmatpush2.bf16.msra.mxu0 0
    %2924 = vmatprep.subr.bf16.mxu0 0
    %2925 = vmatpush2.bf16.msra.mxu0 0
    %2926 = vmatprep.subr.bf16.mxu0 0
    %2927 = vmatpush2.bf16.msra.mxu0 0
    %2928 = vmatprep.subr.bf16.mxu0 0
    %2929 = vmatpush2.bf16.msra.mxu0 0
    %2930 = vmatprep.subr.bf16.mxu0 0
    %2931 = vmatpush2.bf16.msra.mxu0 0
    %2932 = vmatprep.subr.bf16.mxu0 0
    %2933 = vmatpush2.bf16.msra.mxu0 0
    %2934 = vmatprep.mubr.bf16.mxu0 0
    %2935 = vmatmul.mubr.bf16.gmra.mxu0 %v2888
    %v2936 = vpop.f32.mrf.mxu0
    %v2937 = vadd.f32 0.0, %v2936
    %v2938 = vpop.f32.mrf.mxu0
    %v2939 = vadd.f32 0.0, %v2938
    %v2940 = vpop.f32.mrf.mxu0
    %v2941 = vpop.f32.mrf.mxu0
    %2942 = vdwg.mxu0
    %2943 = vmatprep.subr.bf16.mxu0 0
    %2944 = vmatpush1.bf16.msra.mxu0 0
    %2945 = vmatprep.subr.bf16.mxu0 0
    %2946 = vmatpush1.bf16.msra.mxu0 0
    %2947 = vmatprep.subr.bf16.mxu0 0
    %2948 = vmatpush1.bf16.msra.mxu0 0
    %2949 = vmatprep.subr.bf16.mxu0 0
    %2950 = vmatpush1.bf16.msra.mxu0 0
    %2951 = vmatprep.subr.bf16.mxu0 0
    %2952 = vmatpush1.bf16.msra.mxu0 0
    %2953 = vmatprep.subr.bf16.mxu0 0
    %2954 = vmatpush1.bf16.msra.mxu0 0
    %2955 = vmatprep.subr.bf16.mxu0 0
    %2956 = vmatpush1.bf16.msra.mxu0 0
    %2957 = vmatprep.subr.bf16.mxu0 %v2900
    %2958 = vmatpush1.bf16.msra.mxu0 %v2897
    %2959 = vmatprep.subr.bf16.mxu0 0
    %2960 = vmatpush2.bf16.msra.mxu0 0
    %2961 = vmatprep.subr.bf16.mxu0 0
    %2962 = vmatpush2.bf16.msra.mxu0 0
    %2963 = vmatprep.subr.bf16.mxu0 0
    %2964 = vmatpush2.bf16.msra.mxu0 0
    %2965 = vmatprep.subr.bf16.mxu0 0
    %2966 = vmatpush2.bf16.msra.mxu0 0
    %2967 = vmatprep.subr.bf16.mxu0 0
    %2968 = vmatpush2.bf16.msra.mxu0 0
    %2969 = vmatprep.subr.bf16.mxu0 0
    %2970 = vmatpush2.bf16.msra.mxu0 0
    %2971 = vmatprep.subr.bf16.mxu0 0
    %2972 = vmatpush2.bf16.msra.mxu0 0
    %2973 = vmatprep.subr.bf16.mxu0 0
    %2974 = vmatpush2.bf16.msra.mxu0 0
    %2975 = vmatprep.mubr.bf16.mxu0 0
    %2976 = vmatmul.mubr.bf16.gmra.mxu0 %v2888
    %v2977 = vpop.f32.mrf.mxu0
    %v2978 = vadd.f32 0.0, %v2977
    %v2979 = vpop.f32.mrf.mxu0
    %v2980 = vadd.f32 0.0, %v2979
    %v2981 = vpop.f32.mrf.mxu0
    %v2982 = vpop.f32.mrf.mxu0
    %2983 = vdwg.mxu0
    %v2984 = vand.u32 2147483647, %v2937
    %vm2985 = vcmp.le.f32.partialorder %v2984, 0.7853982
    %vm2986 = vcmp.lt.s32.totalorder %v2937, 0
    %v2987 = vand.u32 %v2937, 2139095040
    %v2988 = vshrl.u32 %v2987, 23
    %v2989 = vsub.s32 %v2988, 127
    %v2990 = vand.u32 2147483647, %v2937
    %v2991 = vand.u32 %v2990, 8388607
    %v2992 = vor.u32 %v2991, 8388608
    %v2993 = vsub.s32 0, %v2992
    %v2994 = vadd.s32 %v2989, 1
    %vm2995 = vcmp.gt.s32.totalorder %v2994, 0
    %v2996 = vsel %vm2995, %v2994, 0
    %v2997 = vshrl.u32 %v2996, 5
    %v2998 = vand.u32 %v2996, 31
    %v2999 = vsub.s32 32, %v2998
    %v3000 = vshrl.u32 683565275, %v2999
    %v3001 = vshll.u32 683565275, %v2998
    %v3002 = vshrl.u32 2475754826, %v2999
    %v3003 = vor.u32 %v3001, %v3002
    %v3004 = vshll.u32 2475754826, %v2998
    %v3005 = vshrl.u32 2131351028, %v2999
    %v3006 = vor.u32 %v3004, %v3005
    %v3007 = vshll.u32 2131351028, %v2998
    %v3008 = vshrl.u32 2102212464, %v2999
    %v3009 = vor.u32 %v3007, %v3008
    %v3010 = vshll.u32 2102212464, %v2998
    %v3011 = vshrl.u32 920167782, %v2999
    %v3012 = vor.u32 %v3010, %v3011
    %v3013 = vshll.u32 920167782, %v2998
    %v3014 = vshrl.u32 1326507024, %v2999
    %v3015 = vor.u32 %v3013, %v3014
    %vm3016 = vcmp.lt.s32.totalorder %v2997, 1
    %vm3017 = vcmp.lt.s32.totalorder %v2997, 2
    %vm3018 = vcmp.lt.s32.totalorder %v2997, 3
    %vm3019 = vcmp.lt.s32.totalorder %v2997, 4
    %v3020 = vsel %vm3016, %v3000, %v3003
    %v3021 = vsel %vm3019, %v3009, 2102212464
    %v3022 = vsel %vm3018, %v3006, %v3021
    %v3023 = vsel %vm3017, %v3020, %v3022
    %v3024 = vsel %vm3016, %v3003, %v3006
    %v3025 = vsel %vm3019, %v3012, 920167782
    %v3026 = vsel %vm3018, %v3009, %v3025
    %v3027 = vsel %vm3017, %v3024, %v3026
    %v3028 = vsel %vm3016, %v3006, %v3009
    %v3029 = vsel %vm3019, %v3015, 1326507024
    %v3030 = vsel %vm3018, %v3012, %v3029
    %v3031 = vsel %vm3017, %v3028, %v3030
    %v3032 = vshll.u32 %v2992, 8
    %v3033 = vmul.u32.u64.compose %v3032, %v3031
    %v3034 = vextract.low.u32 %v3033
    %v3035 = vextract.high.u32 %v3033
    %v3036 = vmul.u32.u64.compose %v3032, %v3027
    %v3037 = vextract.low.u32 %v3036
    %v3038 = vextract.high.u32 %v3036
    %v3039 = vmul.u32 %v3032, %v3023
    %v3040 = vadd.s32 %v3035, %v3037
    %vm3041 = vc.u32 %v3035, %v3037
    %v3042 = vadd.s32 %v3038, 1
    %v3043 = vsel %vm3041, %v3042, %v3038
    %v3044 = vadd.s32 %v3039, %v3043
    %v3045 = vadd.s32 %v3044, 536870912
    %v3046 = vshrl.u32 %v3045, 30
    %v3047 = vshll.u32 %v3046, 30
    %v3048 = vsub.s32 %v3044, %v3047
    %vm3049 = vcmp.lt.s32.totalorder %v3048, 0
    %v3050 = vsub.s32 0, %v3048
    %v3051 = vsel %vm3049, %v3050, %v3048
    %v3052 = vclz %v3051
    %v3053 = vsub.s32 %v3052, 2
    %vm3054 = vcmp.gt.s32.totalorder 0, %v3053
    %v3055 = vsel %vm3054, 0, %v3053
    %v3056 = vsub.s32 32, %v3055
    %v3057 = vshll.u32 %v3048, %v3055
    %v3058 = vshrl.u32 %v3040, %v3056
    %v3059 = vor.u32 %v3057, %v3058
    %v3060 = vsub.s32 4294967266, %v3055
    %v3061 = vadd.s32 %v3060, 127
    %v3062 = vshll.u32 %v3061, 23
    %v3063 = vor.u32 4788187, %v3062
    %v3064 = vand.u32 2147483647, %v3063
    %v3066 = vcvt.s32.f32 %v3059
    %v3067 = vmul.f32 %v3066, %v3064
    %v3068 = vxor.u32 %v3067, 2147483648
    %v3069 = vsel %vm2986, %v3068, %v3067
    %v3070 = vsub.s32 4, %v3046
    %v3071 = vsel %vm2986, %v3070, %v3046
    %v3072 = vsel %vm2985, %v2937, %v3069
    %v3073 = vsel %vm2985, 0, %v3071
    %v3074 = vcosq.f32.pop %v3072
    %v3075 = vsinq.f32.pop %v3072
    %vm3076 = vweird.f32 %v2937
    %v3077 = vand.u32 %v3073, 3
    %vm3078 = vcmp.lt.s32.totalorder %v3077, 2
    %vm3079 = vcmp.eq.s32.totalorder %v3077, 0
    %v3080 = vxor.u32 %v3075, 2147483648
    %v3081 = vsel %vm3079, %v3074, %v3080
    %vm3082 = vcmp.eq.s32.totalorder %v3077, 2
    %v3083 = vxor.u32 %v3074, 2147483648
    %v3084 = vsel %vm3082, %v3083, %v3075
    %v3085 = vsel %vm3078, %v3081, %v3084
    %v3086 = vsel %vm3076, nan, %v3085
    %v3087 = vand.u32 2147483647, %v2939
    %vm3088 = vcmp.le.f32.partialorder %v3087, 0.7853982
    %vm3089 = vcmp.lt.s32.totalorder %v2939, 0
    %v3090 = vand.u32 %v2939, 2139095040
    %v3091 = vshrl.u32 %v3090, 23
    %v3092 = vsub.s32 %v3091, 127
    %v3093 = vand.u32 2147483647, %v2939
    %v3094 = vand.u32 %v3093, 8388607
    %v3095 = vor.u32 %v3094, 8388608
    %v3096 = vsub.s32 0, %v3095
    %v3097 = vadd.s32 %v3092, 1
    %vm3098 = vcmp.gt.s32.totalorder %v3097, 0
    %v3099 = vsel %vm3098, %v3097, 0
    %v3100 = vshrl.u32 %v3099, 5
    %v3101 = vand.u32 %v3099, 31
    %v3102 = vsub.s32 32, %v3101
    %v3103 = vshrl.u32 683565275, %v3102
    %v3104 = vshll.u32 683565275, %v3101
    %v3105 = vshrl.u32 2475754826, %v3102
    %v3106 = vor.u32 %v3104, %v3105
    %v3107 = vshll.u32 2475754826, %v3101
    %v3108 = vshrl.u32 2131351028, %v3102
    %v3109 = vor.u32 %v3107, %v3108
    %v3110 = vshll.u32 2131351028, %v3101
    %v3111 = vshrl.u32 2102212464, %v3102
    %v3112 = vor.u32 %v3110, %v3111
    %v3113 = vshll.u32 2102212464, %v3101
    %v3114 = vshrl.u32 920167782, %v3102
    %v3115 = vor.u32 %v3113, %v3114
    %v3116 = vshll.u32 920167782, %v3101
    %v3117 = vshrl.u32 1326507024, %v3102
    %v3118 = vor.u32 %v3116, %v3117
    %vm3119 = vcmp.lt.s32.totalorder %v3100, 1
    %vm3120 = vcmp.lt.s32.totalorder %v3100, 2
    %vm3121 = vcmp.lt.s32.totalorder %v3100, 3
    %vm3122 = vcmp.lt.s32.totalorder %v3100, 4
    %v3123 = vsel %vm3119, %v3103, %v3106
    %v3124 = vsel %vm3122, %v3112, 2102212464
    %v3125 = vsel %vm3121, %v3109, %v3124
    %v3126 = vsel %vm3120, %v3123, %v3125
    %v3127 = vsel %vm3119, %v3106, %v3109
    %v3128 = vsel %vm3122, %v3115, 920167782
    %v3129 = vsel %vm3121, %v3112, %v3128
    %v3130 = vsel %vm3120, %v3127, %v3129
    %v3131 = vsel %vm3119, %v3109, %v3112
    %v3132 = vsel %vm3122, %v3118, 1326507024
    %v3133 = vsel %vm3121, %v3115, %v3132
    %v3134 = vsel %vm3120, %v3131, %v3133
    %v3135 = vshll.u32 %v3095, 8
    %v3136 = vmul.u32.u64.compose %v3135, %v3134
    %v3137 = vextract.low.u32 %v3136
    %v3138 = vextract.high.u32 %v3136
    %v3139 = vmul.u32.u64.compose %v3135, %v3130
    %v3140 = vextract.low.u32 %v3139
    %v3141 = vextract.high.u32 %v3139
    %v3142 = vmul.u32 %v3135, %v3126
    %v3143 = vadd.s32 %v3138, %v3140
    %vm3144 = vc.u32 %v3138, %v3140
    %v3145 = vadd.s32 %v3141, 1
    %v3146 = vsel %vm3144, %v3145, %v3141
    %v3147 = vadd.s32 %v3142, %v3146
    %v3148 = vadd.s32 %v3147, 536870912
    %v3149 = vshrl.u32 %v3148, 30
    %v3150 = vshll.u32 %v3149, 30
    %v3151 = vsub.s32 %v3147, %v3150
    %vm3152 = vcmp.lt.s32.totalorder %v3151, 0
    %v3153 = vsub.s32 0, %v3151
    %v3154 = vsel %vm3152, %v3153, %v3151
    %v3155 = vclz %v3154
    %v3156 = vsub.s32 %v3155, 2
    %vm3157 = vcmp.gt.s32.totalorder 0, %v3156
    %v3158 = vsel %vm3157, 0, %v3156
    %v3159 = vsub.s32 32, %v3158
    %v3160 = vshll.u32 %v3151, %v3158
    %v3161 = vshrl.u32 %v3143, %v3159
    %v3162 = vor.u32 %v3160, %v3161
    %v3163 = vsub.s32 4294967266, %v3158
    %v3164 = vadd.s32 %v3163, 127
    %v3165 = vshll.u32 %v3164, 23
    %v3166 = vor.u32 4788187, %v3165
    %v3167 = vand.u32 2147483647, %v3166
    %v3169 = vcvt.s32.f32 %v3162
    %v3170 = vmul.f32 %v3169, %v3167
    %v3171 = vxor.u32 %v3170, 2147483648
    %v3172 = vsel %vm3089, %v3171, %v3170
    %v3173 = vsub.s32 4, %v3149
    %v3174 = vsel %vm3089, %v3173, %v3149
    %v3175 = vsel %vm3088, %v2939, %v3172
    %v3176 = vsel %vm3088, 0, %v3174
    %v3177 = vcosq.f32.pop %v3175
    %v3178 = vsinq.f32.pop %v3175
    %vm3179 = vweird.f32 %v2939
    %v3180 = vand.u32 %v3176, 3
    %vm3181 = vcmp.lt.s32.totalorder %v3180, 2
    %vm3182 = vcmp.eq.s32.totalorder %v3180, 0
    %v3183 = vxor.u32 %v3178, 2147483648
    %v3184 = vsel %vm3182, %v3177, %v3183
    %vm3185 = vcmp.eq.s32.totalorder %v3180, 2
    %v3186 = vxor.u32 %v3177, 2147483648
    %v3187 = vsel %vm3185, %v3186, %v3178
    %v3188 = vsel %vm3181, %v3184, %v3187
    %v3189 = vsel %vm3179, nan, %v3188
    %v3190 = vand.u32 2147483647, %v2978
    %vm3191 = vcmp.le.f32.partialorder %v3190, 0.7853982
    %vm3192 = vcmp.lt.s32.totalorder %v2978, 0
    %v3193 = vand.u32 %v2978, 2139095040
    %v3194 = vshrl.u32 %v3193, 23
    %v3195 = vsub.s32 %v3194, 127
    %v3196 = vand.u32 2147483647, %v2978
    %v3197 = vand.u32 %v3196, 8388607
    %v3198 = vor.u32 %v3197, 8388608
    %v3199 = vsub.s32 0, %v3198
    %v3200 = vadd.s32 %v3195, 1
    %vm3201 = vcmp.gt.s32.totalorder %v3200, 0
    %v3202 = vsel %vm3201, %v3200, 0
    %v3203 = vshrl.u32 %v3202, 5
    %v3204 = vand.u32 %v3202, 31
    %v3205 = vsub.s32 32, %v3204
    %v3206 = vshrl.u32 683565275, %v3205
    %v3207 = vshll.u32 683565275, %v3204
    %v3208 = vshrl.u32 2475754826, %v3205
    %v3209 = vor.u32 %v3207, %v3208
    %v3210 = vshll.u32 2475754826, %v3204
    %v3211 = vshrl.u32 2131351028, %v3205
    %v3212 = vor.u32 %v3210, %v3211
    %v3213 = vshll.u32 2131351028, %v3204
    %v3214 = vshrl.u32 2102212464, %v3205
    %v3215 = vor.u32 %v3213, %v3214
    %v3216 = vshll.u32 2102212464, %v3204
    %v3217 = vshrl.u32 920167782, %v3205
    %v3218 = vor.u32 %v3216, %v3217
    %v3219 = vshll.u32 920167782, %v3204
    %v3220 = vshrl.u32 1326507024, %v3205
    %v3221 = vor.u32 %v3219, %v3220
    %vm3222 = vcmp.lt.s32.totalorder %v3203, 1
    %vm3223 = vcmp.lt.s32.totalorder %v3203, 2
    %vm3224 = vcmp.lt.s32.totalorder %v3203, 3
    %vm3225 = vcmp.lt.s32.totalorder %v3203, 4
    %v3226 = vsel %vm3222, %v3206, %v3209
    %v3227 = vsel %vm3225, %v3215, 2102212464
    %v3228 = vsel %vm3224, %v3212, %v3227
    %v3229 = vsel %vm3223, %v3226, %v3228
    %v3230 = vsel %vm3222, %v3209, %v3212
    %v3231 = vsel %vm3225, %v3218, 920167782
    %v3232 = vsel %vm3224, %v3215, %v3231
    %v3233 = vsel %vm3223, %v3230, %v3232
    %v3234 = vsel %vm3222, %v3212, %v3215
    %v3235 = vsel %vm3225, %v3221, 1326507024
    %v3236 = vsel %vm3224, %v3218, %v3235
    %v3237 = vsel %vm3223, %v3234, %v3236
    %v3238 = vshll.u32 %v3198, 8
    %v3239 = vmul.u32.u64.compose %v3238, %v3237
    %v3240 = vextract.low.u32 %v3239
    %v3241 = vextract.high.u32 %v3239
    %v3242 = vmul.u32.u64.compose %v3238, %v3233
    %v3243 = vextract.low.u32 %v3242
    %v3244 = vextract.high.u32 %v3242
    %v3245 = vmul.u32 %v3238, %v3229
    %v3246 = vadd.s32 %v3241, %v3243
    %vm3247 = vc.u32 %v3241, %v3243
    %v3248 = vadd.s32 %v3244, 1
    %v3249 = vsel %vm3247, %v3248, %v3244
    %v3250 = vadd.s32 %v3245, %v3249
    %v3251 = vadd.s32 %v3250, 536870912
    %v3252 = vshrl.u32 %v3251, 30
    %v3253 = vshll.u32 %v3252, 30
    %v3254 = vsub.s32 %v3250, %v3253
    %vm3255 = vcmp.lt.s32.totalorder %v3254, 0
    %v3256 = vsub.s32 0, %v3254
    %v3257 = vsel %vm3255, %v3256, %v3254
    %v3258 = vclz %v3257
    %v3259 = vsub.s32 %v3258, 2
    %vm3260 = vcmp.gt.s32.totalorder 0, %v3259
    %v3261 = vsel %vm3260, 0, %v3259
    %v3262 = vsub.s32 32, %v3261
    %v3263 = vshll.u32 %v3254, %v3261
    %v3264 = vshrl.u32 %v3246, %v3262
    %v3265 = vor.u32 %v3263, %v3264
    %v3266 = vsub.s32 4294967266, %v3261
    %v3267 = vadd.s32 %v3266, 127
    %v3268 = vshll.u32 %v3267, 23
    %v3269 = vor.u32 4788187, %v3268
    %v3270 = vand.u32 2147483647, %v3269
    %v3272 = vcvt.s32.f32 %v3265
    %v3273 = vmul.f32 %v3272, %v3270
    %v3274 = vxor.u32 %v3273, 2147483648
    %v3275 = vsel %vm3192, %v3274, %v3273
    %v3276 = vsub.s32 4, %v3252
    %v3277 = vsel %vm3192, %v3276, %v3252
    %v3278 = vsel %vm3191, %v2978, %v3275
    %v3279 = vsel %vm3191, 0, %v3277
    %v3280 = vcosq.f32.pop %v3278
    %v3281 = vsinq.f32.pop %v3278
    %vm3282 = vweird.f32 %v2978
    %v3283 = vand.u32 %v3279, 3
    %vm3284 = vcmp.lt.s32.totalorder %v3283, 2
    %vm3285 = vcmp.eq.s32.totalorder %v3283, 0
    %v3286 = vxor.u32 %v3281, 2147483648
    %v3287 = vsel %vm3285, %v3280, %v3286
    %vm3288 = vcmp.eq.s32.totalorder %v3283, 2
    %v3289 = vxor.u32 %v3280, 2147483648
    %v3290 = vsel %vm3288, %v3289, %v3281
    %v3291 = vsel %vm3284, %v3287, %v3290
    %v3292 = vsel %vm3282, nan, %v3291
    %v3293 = vand.u32 2147483647, %v2980
    %vm3294 = vcmp.le.f32.partialorder %v3293, 0.7853982
    %vm3295 = vcmp.lt.s32.totalorder %v2980, 0
    %v3296 = vand.u32 %v2980, 2139095040
    %v3297 = vshrl.u32 %v3296, 23
    %v3298 = vsub.s32 %v3297, 127
    %v3299 = vand.u32 2147483647, %v2980
    %v3300 = vand.u32 %v3299, 8388607
    %v3301 = vor.u32 %v3300, 8388608
    %v3302 = vsub.s32 0, %v3301
    %v3303 = vadd.s32 %v3298, 1
    %vm3304 = vcmp.gt.s32.totalorder %v3303, 0
    %v3305 = vsel %vm3304, %v3303, 0
    %v3306 = vshrl.u32 %v3305, 5
    %v3307 = vand.u32 %v3305, 31
    %v3308 = vsub.s32 32, %v3307
    %v3309 = vshrl.u32 683565275, %v3308
    %v3310 = vshll.u32 683565275, %v3307
    %v3311 = vshrl.u32 2475754826, %v3308
    %v3312 = vor.u32 %v3310, %v3311
    %v3313 = vshll.u32 2475754826, %v3307
    %v3314 = vshrl.u32 2131351028, %v3308
    %v3315 = vor.u32 %v3313, %v3314
    %v3316 = vshll.u32 2131351028, %v3307
    %v3317 = vshrl.u32 2102212464, %v3308
    %v3318 = vor.u32 %v3316, %v3317
    %v3319 = vshll.u32 2102212464, %v3307
    %v3320 = vshrl.u32 920167782, %v3308
    %v3321 = vor.u32 %v3319, %v3320
    %v3322 = vshll.u32 920167782, %v3307
    %v3323 = vshrl.u32 1326507024, %v3308
    %v3324 = vor.u32 %v3322, %v3323
    %vm3325 = vcmp.lt.s32.totalorder %v3306, 1
    %vm3326 = vcmp.lt.s32.totalorder %v3306, 2
    %vm3327 = vcmp.lt.s32.totalorder %v3306, 3
    %vm3328 = vcmp.lt.s32.totalorder %v3306, 4
    %v3329 = vsel %vm3325, %v3309, %v3312
    %v3330 = vsel %vm3328, %v3318, 2102212464
    %v3331 = vsel %vm3327, %v3315, %v3330
    %v3332 = vsel %vm3326, %v3329, %v3331
    %v3333 = vsel %vm3325, %v3312, %v3315
    %v3334 = vsel %vm3328, %v3321, 920167782
    %v3335 = vsel %vm3327, %v3318, %v3334
    %v3336 = vsel %vm3326, %v3333, %v3335
    %v3337 = vsel %vm3325, %v3315, %v3318
    %v3338 = vsel %vm3328, %v3324, 1326507024
    %v3339 = vsel %vm3327, %v3321, %v3338
    %v3340 = vsel %vm3326, %v3337, %v3339
    %v3341 = vshll.u32 %v3301, 8
    %v3342 = vmul.u32.u64.compose %v3341, %v3340
    %v3343 = vextract.low.u32 %v3342
    %v3344 = vextract.high.u32 %v3342
    %v3345 = vmul.u32.u64.compose %v3341, %v3336
    %v3346 = vextract.low.u32 %v3345
    %v3347 = vextract.high.u32 %v3345
    %v3348 = vmul.u32 %v3341, %v3332
    %v3349 = vadd.s32 %v3344, %v3346
    %vm3350 = vc.u32 %v3344, %v3346
    %v3351 = vadd.s32 %v3347, 1
    %v3352 = vsel %vm3350, %v3351, %v3347
    %v3353 = vadd.s32 %v3348, %v3352
    %v3354 = vadd.s32 %v3353, 536870912
    %v3355 = vshrl.u32 %v3354, 30
    %v3356 = vshll.u32 %v3355, 30
    %v3357 = vsub.s32 %v3353, %v3356
    %vm3358 = vcmp.lt.s32.totalorder %v3357, 0
    %v3359 = vsub.s32 0, %v3357
    %v3360 = vsel %vm3358, %v3359, %v3357
    %v3361 = vclz %v3360
    %v3362 = vsub.s32 %v3361, 2
    %vm3363 = vcmp.gt.s32.totalorder 0, %v3362
    %v3364 = vsel %vm3363, 0, %v3362
    %v3365 = vsub.s32 32, %v3364
    %v3366 = vshll.u32 %v3357, %v3364
    %v3367 = vshrl.u32 %v3349, %v3365
    %v3368 = vor.u32 %v3366, %v3367
    %v3369 = vsub.s32 4294967266, %v3364
    %v3370 = vadd.s32 %v3369, 127
    %v3371 = vshll.u32 %v3370, 23
    %v3372 = vor.u32 4788187, %v3371
    %v3373 = vand.u32 2147483647, %v3372
    %v3375 = vcvt.s32.f32 %v3368
    %v3376 = vmul.f32 %v3375, %v3373
    %v3377 = vxor.u32 %v3376, 2147483648
    %v3378 = vsel %vm3295, %v3377, %v3376
    %v3379 = vsub.s32 4, %v3355
    %v3380 = vsel %vm3295, %v3379, %v3355
    %v3381 = vsel %vm3294, %v2980, %v3378
    %v3382 = vsel %vm3294, 0, %v3380
    %v3383 = vcosq.f32.pop %v3381
    %v3384 = vsinq.f32.pop %v3381
    %vm3385 = vweird.f32 %v2980
    %v3386 = vand.u32 %v3382, 3
    %vm3387 = vcmp.lt.s32.totalorder %v3386, 2
    %vm3388 = vcmp.eq.s32.totalorder %v3386, 0
    %v3389 = vxor.u32 %v3384, 2147483648
    %v3390 = vsel %vm3388, %v3383, %v3389
    %vm3391 = vcmp.eq.s32.totalorder %v3386, 2
    %v3392 = vxor.u32 %v3383, 2147483648
    %v3393 = vsel %vm3391, %v3392, %v3384
    %v3394 = vsel %vm3387, %v3390, %v3393
    %v3395 = vsel %vm3385, nan, %v3394
    %v3396 = vmul.f32 %v3086, 1.5414666
    %v3397 = vmul.f32 %v3189, 1.5414666
    %v3398 = vmul.f32 %v3292, 1.5414666
    %v3399 = vmul.f32 %v3395, 1.5414666
    %v3400 = vsub.f32 1.5940298, %v3396
    %v3401 = vsub.f32 1.5940298, %v3397
    %v3402 = vsub.f32 1.5940298, %v3398
    %v3403 = vsub.f32 1.5940298, %v3399
    %v3404 = vrcp.pop %v3400
    %v3405 = vrcp.pop %v3401
    %v3406 = vrcp.pop %v3402
    %v3407 = vrcp.pop %v3403
    %v3408 = vmul.f32 %v3404, 0.05090673
    %v3409 = vmul.f32 %v3405, 0.05090673
    %v3410 = vmul.f32 %v3406, 0.05090673
    %v3411 = vmul.f32 %v3407, 0.05090673
    %v3412 = vsub.f32 1.0, %v3408
    %v3413 = vsub.f32 1.0, %v3409
    %v3414 = vsub.f32 1.0, %v3410
    %v3415 = vsub.f32 1.0, %v3411
    %s3416 = sadd.s32 %s606, 5
    %s3417 = sld [smem:[#allocation3 + %s3416]]
    %v3418 = vstv %s3417
    %v3419 = vmul.f32 %v3418, %v3412
    %v3420 = vmul.f32 %v3418, %v3413
    %v3421 = vmul.f32 %v3418, %v3414
    %v3422 = vmul.f32 %v3418, %v3415
    %v3423 = vadd.f32 %v2861, %v3419
    %v3424 = vadd.f32 %v2862, %v3420
    %v3425 = vadd.f32 %v2863, %v3421
    %v3426 = vadd.f32 %v2864, %v3422
    %s3427 = scalar_lea.vmem %s2, 24
    %v3428 = vld [vmem:[%s3427] sm:$0xf]
    %s3429 = scalar_lea.vmem [#allocation7], 48
    %v3430 = vld [vmem:[%s3429] sm:$0xff]
    %v3432 = vcombine.high %v3430, %v3430
    %v3434 = vunpack.c.l.s4 1983009808
    %v3435 = vunpack.c.0.s8 %v3434
    %v3436 = vlaneseq
    %v3437 = vshrl.u32 %v3436, 7
    %v3438 = vsub.s32 %v3435, %v3437
    %v3439 = vrot.slane %v3430, %v3438
    %v3441 = vunpack.c.l.s4 1983009808
    %v3442 = vunpack.c.0.s8 %v3441
    %v3443 = vlaneseq
    %v3444 = vshrl.u32 %v3443, 7
    %v3445 = vsub.s32 %v3442, %v3444
    %v3446 = vrot.slane %v3432, %v3445
    %v3447 = vcombine.high %v3439, %v3439
    %v3448 = vcombine.high %v3446, %v3446
    %v3450 = vsel %vm75, %v3428, 0
    %v3453 = vsel %vm79, %v3439, 0
    %v3456 = vsel %vm79, %v3447, 0
    %v3459 = vsel %vm79, %v3446, 0
    %v3462 = vsel %vm79, %v3448, 0
    %3464 = vmatprep.subr.bf16.mxu0 0
    %3465 = vmatpush1.bf16.msra.mxu0 0
    %3466 = vmatprep.subr.bf16.mxu0 0
    %3467 = vmatpush1.bf16.msra.mxu0 0
    %3468 = vmatprep.subr.bf16.mxu0 0
    %3469 = vmatpush1.bf16.msra.mxu0 0
    %3470 = vmatprep.subr.bf16.mxu0 0
    %3471 = vmatpush1.bf16.msra.mxu0 0
    %3472 = vmatprep.subr.bf16.mxu0 0
    %3473 = vmatpush1.bf16.msra.mxu0 0
    %3474 = vmatprep.subr.bf16.mxu0 0
    %3475 = vmatpush1.bf16.msra.mxu0 0
    %3476 = vmatprep.subr.bf16.mxu0 0
    %3477 = vmatpush1.bf16.msra.mxu0 0
    %3478 = vmatprep.subr.bf16.mxu0 %v3456
    %3479 = vmatpush1.bf16.msra.mxu0 %v3453
    %3480 = vmatprep.subr.bf16.mxu0 0
    %3481 = vmatpush2.bf16.msra.mxu0 0
    %3482 = vmatprep.subr.bf16.mxu0 0
    %3483 = vmatpush2.bf16.msra.mxu0 0
    %3484 = vmatprep.subr.bf16.mxu0 0
    %3485 = vmatpush2.bf16.msra.mxu0 0
    %3486 = vmatprep.subr.bf16.mxu0 0
    %3487 = vmatpush2.bf16.msra.mxu0 0
    %3488 = vmatprep.subr.bf16.mxu0 0
    %3489 = vmatpush2.bf16.msra.mxu0 0
    %3490 = vmatprep.subr.bf16.mxu0 0
    %3491 = vmatpush2.bf16.msra.mxu0 0
    %3492 = vmatprep.subr.bf16.mxu0 0
    %3493 = vmatpush2.bf16.msra.mxu0 0
    %3494 = vmatprep.subr.bf16.mxu0 0
    %3495 = vmatpush2.bf16.msra.mxu0 0
    %3496 = vmatprep.mubr.bf16.mxu0 0
    %3497 = vmatmul.mubr.bf16.gmra.mxu0 %v3450
    %v3498 = vpop.f32.mrf.mxu0
    %v3499 = vadd.f32 0.0, %v3498
    %v3500 = vpop.f32.mrf.mxu0
    %v3501 = vadd.f32 0.0, %v3500
    %v3502 = vpop.f32.mrf.mxu0
    %v3503 = vpop.f32.mrf.mxu0
    %3504 = vdwg.mxu0
    %3505 = vmatprep.subr.bf16.mxu0 0
    %3506 = vmatpush1.bf16.msra.mxu0 0
    %3507 = vmatprep.subr.bf16.mxu0 0
    %3508 = vmatpush1.bf16.msra.mxu0 0
    %3509 = vmatprep.subr.bf16.mxu0 0
    %3510 = vmatpush1.bf16.msra.mxu0 0
    %3511 = vmatprep.subr.bf16.mxu0 0
    %3512 = vmatpush1.bf16.msra.mxu0 0
    %3513 = vmatprep.subr.bf16.mxu0 0
    %3514 = vmatpush1.bf16.msra.mxu0 0
    %3515 = vmatprep.subr.bf16.mxu0 0
    %3516 = vmatpush1.bf16.msra.mxu0 0
    %3517 = vmatprep.subr.bf16.mxu0 0
    %3518 = vmatpush1.bf16.msra.mxu0 0
    %3519 = vmatprep.subr.bf16.mxu0 %v3462
    %3520 = vmatpush1.bf16.msra.mxu0 %v3459
    %3521 = vmatprep.subr.bf16.mxu0 0
    %3522 = vmatpush2.bf16.msra.mxu0 0
    %3523 = vmatprep.subr.bf16.mxu0 0
    %3524 = vmatpush2.bf16.msra.mxu0 0
    %3525 = vmatprep.subr.bf16.mxu0 0
    %3526 = vmatpush2.bf16.msra.mxu0 0
    %3527 = vmatprep.subr.bf16.mxu0 0
    %3528 = vmatpush2.bf16.msra.mxu0 0
    %3529 = vmatprep.subr.bf16.mxu0 0
    %3530 = vmatpush2.bf16.msra.mxu0 0
    %3531 = vmatprep.subr.bf16.mxu0 0
    %3532 = vmatpush2.bf16.msra.mxu0 0
    %3533 = vmatprep.subr.bf16.mxu0 0
    %3534 = vmatpush2.bf16.msra.mxu0 0
    %3535 = vmatprep.subr.bf16.mxu0 0
    %3536 = vmatpush2.bf16.msra.mxu0 0
    %3537 = vmatprep.mubr.bf16.mxu0 0
    %3538 = vmatmul.mubr.bf16.gmra.mxu0 %v3450
    %v3539 = vpop.f32.mrf.mxu0
    %v3540 = vadd.f32 0.0, %v3539
    %v3541 = vpop.f32.mrf.mxu0
    %v3542 = vadd.f32 0.0, %v3541
    %v3543 = vpop.f32.mrf.mxu0
    %v3544 = vpop.f32.mrf.mxu0
    %3545 = vdwg.mxu0
    %v3546 = vand.u32 2147483647, %v3499
    %vm3547 = vcmp.le.f32.partialorder %v3546, 0.7853982
    %vm3548 = vcmp.lt.s32.totalorder %v3499, 0
    %v3549 = vand.u32 %v3499, 2139095040
    %v3550 = vshrl.u32 %v3549, 23
    %v3551 = vsub.s32 %v3550, 127
    %v3552 = vand.u32 2147483647, %v3499
    %v3553 = vand.u32 %v3552, 8388607
    %v3554 = vor.u32 %v3553, 8388608
    %v3555 = vsub.s32 0, %v3554
    %v3556 = vadd.s32 %v3551, 1
    %vm3557 = vcmp.gt.s32.totalorder %v3556, 0
    %v3558 = vsel %vm3557, %v3556, 0
    %v3559 = vshrl.u32 %v3558, 5
    %v3560 = vand.u32 %v3558, 31
    %v3561 = vsub.s32 32, %v3560
    %v3562 = vshrl.u32 683565275, %v3561
    %v3563 = vshll.u32 683565275, %v3560
    %v3564 = vshrl.u32 2475754826, %v3561
    %v3565 = vor.u32 %v3563, %v3564
    %v3566 = vshll.u32 2475754826, %v3560
    %v3567 = vshrl.u32 2131351028, %v3561
    %v3568 = vor.u32 %v3566, %v3567
    %v3569 = vshll.u32 2131351028, %v3560
    %v3570 = vshrl.u32 2102212464, %v3561
    %v3571 = vor.u32 %v3569, %v3570
    %v3572 = vshll.u32 2102212464, %v3560
    %v3573 = vshrl.u32 920167782, %v3561
    %v3574 = vor.u32 %v3572, %v3573
    %v3575 = vshll.u32 920167782, %v3560
    %v3576 = vshrl.u32 1326507024, %v3561
    %v3577 = vor.u32 %v3575, %v3576
    %vm3578 = vcmp.lt.s32.totalorder %v3559, 1
    %vm3579 = vcmp.lt.s32.totalorder %v3559, 2
    %vm3580 = vcmp.lt.s32.totalorder %v3559, 3
    %vm3581 = vcmp.lt.s32.totalorder %v3559, 4
    %v3582 = vsel %vm3578, %v3562, %v3565
    %v3583 = vsel %vm3581, %v3571, 2102212464
    %v3584 = vsel %vm3580, %v3568, %v3583
    %v3585 = vsel %vm3579, %v3582, %v3584
    %v3586 = vsel %vm3578, %v3565, %v3568
    %v3587 = vsel %vm3581, %v3574, 920167782
    %v3588 = vsel %vm3580, %v3571, %v3587
    %v3589 = vsel %vm3579, %v3586, %v3588
    %v3590 = vsel %vm3578, %v3568, %v3571
    %v3591 = vsel %vm3581, %v3577, 1326507024
    %v3592 = vsel %vm3580, %v3574, %v3591
    %v3593 = vsel %vm3579, %v3590, %v3592
    %v3594 = vshll.u32 %v3554, 8
    %v3595 = vmul.u32.u64.compose %v3594, %v3593
    %v3596 = vextract.low.u32 %v3595
    %v3597 = vextract.high.u32 %v3595
    %v3598 = vmul.u32.u64.compose %v3594, %v3589
    %v3599 = vextract.low.u32 %v3598
    %v3600 = vextract.high.u32 %v3598
    %v3601 = vmul.u32 %v3594, %v3585
    %v3602 = vadd.s32 %v3597, %v3599
    %vm3603 = vc.u32 %v3597, %v3599
    %v3604 = vadd.s32 %v3600, 1
    %v3605 = vsel %vm3603, %v3604, %v3600
    %v3606 = vadd.s32 %v3601, %v3605
    %v3607 = vadd.s32 %v3606, 536870912
    %v3608 = vshrl.u32 %v3607, 30
    %v3609 = vshll.u32 %v3608, 30
    %v3610 = vsub.s32 %v3606, %v3609
    %vm3611 = vcmp.lt.s32.totalorder %v3610, 0
    %v3612 = vsub.s32 0, %v3610
    %v3613 = vsel %vm3611, %v3612, %v3610
    %v3614 = vclz %v3613
    %v3615 = vsub.s32 %v3614, 2
    %vm3616 = vcmp.gt.s32.totalorder 0, %v3615
    %v3617 = vsel %vm3616, 0, %v3615
    %v3618 = vsub.s32 32, %v3617
    %v3619 = vshll.u32 %v3610, %v3617
    %v3620 = vshrl.u32 %v3602, %v3618
    %v3621 = vor.u32 %v3619, %v3620
    %v3622 = vsub.s32 4294967266, %v3617
    %v3623 = vadd.s32 %v3622, 127
    %v3624 = vshll.u32 %v3623, 23
    %v3625 = vor.u32 4788187, %v3624
    %v3626 = vand.u32 2147483647, %v3625
    %v3628 = vcvt.s32.f32 %v3621
    %v3629 = vmul.f32 %v3628, %v3626
    %v3630 = vxor.u32 %v3629, 2147483648
    %v3631 = vsel %vm3548, %v3630, %v3629
    %v3632 = vsub.s32 4, %v3608
    %v3633 = vsel %vm3548, %v3632, %v3608
    %v3634 = vsel %vm3547, %v3499, %v3631
    %v3635 = vsel %vm3547, 0, %v3633
    %v3636 = vcosq.f32.pop %v3634
    %v3637 = vsinq.f32.pop %v3634
    %vm3638 = vweird.f32 %v3499
    %v3639 = vand.u32 %v3635, 3
    %vm3640 = vcmp.lt.s32.totalorder %v3639, 2
    %vm3641 = vcmp.eq.s32.totalorder %v3639, 0
    %v3642 = vxor.u32 %v3637, 2147483648
    %v3643 = vsel %vm3641, %v3636, %v3642
    %vm3644 = vcmp.eq.s32.totalorder %v3639, 2
    %v3645 = vxor.u32 %v3636, 2147483648
    %v3646 = vsel %vm3644, %v3645, %v3637
    %v3647 = vsel %vm3640, %v3643, %v3646
    %v3648 = vsel %vm3638, nan, %v3647
    %v3649 = vand.u32 2147483647, %v3501
    %vm3650 = vcmp.le.f32.partialorder %v3649, 0.7853982
    %vm3651 = vcmp.lt.s32.totalorder %v3501, 0
    %v3652 = vand.u32 %v3501, 2139095040
    %v3653 = vshrl.u32 %v3652, 23
    %v3654 = vsub.s32 %v3653, 127
    %v3655 = vand.u32 2147483647, %v3501
    %v3656 = vand.u32 %v3655, 8388607
    %v3657 = vor.u32 %v3656, 8388608
    %v3658 = vsub.s32 0, %v3657
    %v3659 = vadd.s32 %v3654, 1
    %vm3660 = vcmp.gt.s32.totalorder %v3659, 0
    %v3661 = vsel %vm3660, %v3659, 0
    %v3662 = vshrl.u32 %v3661, 5
    %v3663 = vand.u32 %v3661, 31
    %v3664 = vsub.s32 32, %v3663
    %v3665 = vshrl.u32 683565275, %v3664
    %v3666 = vshll.u32 683565275, %v3663
    %v3667 = vshrl.u32 2475754826, %v3664
    %v3668 = vor.u32 %v3666, %v3667
    %v3669 = vshll.u32 2475754826, %v3663
    %v3670 = vshrl.u32 2131351028, %v3664
    %v3671 = vor.u32 %v3669, %v3670
    %v3672 = vshll.u32 2131351028, %v3663
    %v3673 = vshrl.u32 2102212464, %v3664
    %v3674 = vor.u32 %v3672, %v3673
    %v3675 = vshll.u32 2102212464, %v3663
    %v3676 = vshrl.u32 920167782, %v3664
    %v3677 = vor.u32 %v3675, %v3676
    %v3678 = vshll.u32 920167782, %v3663
    %v3679 = vshrl.u32 1326507024, %v3664
    %v3680 = vor.u32 %v3678, %v3679
    %vm3681 = vcmp.lt.s32.totalorder %v3662, 1
    %vm3682 = vcmp.lt.s32.totalorder %v3662, 2
    %vm3683 = vcmp.lt.s32.totalorder %v3662, 3
    %vm3684 = vcmp.lt.s32.totalorder %v3662, 4
    %v3685 = vsel %vm3681, %v3665, %v3668
    %v3686 = vsel %vm3684, %v3674, 2102212464
    %v3687 = vsel %vm3683, %v3671, %v3686
    %v3688 = vsel %vm3682, %v3685, %v3687
    %v3689 = vsel %vm3681, %v3668, %v3671
    %v3690 = vsel %vm3684, %v3677, 920167782
    %v3691 = vsel %vm3683, %v3674, %v3690
    %v3692 = vsel %vm3682, %v3689, %v3691
    %v3693 = vsel %vm3681, %v3671, %v3674
    %v3694 = vsel %vm3684, %v3680, 1326507024
    %v3695 = vsel %vm3683, %v3677, %v3694
    %v3696 = vsel %vm3682, %v3693, %v3695
    %v3697 = vshll.u32 %v3657, 8
    %v3698 = vmul.u32.u64.compose %v3697, %v3696
    %v3699 = vextract.low.u32 %v3698
    %v3700 = vextract.high.u32 %v3698
    %v3701 = vmul.u32.u64.compose %v3697, %v3692
    %v3702 = vextract.low.u32 %v3701
    %v3703 = vextract.high.u32 %v3701
    %v3704 = vmul.u32 %v3697, %v3688
    %v3705 = vadd.s32 %v3700, %v3702
    %vm3706 = vc.u32 %v3700, %v3702
    %v3707 = vadd.s32 %v3703, 1
    %v3708 = vsel %vm3706, %v3707, %v3703
    %v3709 = vadd.s32 %v3704, %v3708
    %v3710 = vadd.s32 %v3709, 536870912
    %v3711 = vshrl.u32 %v3710, 30
    %v3712 = vshll.u32 %v3711, 30
    %v3713 = vsub.s32 %v3709, %v3712
    %vm3714 = vcmp.lt.s32.totalorder %v3713, 0
    %v3715 = vsub.s32 0, %v3713
    %v3716 = vsel %vm3714, %v3715, %v3713
    %v3717 = vclz %v3716
    %v3718 = vsub.s32 %v3717, 2
    %vm3719 = vcmp.gt.s32.totalorder 0, %v3718
    %v3720 = vsel %vm3719, 0, %v3718
    %v3721 = vsub.s32 32, %v3720
    %v3722 = vshll.u32 %v3713, %v3720
    %v3723 = vshrl.u32 %v3705, %v3721
    %v3724 = vor.u32 %v3722, %v3723
    %v3725 = vsub.s32 4294967266, %v3720
    %v3726 = vadd.s32 %v3725, 127
    %v3727 = vshll.u32 %v3726, 23
    %v3728 = vor.u32 4788187, %v3727
    %v3729 = vand.u32 2147483647, %v3728
    %v3731 = vcvt.s32.f32 %v3724
    %v3732 = vmul.f32 %v3731, %v3729
    %v3733 = vxor.u32 %v3732, 2147483648
    %v3734 = vsel %vm3651, %v3733, %v3732
    %v3735 = vsub.s32 4, %v3711
    %v3736 = vsel %vm3651, %v3735, %v3711
    %v3737 = vsel %vm3650, %v3501, %v3734
    %v3738 = vsel %vm3650, 0, %v3736
    %v3739 = vcosq.f32.pop %v3737
    %v3740 = vsinq.f32.pop %v3737
    %vm3741 = vweird.f32 %v3501
    %v3742 = vand.u32 %v3738, 3
    %vm3743 = vcmp.lt.s32.totalorder %v3742, 2
    %vm3744 = vcmp.eq.s32.totalorder %v3742, 0
    %v3745 = vxor.u32 %v3740, 2147483648
    %v3746 = vsel %vm3744, %v3739, %v3745
    %vm3747 = vcmp.eq.s32.totalorder %v3742, 2
    %v3748 = vxor.u32 %v3739, 2147483648
    %v3749 = vsel %vm3747, %v3748, %v3740
    %v3750 = vsel %vm3743, %v3746, %v3749
    %v3751 = vsel %vm3741, nan, %v3750
    %v3752 = vand.u32 2147483647, %v3540
    %vm3753 = vcmp.le.f32.partialorder %v3752, 0.7853982
    %vm3754 = vcmp.lt.s32.totalorder %v3540, 0
    %v3755 = vand.u32 %v3540, 2139095040
    %v3756 = vshrl.u32 %v3755, 23
    %v3757 = vsub.s32 %v3756, 127
    %v3758 = vand.u32 2147483647, %v3540
    %v3759 = vand.u32 %v3758, 8388607
    %v3760 = vor.u32 %v3759, 8388608
    %v3761 = vsub.s32 0, %v3760
    %v3762 = vadd.s32 %v3757, 1
    %vm3763 = vcmp.gt.s32.totalorder %v3762, 0
    %v3764 = vsel %vm3763, %v3762, 0
    %v3765 = vshrl.u32 %v3764, 5
    %v3766 = vand.u32 %v3764, 31
    %v3767 = vsub.s32 32, %v3766
    %v3768 = vshrl.u32 683565275, %v3767
    %v3769 = vshll.u32 683565275, %v3766
    %v3770 = vshrl.u32 2475754826, %v3767
    %v3771 = vor.u32 %v3769, %v3770
    %v3772 = vshll.u32 2475754826, %v3766
    %v3773 = vshrl.u32 2131351028, %v3767
    %v3774 = vor.u32 %v3772, %v3773
    %v3775 = vshll.u32 2131351028, %v3766
    %v3776 = vshrl.u32 2102212464, %v3767
    %v3777 = vor.u32 %v3775, %v3776
    %v3778 = vshll.u32 2102212464, %v3766
    %v3779 = vshrl.u32 920167782, %v3767
    %v3780 = vor.u32 %v3778, %v3779
    %v3781 = vshll.u32 920167782, %v3766
    %v3782 = vshrl.u32 1326507024, %v3767
    %v3783 = vor.u32 %v3781, %v3782
    %vm3784 = vcmp.lt.s32.totalorder %v3765, 1
    %vm3785 = vcmp.lt.s32.totalorder %v3765, 2
    %vm3786 = vcmp.lt.s32.totalorder %v3765, 3
    %vm3787 = vcmp.lt.s32.totalorder %v3765, 4
    %v3788 = vsel %vm3784, %v3768, %v3771
    %v3789 = vsel %vm3787, %v3777, 2102212464
    %v3790 = vsel %vm3786, %v3774, %v3789
    %v3791 = vsel %vm3785, %v3788, %v3790
    %v3792 = vsel %vm3784, %v3771, %v3774
    %v3793 = vsel %vm3787, %v3780, 920167782
    %v3794 = vsel %vm3786, %v3777, %v3793
    %v3795 = vsel %vm3785, %v3792, %v3794
    %v3796 = vsel %vm3784, %v3774, %v3777
    %v3797 = vsel %vm3787, %v3783, 1326507024
    %v3798 = vsel %vm3786, %v3780, %v3797
    %v3799 = vsel %vm3785, %v3796, %v3798
    %v3800 = vshll.u32 %v3760, 8
    %v3801 = vmul.u32.u64.compose %v3800, %v3799
    %v3802 = vextract.low.u32 %v3801
    %v3803 = vextract.high.u32 %v3801
    %v3804 = vmul.u32.u64.compose %v3800, %v3795
    %v3805 = vextract.low.u32 %v3804
    %v3806 = vextract.high.u32 %v3804
    %v3807 = vmul.u32 %v3800, %v3791
    %v3808 = vadd.s32 %v3803, %v3805
    %vm3809 = vc.u32 %v3803, %v3805
    %v3810 = vadd.s32 %v3806, 1
    %v3811 = vsel %vm3809, %v3810, %v3806
    %v3812 = vadd.s32 %v3807, %v3811
    %v3813 = vadd.s32 %v3812, 536870912
    %v3814 = vshrl.u32 %v3813, 30
    %v3815 = vshll.u32 %v3814, 30
    %v3816 = vsub.s32 %v3812, %v3815
    %vm3817 = vcmp.lt.s32.totalorder %v3816, 0
    %v3818 = vsub.s32 0, %v3816
    %v3819 = vsel %vm3817, %v3818, %v3816
    %v3820 = vclz %v3819
    %v3821 = vsub.s32 %v3820, 2
    %vm3822 = vcmp.gt.s32.totalorder 0, %v3821
    %v3823 = vsel %vm3822, 0, %v3821
    %v3824 = vsub.s32 32, %v3823
    %v3825 = vshll.u32 %v3816, %v3823
    %v3826 = vshrl.u32 %v3808, %v3824
    %v3827 = vor.u32 %v3825, %v3826
    %v3828 = vsub.s32 4294967266, %v3823
    %v3829 = vadd.s32 %v3828, 127
    %v3830 = vshll.u32 %v3829, 23
    %v3831 = vor.u32 4788187, %v3830
    %v3832 = vand.u32 2147483647, %v3831
    %v3834 = vcvt.s32.f32 %v3827
    %v3835 = vmul.f32 %v3834, %v3832
    %v3836 = vxor.u32 %v3835, 2147483648
    %v3837 = vsel %vm3754, %v3836, %v3835
    %v3838 = vsub.s32 4, %v3814
    %v3839 = vsel %vm3754, %v3838, %v3814
    %v3840 = vsel %vm3753, %v3540, %v3837
    %v3841 = vsel %vm3753, 0, %v3839
    %v3842 = vcosq.f32.pop %v3840
    %v3843 = vsinq.f32.pop %v3840
    %vm3844 = vweird.f32 %v3540
    %v3845 = vand.u32 %v3841, 3
    %vm3846 = vcmp.lt.s32.totalorder %v3845, 2
    %vm3847 = vcmp.eq.s32.totalorder %v3845, 0
    %v3848 = vxor.u32 %v3843, 2147483648
    %v3849 = vsel %vm3847, %v3842, %v3848
    %vm3850 = vcmp.eq.s32.totalorder %v3845, 2
    %v3851 = vxor.u32 %v3842, 2147483648
    %v3852 = vsel %vm3850, %v3851, %v3843
    %v3853 = vsel %vm3846, %v3849, %v3852
    %v3854 = vsel %vm3844, nan, %v3853
    %v3855 = vand.u32 2147483647, %v3542
    %vm3856 = vcmp.le.f32.partialorder %v3855, 0.7853982
    %vm3857 = vcmp.lt.s32.totalorder %v3542, 0
    %v3858 = vand.u32 %v3542, 2139095040
    %v3859 = vshrl.u32 %v3858, 23
    %v3860 = vsub.s32 %v3859, 127
    %v3861 = vand.u32 2147483647, %v3542
    %v3862 = vand.u32 %v3861, 8388607
    %v3863 = vor.u32 %v3862, 8388608
    %v3864 = vsub.s32 0, %v3863
    %v3865 = vadd.s32 %v3860, 1
    %vm3866 = vcmp.gt.s32.totalorder %v3865, 0
    %v3867 = vsel %vm3866, %v3865, 0
    %v3868 = vshrl.u32 %v3867, 5
    %v3869 = vand.u32 %v3867, 31
    %v3870 = vsub.s32 32, %v3869
    %v3871 = vshrl.u32 683565275, %v3870
    %v3872 = vshll.u32 683565275, %v3869
    %v3873 = vshrl.u32 2475754826, %v3870
    %v3874 = vor.u32 %v3872, %v3873
    %v3875 = vshll.u32 2475754826, %v3869
    %v3876 = vshrl.u32 2131351028, %v3870
    %v3877 = vor.u32 %v3875, %v3876
    %v3878 = vshll.u32 2131351028, %v3869
    %v3879 = vshrl.u32 2102212464, %v3870
    %v3880 = vor.u32 %v3878, %v3879
    %v3881 = vshll.u32 2102212464, %v3869
    %v3882 = vshrl.u32 920167782, %v3870
    %v3883 = vor.u32 %v3881, %v3882
    %v3884 = vshll.u32 920167782, %v3869
    %v3885 = vshrl.u32 1326507024, %v3870
    %v3886 = vor.u32 %v3884, %v3885
    %vm3887 = vcmp.lt.s32.totalorder %v3868, 1
    %vm3888 = vcmp.lt.s32.totalorder %v3868, 2
    %vm3889 = vcmp.lt.s32.totalorder %v3868, 3
    %vm3890 = vcmp.lt.s32.totalorder %v3868, 4
    %v3891 = vsel %vm3887, %v3871, %v3874
    %v3892 = vsel %vm3890, %v3880, 2102212464
    %v3893 = vsel %vm3889, %v3877, %v3892
    %v3894 = vsel %vm3888, %v3891, %v3893
    %v3895 = vsel %vm3887, %v3874, %v3877
    %v3896 = vsel %vm3890, %v3883, 920167782
    %v3897 = vsel %vm3889, %v3880, %v3896
    %v3898 = vsel %vm3888, %v3895, %v3897
    %v3899 = vsel %vm3887, %v3877, %v3880
    %v3900 = vsel %vm3890, %v3886, 1326507024
    %v3901 = vsel %vm3889, %v3883, %v3900
    %v3902 = vsel %vm3888, %v3899, %v3901
    %v3903 = vshll.u32 %v3863, 8
    %v3904 = vmul.u32.u64.compose %v3903, %v3902
    %v3905 = vextract.low.u32 %v3904
    %v3906 = vextract.high.u32 %v3904
    %v3907 = vmul.u32.u64.compose %v3903, %v3898
    %v3908 = vextract.low.u32 %v3907
    %v3909 = vextract.high.u32 %v3907
    %v3910 = vmul.u32 %v3903, %v3894
    %v3911 = vadd.s32 %v3906, %v3908
    %vm3912 = vc.u32 %v3906, %v3908
    %v3913 = vadd.s32 %v3909, 1
    %v3914 = vsel %vm3912, %v3913, %v3909
    %v3915 = vadd.s32 %v3910, %v3914
    %v3916 = vadd.s32 %v3915, 536870912
    %v3917 = vshrl.u32 %v3916, 30
    %v3918 = vshll.u32 %v3917, 30
    %v3919 = vsub.s32 %v3915, %v3918
    %vm3920 = vcmp.lt.s32.totalorder %v3919, 0
    %v3921 = vsub.s32 0, %v3919
    %v3922 = vsel %vm3920, %v3921, %v3919
    %v3923 = vclz %v3922
    %v3924 = vsub.s32 %v3923, 2
    %vm3925 = vcmp.gt.s32.totalorder 0, %v3924
    %v3926 = vsel %vm3925, 0, %v3924
    %v3927 = vsub.s32 32, %v3926
    %v3928 = vshll.u32 %v3919, %v3926
    %v3929 = vshrl.u32 %v3911, %v3927
    %v3930 = vor.u32 %v3928, %v3929
    %v3931 = vsub.s32 4294967266, %v3926
    %v3932 = vadd.s32 %v3931, 127
    %v3933 = vshll.u32 %v3932, 23
    %v3934 = vor.u32 4788187, %v3933
    %v3935 = vand.u32 2147483647, %v3934
    %v3937 = vcvt.s32.f32 %v3930
    %v3938 = vmul.f32 %v3937, %v3935
    %v3939 = vxor.u32 %v3938, 2147483648
    %v3940 = vsel %vm3857, %v3939, %v3938
    %v3941 = vsub.s32 4, %v3917
    %v3942 = vsel %vm3857, %v3941, %v3917
    %v3943 = vsel %vm3856, %v3542, %v3940
    %v3944 = vsel %vm3856, 0, %v3942
    %v3945 = vcosq.f32.pop %v3943
    %v3946 = vsinq.f32.pop %v3943
    %vm3947 = vweird.f32 %v3542
    %v3948 = vand.u32 %v3944, 3
    %vm3949 = vcmp.lt.s32.totalorder %v3948, 2
    %vm3950 = vcmp.eq.s32.totalorder %v3948, 0
    %v3951 = vxor.u32 %v3946, 2147483648
    %v3952 = vsel %vm3950, %v3945, %v3951
    %vm3953 = vcmp.eq.s32.totalorder %v3948, 2
    %v3954 = vxor.u32 %v3945, 2147483648
    %v3955 = vsel %vm3953, %v3954, %v3946
    %v3956 = vsel %vm3949, %v3952, %v3955
    %v3957 = vsel %vm3947, nan, %v3956
    %v3958 = vmul.f32 %v3648, 1.5414666
    %v3959 = vmul.f32 %v3751, 1.5414666
    %v3960 = vmul.f32 %v3854, 1.5414666
    %v3961 = vmul.f32 %v3957, 1.5414666
    %v3962 = vsub.f32 1.5940298, %v3958
    %v3963 = vsub.f32 1.5940298, %v3959
    %v3964 = vsub.f32 1.5940298, %v3960
    %v3965 = vsub.f32 1.5940298, %v3961
    %v3966 = vrcp.pop %v3962
    %v3967 = vrcp.pop %v3963
    %v3968 = vrcp.pop %v3964
    %v3969 = vrcp.pop %v3965
    %v3970 = vmul.f32 %v3966, 0.05090673
    %v3971 = vmul.f32 %v3967, 0.05090673
    %v3972 = vmul.f32 %v3968, 0.05090673
    %v3973 = vmul.f32 %v3969, 0.05090673
    %v3974 = vsub.f32 1.0, %v3970
    %v3975 = vsub.f32 1.0, %v3971
    %v3976 = vsub.f32 1.0, %v3972
    %v3977 = vsub.f32 1.0, %v3973
    %s3978 = sadd.s32 %s606, 6
    %s3979 = sld [smem:[#allocation3 + %s3978]]
    %v3980 = vstv %s3979
    %v3981 = vmul.f32 %v3980, %v3974
    %v3982 = vmul.f32 %v3980, %v3975
    %v3983 = vmul.f32 %v3980, %v3976
    %v3984 = vmul.f32 %v3980, %v3977
    %v3985 = vadd.f32 %v3423, %v3981
    %v3986 = vadd.f32 %v3424, %v3982
    %v3987 = vadd.f32 %v3425, %v3983
    %v3988 = vadd.f32 %v3426, %v3984
    %s3989 = scalar_lea.vmem %s2, 28
    %v3990 = vld [vmem:[%s3989] sm:$0xf]
    %s3991 = scalar_lea.vmem [#allocation7], 56
    %v3992 = vld [vmem:[%s3991] sm:$0xff]
    %v3994 = vcombine.high %v3992, %v3992
    %v3996 = vunpack.c.l.s4 1983009808
    %v3997 = vunpack.c.0.s8 %v3996
    %v3998 = vlaneseq
    %v3999 = vshrl.u32 %v3998, 7
    %v4000 = vsub.s32 %v3997, %v3999
    %v4001 = vrot.slane %v3992, %v4000
    %v4003 = vunpack.c.l.s4 1983009808
    %v4004 = vunpack.c.0.s8 %v4003
    %v4005 = vlaneseq
    %v4006 = vshrl.u32 %v4005, 7
    %v4007 = vsub.s32 %v4004, %v4006
    %v4008 = vrot.slane %v3994, %v4007
    %v4009 = vcombine.high %v4001, %v4001
    %v4010 = vcombine.high %v4008, %v4008
    %v4012 = vsel %vm75, %v3990, 0
    %v4015 = vsel %vm79, %v4001, 0
    %v4018 = vsel %vm79, %v4009, 0
    %v4021 = vsel %vm79, %v4008, 0
    %v4024 = vsel %vm79, %v4010, 0
    %4026 = vmatprep.subr.bf16.mxu0 0
    %4027 = vmatpush1.bf16.msra.mxu0 0
    %4028 = vmatprep.subr.bf16.mxu0 0
    %4029 = vmatpush1.bf16.msra.mxu0 0
    %4030 = vmatprep.subr.bf16.mxu0 0
    %4031 = vmatpush1.bf16.msra.mxu0 0
    %4032 = vmatprep.subr.bf16.mxu0 0
    %4033 = vmatpush1.bf16.msra.mxu0 0
    %4034 = vmatprep.subr.bf16.mxu0 0
    %4035 = vmatpush1.bf16.msra.mxu0 0
    %4036 = vmatprep.subr.bf16.mxu0 0
    %4037 = vmatpush1.bf16.msra.mxu0 0
    %4038 = vmatprep.subr.bf16.mxu0 0
    %4039 = vmatpush1.bf16.msra.mxu0 0
    %4040 = vmatprep.subr.bf16.mxu0 %v4018
    %4041 = vmatpush1.bf16.msra.mxu0 %v4015
    %4042 = vmatprep.subr.bf16.mxu0 0
    %4043 = vmatpush2.bf16.msra.mxu0 0
    %4044 = vmatprep.subr.bf16.mxu0 0
    %4045 = vmatpush2.bf16.msra.mxu0 0
    %4046 = vmatprep.subr.bf16.mxu0 0
    %4047 = vmatpush2.bf16.msra.mxu0 0
    %4048 = vmatprep.subr.bf16.mxu0 0
    %4049 = vmatpush2.bf16.msra.mxu0 0
    %4050 = vmatprep.subr.bf16.mxu0 0
    %4051 = vmatpush2.bf16.msra.mxu0 0
    %4052 = vmatprep.subr.bf16.mxu0 0
    %4053 = vmatpush2.bf16.msra.mxu0 0
    %4054 = vmatprep.subr.bf16.mxu0 0
    %4055 = vmatpush2.bf16.msra.mxu0 0
    %4056 = vmatprep.subr.bf16.mxu0 0
    %4057 = vmatpush2.bf16.msra.mxu0 0
    %4058 = vmatprep.mubr.bf16.mxu0 0
    %4059 = vmatmul.mubr.bf16.gmra.mxu0 %v4012
    %v4060 = vpop.f32.mrf.mxu0
    %v4061 = vadd.f32 0.0, %v4060
    %v4062 = vpop.f32.mrf.mxu0
    %v4063 = vadd.f32 0.0, %v4062
    %v4064 = vpop.f32.mrf.mxu0
    %v4065 = vpop.f32.mrf.mxu0
    %4066 = vdwg.mxu0
    %4067 = vmatprep.subr.bf16.mxu0 0
    %4068 = vmatpush1.bf16.msra.mxu0 0
    %4069 = vmatprep.subr.bf16.mxu0 0
    %4070 = vmatpush1.bf16.msra.mxu0 0
    %4071 = vmatprep.subr.bf16.mxu0 0
    %4072 = vmatpush1.bf16.msra.mxu0 0
    %4073 = vmatprep.subr.bf16.mxu0 0
    %4074 = vmatpush1.bf16.msra.mxu0 0
    %4075 = vmatprep.subr.bf16.mxu0 0
    %4076 = vmatpush1.bf16.msra.mxu0 0
    %4077 = vmatprep.subr.bf16.mxu0 0
    %4078 = vmatpush1.bf16.msra.mxu0 0
    %4079 = vmatprep.subr.bf16.mxu0 0
    %4080 = vmatpush1.bf16.msra.mxu0 0
    %4081 = vmatprep.subr.bf16.mxu0 %v4024
    %4082 = vmatpush1.bf16.msra.mxu0 %v4021
    %4083 = vmatprep.subr.bf16.mxu0 0
    %4084 = vmatpush2.bf16.msra.mxu0 0
    %4085 = vmatprep.subr.bf16.mxu0 0
    %4086 = vmatpush2.bf16.msra.mxu0 0
    %4087 = vmatprep.subr.bf16.mxu0 0
    %4088 = vmatpush2.bf16.msra.mxu0 0
    %4089 = vmatprep.subr.bf16.mxu0 0
    %4090 = vmatpush2.bf16.msra.mxu0 0
    %4091 = vmatprep.subr.bf16.mxu0 0
    %4092 = vmatpush2.bf16.msra.mxu0 0
    %4093 = vmatprep.subr.bf16.mxu0 0
    %4094 = vmatpush2.bf16.msra.mxu0 0
    %4095 = vmatprep.subr.bf16.mxu0 0
    %4096 = vmatpush2.bf16.msra.mxu0 0
    %4097 = vmatprep.subr.bf16.mxu0 0
    %4098 = vmatpush2.bf16.msra.mxu0 0
    %4099 = vmatprep.mubr.bf16.mxu0 0
    %4100 = vmatmul.mubr.bf16.gmra.mxu0 %v4012
    %v4101 = vpop.f32.mrf.mxu0
    %v4102 = vadd.f32 0.0, %v4101
    %v4103 = vpop.f32.mrf.mxu0
    %v4104 = vadd.f32 0.0, %v4103
    %v4105 = vpop.f32.mrf.mxu0
    %v4106 = vpop.f32.mrf.mxu0
    %4107 = vdwg.mxu0
    %v4108 = vand.u32 2147483647, %v4061
    %vm4109 = vcmp.le.f32.partialorder %v4108, 0.7853982
    %vm4110 = vcmp.lt.s32.totalorder %v4061, 0
    %v4111 = vand.u32 %v4061, 2139095040
    %v4112 = vshrl.u32 %v4111, 23
    %v4113 = vsub.s32 %v4112, 127
    %v4114 = vand.u32 2147483647, %v4061
    %v4115 = vand.u32 %v4114, 8388607
    %v4116 = vor.u32 %v4115, 8388608
    %v4117 = vsub.s32 0, %v4116
    %v4118 = vadd.s32 %v4113, 1
    %vm4119 = vcmp.gt.s32.totalorder %v4118, 0
    %v4120 = vsel %vm4119, %v4118, 0
    %v4121 = vshrl.u32 %v4120, 5
    %v4122 = vand.u32 %v4120, 31
    %v4123 = vsub.s32 32, %v4122
    %v4124 = vshrl.u32 683565275, %v4123
    %v4125 = vshll.u32 683565275, %v4122
    %v4126 = vshrl.u32 2475754826, %v4123
    %v4127 = vor.u32 %v4125, %v4126
    %v4128 = vshll.u32 2475754826, %v4122
    %v4129 = vshrl.u32 2131351028, %v4123
    %v4130 = vor.u32 %v4128, %v4129
    %v4131 = vshll.u32 2131351028, %v4122
    %v4132 = vshrl.u32 2102212464, %v4123
    %v4133 = vor.u32 %v4131, %v4132
    %v4134 = vshll.u32 2102212464, %v4122
    %v4135 = vshrl.u32 920167782, %v4123
    %v4136 = vor.u32 %v4134, %v4135
    %v4137 = vshll.u32 920167782, %v4122
    %v4138 = vshrl.u32 1326507024, %v4123
    %v4139 = vor.u32 %v4137, %v4138
    %vm4140 = vcmp.lt.s32.totalorder %v4121, 1
    %vm4141 = vcmp.lt.s32.totalorder %v4121, 2
    %vm4142 = vcmp.lt.s32.totalorder %v4121, 3
    %vm4143 = vcmp.lt.s32.totalorder %v4121, 4
    %v4144 = vsel %vm4140, %v4124, %v4127
    %v4145 = vsel %vm4143, %v4133, 2102212464
    %v4146 = vsel %vm4142, %v4130, %v4145
    %v4147 = vsel %vm4141, %v4144, %v4146
    %v4148 = vsel %vm4140, %v4127, %v4130
    %v4149 = vsel %vm4143, %v4136, 920167782
    %v4150 = vsel %vm4142, %v4133, %v4149
    %v4151 = vsel %vm4141, %v4148, %v4150
    %v4152 = vsel %vm4140, %v4130, %v4133
    %v4153 = vsel %vm4143, %v4139, 1326507024
    %v4154 = vsel %vm4142, %v4136, %v4153
    %v4155 = vsel %vm4141, %v4152, %v4154
    %v4156 = vshll.u32 %v4116, 8
    %v4157 = vmul.u32.u64.compose %v4156, %v4155
    %v4158 = vextract.low.u32 %v4157
    %v4159 = vextract.high.u32 %v4157
    %v4160 = vmul.u32.u64.compose %v4156, %v4151
    %v4161 = vextract.low.u32 %v4160
    %v4162 = vextract.high.u32 %v4160
    %v4163 = vmul.u32 %v4156, %v4147
    %v4164 = vadd.s32 %v4159, %v4161
    %vm4165 = vc.u32 %v4159, %v4161
    %v4166 = vadd.s32 %v4162, 1
    %v4167 = vsel %vm4165, %v4166, %v4162
    %v4168 = vadd.s32 %v4163, %v4167
    %v4169 = vadd.s32 %v4168, 536870912
    %v4170 = vshrl.u32 %v4169, 30
    %v4171 = vshll.u32 %v4170, 30
    %v4172 = vsub.s32 %v4168, %v4171
    %vm4173 = vcmp.lt.s32.totalorder %v4172, 0
    %v4174 = vsub.s32 0, %v4172
    %v4175 = vsel %vm4173, %v4174, %v4172
    %v4176 = vclz %v4175
    %v4177 = vsub.s32 %v4176, 2
    %vm4178 = vcmp.gt.s32.totalorder 0, %v4177
    %v4179 = vsel %vm4178, 0, %v4177
    %v4180 = vsub.s32 32, %v4179
    %v4181 = vshll.u32 %v4172, %v4179
    %v4182 = vshrl.u32 %v4164, %v4180
    %v4183 = vor.u32 %v4181, %v4182
    %v4184 = vsub.s32 4294967266, %v4179
    %v4185 = vadd.s32 %v4184, 127
    %v4186 = vshll.u32 %v4185, 23
    %v4187 = vor.u32 4788187, %v4186
    %v4188 = vand.u32 2147483647, %v4187
    %v4190 = vcvt.s32.f32 %v4183
    %v4191 = vmul.f32 %v4190, %v4188
    %v4192 = vxor.u32 %v4191, 2147483648
    %v4193 = vsel %vm4110, %v4192, %v4191
    %v4194 = vsub.s32 4, %v4170
    %v4195 = vsel %vm4110, %v4194, %v4170
    %v4196 = vsel %vm4109, %v4061, %v4193
    %v4197 = vsel %vm4109, 0, %v4195
    %v4198 = vcosq.f32.pop %v4196
    %v4199 = vsinq.f32.pop %v4196
    %vm4200 = vweird.f32 %v4061
    %v4201 = vand.u32 %v4197, 3
    %vm4202 = vcmp.lt.s32.totalorder %v4201, 2
    %vm4203 = vcmp.eq.s32.totalorder %v4201, 0
    %v4204 = vxor.u32 %v4199, 2147483648
    %v4205 = vsel %vm4203, %v4198, %v4204
    %vm4206 = vcmp.eq.s32.totalorder %v4201, 2
    %v4207 = vxor.u32 %v4198, 2147483648
    %v4208 = vsel %vm4206, %v4207, %v4199
    %v4209 = vsel %vm4202, %v4205, %v4208
    %v4210 = vsel %vm4200, nan, %v4209
    %v4211 = vand.u32 2147483647, %v4063
    %vm4212 = vcmp.le.f32.partialorder %v4211, 0.7853982
    %vm4213 = vcmp.lt.s32.totalorder %v4063, 0
    %v4214 = vand.u32 %v4063, 2139095040
    %v4215 = vshrl.u32 %v4214, 23
    %v4216 = vsub.s32 %v4215, 127
    %v4217 = vand.u32 2147483647, %v4063
    %v4218 = vand.u32 %v4217, 8388607
    %v4219 = vor.u32 %v4218, 8388608
    %v4220 = vsub.s32 0, %v4219
    %v4221 = vadd.s32 %v4216, 1
    %vm4222 = vcmp.gt.s32.totalorder %v4221, 0
    %v4223 = vsel %vm4222, %v4221, 0
    %v4224 = vshrl.u32 %v4223, 5
    %v4225 = vand.u32 %v4223, 31
    %v4226 = vsub.s32 32, %v4225
    %v4227 = vshrl.u32 683565275, %v4226
    %v4228 = vshll.u32 683565275, %v4225
    %v4229 = vshrl.u32 2475754826, %v4226
    %v4230 = vor.u32 %v4228, %v4229
    %v4231 = vshll.u32 2475754826, %v4225
    %v4232 = vshrl.u32 2131351028, %v4226
    %v4233 = vor.u32 %v4231, %v4232
    %v4234 = vshll.u32 2131351028, %v4225
    %v4235 = vshrl.u32 2102212464, %v4226
    %v4236 = vor.u32 %v4234, %v4235
    %v4237 = vshll.u32 2102212464, %v4225
    %v4238 = vshrl.u32 920167782, %v4226
    %v4239 = vor.u32 %v4237, %v4238
    %v4240 = vshll.u32 920167782, %v4225
    %v4241 = vshrl.u32 1326507024, %v4226
    %v4242 = vor.u32 %v4240, %v4241
    %vm4243 = vcmp.lt.s32.totalorder %v4224, 1
    %vm4244 = vcmp.lt.s32.totalorder %v4224, 2
    %vm4245 = vcmp.lt.s32.totalorder %v4224, 3
    %vm4246 = vcmp.lt.s32.totalorder %v4224, 4
    %v4247 = vsel %vm4243, %v4227, %v4230
    %v4248 = vsel %vm4246, %v4236, 2102212464
    %v4249 = vsel %vm4245, %v4233, %v4248
    %v4250 = vsel %vm4244, %v4247, %v4249
    %v4251 = vsel %vm4243, %v4230, %v4233
    %v4252 = vsel %vm4246, %v4239, 920167782
    %v4253 = vsel %vm4245, %v4236, %v4252
    %v4254 = vsel %vm4244, %v4251, %v4253
    %v4255 = vsel %vm4243, %v4233, %v4236
    %v4256 = vsel %vm4246, %v4242, 1326507024
    %v4257 = vsel %vm4245, %v4239, %v4256
    %v4258 = vsel %vm4244, %v4255, %v4257
    %v4259 = vshll.u32 %v4219, 8
    %v4260 = vmul.u32.u64.compose %v4259, %v4258
    %v4261 = vextract.low.u32 %v4260
    %v4262 = vextract.high.u32 %v4260
    %v4263 = vmul.u32.u64.compose %v4259, %v4254
    %v4264 = vextract.low.u32 %v4263
    %v4265 = vextract.high.u32 %v4263
    %v4266 = vmul.u32 %v4259, %v4250
    %v4267 = vadd.s32 %v4262, %v4264
    %vm4268 = vc.u32 %v4262, %v4264
    %v4269 = vadd.s32 %v4265, 1
    %v4270 = vsel %vm4268, %v4269, %v4265
    %v4271 = vadd.s32 %v4266, %v4270
    %v4272 = vadd.s32 %v4271, 536870912
    %v4273 = vshrl.u32 %v4272, 30
    %v4274 = vshll.u32 %v4273, 30
    %v4275 = vsub.s32 %v4271, %v4274
    %vm4276 = vcmp.lt.s32.totalorder %v4275, 0
    %v4277 = vsub.s32 0, %v4275
    %v4278 = vsel %vm4276, %v4277, %v4275
    %v4279 = vclz %v4278
    %v4280 = vsub.s32 %v4279, 2
    %vm4281 = vcmp.gt.s32.totalorder 0, %v4280
    %v4282 = vsel %vm4281, 0, %v4280
    %v4283 = vsub.s32 32, %v4282
    %v4284 = vshll.u32 %v4275, %v4282
    %v4285 = vshrl.u32 %v4267, %v4283
    %v4286 = vor.u32 %v4284, %v4285
    %v4287 = vsub.s32 4294967266, %v4282
    %v4288 = vadd.s32 %v4287, 127
    %v4289 = vshll.u32 %v4288, 23
    %v4290 = vor.u32 4788187, %v4289
    %v4291 = vand.u32 2147483647, %v4290
    %v4293 = vcvt.s32.f32 %v4286
    %v4294 = vmul.f32 %v4293, %v4291
    %v4295 = vxor.u32 %v4294, 2147483648
    %v4296 = vsel %vm4213, %v4295, %v4294
    %v4297 = vsub.s32 4, %v4273
    %v4298 = vsel %vm4213, %v4297, %v4273
    %v4299 = vsel %vm4212, %v4063, %v4296
    %v4300 = vsel %vm4212, 0, %v4298
    %v4301 = vcosq.f32.pop %v4299
    %v4302 = vsinq.f32.pop %v4299
    %vm4303 = vweird.f32 %v4063
    %v4304 = vand.u32 %v4300, 3
    %vm4305 = vcmp.lt.s32.totalorder %v4304, 2
    %vm4306 = vcmp.eq.s32.totalorder %v4304, 0
    %v4307 = vxor.u32 %v4302, 2147483648
    %v4308 = vsel %vm4306, %v4301, %v4307
    %vm4309 = vcmp.eq.s32.totalorder %v4304, 2
    %v4310 = vxor.u32 %v4301, 2147483648
    %v4311 = vsel %vm4309, %v4310, %v4302
    %v4312 = vsel %vm4305, %v4308, %v4311
    %v4313 = vsel %vm4303, nan, %v4312
    %v4314 = vand.u32 2147483647, %v4102
    %vm4315 = vcmp.le.f32.partialorder %v4314, 0.7853982
    %vm4316 = vcmp.lt.s32.totalorder %v4102, 0
    %v4317 = vand.u32 %v4102, 2139095040
    %v4318 = vshrl.u32 %v4317, 23
    %v4319 = vsub.s32 %v4318, 127
    %v4320 = vand.u32 2147483647, %v4102
    %v4321 = vand.u32 %v4320, 8388607
    %v4322 = vor.u32 %v4321, 8388608
    %v4323 = vsub.s32 0, %v4322
    %v4324 = vadd.s32 %v4319, 1
    %vm4325 = vcmp.gt.s32.totalorder %v4324, 0
    %v4326 = vsel %vm4325, %v4324, 0
    %v4327 = vshrl.u32 %v4326, 5
    %v4328 = vand.u32 %v4326, 31
    %v4329 = vsub.s32 32, %v4328
    %v4330 = vshrl.u32 683565275, %v4329
    %v4331 = vshll.u32 683565275, %v4328
    %v4332 = vshrl.u32 2475754826, %v4329
    %v4333 = vor.u32 %v4331, %v4332
    %v4334 = vshll.u32 2475754826, %v4328
    %v4335 = vshrl.u32 2131351028, %v4329
    %v4336 = vor.u32 %v4334, %v4335
    %v4337 = vshll.u32 2131351028, %v4328
    %v4338 = vshrl.u32 2102212464, %v4329
    %v4339 = vor.u32 %v4337, %v4338
    %v4340 = vshll.u32 2102212464, %v4328
    %v4341 = vshrl.u32 920167782, %v4329
    %v4342 = vor.u32 %v4340, %v4341
    %v4343 = vshll.u32 920167782, %v4328
    %v4344 = vshrl.u32 1326507024, %v4329
    %v4345 = vor.u32 %v4343, %v4344
    %vm4346 = vcmp.lt.s32.totalorder %v4327, 1
    %vm4347 = vcmp.lt.s32.totalorder %v4327, 2
    %vm4348 = vcmp.lt.s32.totalorder %v4327, 3
    %vm4349 = vcmp.lt.s32.totalorder %v4327, 4
    %v4350 = vsel %vm4346, %v4330, %v4333
    %v4351 = vsel %vm4349, %v4339, 2102212464
    %v4352 = vsel %vm4348, %v4336, %v4351
    %v4353 = vsel %vm4347, %v4350, %v4352
    %v4354 = vsel %vm4346, %v4333, %v4336
    %v4355 = vsel %vm4349, %v4342, 920167782
    %v4356 = vsel %vm4348, %v4339, %v4355
    %v4357 = vsel %vm4347, %v4354, %v4356
    %v4358 = vsel %vm4346, %v4336, %v4339
    %v4359 = vsel %vm4349, %v4345, 1326507024
    %v4360 = vsel %vm4348, %v4342, %v4359
    %v4361 = vsel %vm4347, %v4358, %v4360
    %v4362 = vshll.u32 %v4322, 8
    %v4363 = vmul.u32.u64.compose %v4362, %v4361
    %v4364 = vextract.low.u32 %v4363
    %v4365 = vextract.high.u32 %v4363
    %v4366 = vmul.u32.u64.compose %v4362, %v4357
    %v4367 = vextract.low.u32 %v4366
    %v4368 = vextract.high.u32 %v4366
    %v4369 = vmul.u32 %v4362, %v4353
    %v4370 = vadd.s32 %v4365, %v4367
    %vm4371 = vc.u32 %v4365, %v4367
    %v4372 = vadd.s32 %v4368, 1
    %v4373 = vsel %vm4371, %v4372, %v4368
    %v4374 = vadd.s32 %v4369, %v4373
    %v4375 = vadd.s32 %v4374, 536870912
    %v4376 = vshrl.u32 %v4375, 30
    %v4377 = vshll.u32 %v4376, 30
    %v4378 = vsub.s32 %v4374, %v4377
    %vm4379 = vcmp.lt.s32.totalorder %v4378, 0
    %v4380 = vsub.s32 0, %v4378
    %v4381 = vsel %vm4379, %v4380, %v4378
    %v4382 = vclz %v4381
    %v4383 = vsub.s32 %v4382, 2
    %vm4384 = vcmp.gt.s32.totalorder 0, %v4383
    %v4385 = vsel %vm4384, 0, %v4383
    %v4386 = vsub.s32 32, %v4385
    %v4387 = vshll.u32 %v4378, %v4385
    %v4388 = vshrl.u32 %v4370, %v4386
    %v4389 = vor.u32 %v4387, %v4388
    %v4390 = vsub.s32 4294967266, %v4385
    %v4391 = vadd.s32 %v4390, 127
    %v4392 = vshll.u32 %v4391, 23
    %v4393 = vor.u32 4788187, %v4392
    %v4394 = vand.u32 2147483647, %v4393
    %v4396 = vcvt.s32.f32 %v4389
    %v4397 = vmul.f32 %v4396, %v4394
    %v4398 = vxor.u32 %v4397, 2147483648
    %v4399 = vsel %vm4316, %v4398, %v4397
    %v4400 = vsub.s32 4, %v4376
    %v4401 = vsel %vm4316, %v4400, %v4376
    %v4402 = vsel %vm4315, %v4102, %v4399
    %v4403 = vsel %vm4315, 0, %v4401
    %v4404 = vcosq.f32.pop %v4402
    %v4405 = vsinq.f32.pop %v4402
    %vm4406 = vweird.f32 %v4102
    %v4407 = vand.u32 %v4403, 3
    %vm4408 = vcmp.lt.s32.totalorder %v4407, 2
    %vm4409 = vcmp.eq.s32.totalorder %v4407, 0
    %v4410 = vxor.u32 %v4405, 2147483648
    %v4411 = vsel %vm4409, %v4404, %v4410
    %vm4412 = vcmp.eq.s32.totalorder %v4407, 2
    %v4413 = vxor.u32 %v4404, 2147483648
    %v4414 = vsel %vm4412, %v4413, %v4405
    %v4415 = vsel %vm4408, %v4411, %v4414
    %v4416 = vsel %vm4406, nan, %v4415
    %v4417 = vand.u32 2147483647, %v4104
    %vm4418 = vcmp.le.f32.partialorder %v4417, 0.7853982
    %vm4419 = vcmp.lt.s32.totalorder %v4104, 0
    %v4420 = vand.u32 %v4104, 2139095040
    %v4421 = vshrl.u32 %v4420, 23
    %v4422 = vsub.s32 %v4421, 127
    %v4423 = vand.u32 2147483647, %v4104
    %v4424 = vand.u32 %v4423, 8388607
    %v4425 = vor.u32 %v4424, 8388608
    %v4426 = vsub.s32 0, %v4425
    %v4427 = vadd.s32 %v4422, 1
    %vm4428 = vcmp.gt.s32.totalorder %v4427, 0
    %v4429 = vsel %vm4428, %v4427, 0
    %v4430 = vshrl.u32 %v4429, 5
    %v4431 = vand.u32 %v4429, 31
    %v4432 = vsub.s32 32, %v4431
    %v4433 = vshrl.u32 683565275, %v4432
    %v4434 = vshll.u32 683565275, %v4431
    %v4435 = vshrl.u32 2475754826, %v4432
    %v4436 = vor.u32 %v4434, %v4435
    %v4437 = vshll.u32 2475754826, %v4431
    %v4438 = vshrl.u32 2131351028, %v4432
    %v4439 = vor.u32 %v4437, %v4438
    %v4440 = vshll.u32 2131351028, %v4431
    %v4441 = vshrl.u32 2102212464, %v4432
    %v4442 = vor.u32 %v4440, %v4441
    %v4443 = vshll.u32 2102212464, %v4431
    %v4444 = vshrl.u32 920167782, %v4432
    %v4445 = vor.u32 %v4443, %v4444
    %v4446 = vshll.u32 920167782, %v4431
    %v4447 = vshrl.u32 1326507024, %v4432
    %v4448 = vor.u32 %v4446, %v4447
    %vm4449 = vcmp.lt.s32.totalorder %v4430, 1
    %vm4450 = vcmp.lt.s32.totalorder %v4430, 2
    %vm4451 = vcmp.lt.s32.totalorder %v4430, 3
    %vm4452 = vcmp.lt.s32.totalorder %v4430, 4
    %v4453 = vsel %vm4449, %v4433, %v4436
    %v4454 = vsel %vm4452, %v4442, 2102212464
    %v4455 = vsel %vm4451, %v4439, %v4454
    %v4456 = vsel %vm4450, %v4453, %v4455
    %v4457 = vsel %vm4449, %v4436, %v4439
    %v4458 = vsel %vm4452, %v4445, 920167782
    %v4459 = vsel %vm4451, %v4442, %v4458
    %v4460 = vsel %vm4450, %v4457, %v4459
    %v4461 = vsel %vm4449, %v4439, %v4442
    %v4462 = vsel %vm4452, %v4448, 1326507024
    %v4463 = vsel %vm4451, %v4445, %v4462
    %v4464 = vsel %vm4450, %v4461, %v4463
    %v4465 = vshll.u32 %v4425, 8
    %v4466 = vmul.u32.u64.compose %v4465, %v4464
    %v4467 = vextract.low.u32 %v4466
    %v4468 = vextract.high.u32 %v4466
    %v4469 = vmul.u32.u64.compose %v4465, %v4460
    %v4470 = vextract.low.u32 %v4469
    %v4471 = vextract.high.u32 %v4469
    %v4472 = vmul.u32 %v4465, %v4456
    %v4473 = vadd.s32 %v4468, %v4470
    %vm4474 = vc.u32 %v4468, %v4470
    %v4475 = vadd.s32 %v4471, 1
    %v4476 = vsel %vm4474, %v4475, %v4471
    %v4477 = vadd.s32 %v4472, %v4476
    %v4478 = vadd.s32 %v4477, 536870912
    %v4479 = vshrl.u32 %v4478, 30
    %v4480 = vshll.u32 %v4479, 30
    %v4481 = vsub.s32 %v4477, %v4480
    %vm4482 = vcmp.lt.s32.totalorder %v4481, 0
    %v4483 = vsub.s32 0, %v4481
    %v4484 = vsel %vm4482, %v4483, %v4481
    %v4485 = vclz %v4484
    %v4486 = vsub.s32 %v4485, 2
    %vm4487 = vcmp.gt.s32.totalorder 0, %v4486
    %v4488 = vsel %vm4487, 0, %v4486
    %v4489 = vsub.s32 32, %v4488
    %v4490 = vshll.u32 %v4481, %v4488
    %v4491 = vshrl.u32 %v4473, %v4489
    %v4492 = vor.u32 %v4490, %v4491
    %v4493 = vsub.s32 4294967266, %v4488
    %v4494 = vadd.s32 %v4493, 127
    %v4495 = vshll.u32 %v4494, 23
    %v4496 = vor.u32 4788187, %v4495
    %v4497 = vand.u32 2147483647, %v4496
    %v4499 = vcvt.s32.f32 %v4492
    %v4500 = vmul.f32 %v4499, %v4497
    %v4501 = vxor.u32 %v4500, 2147483648
    %v4502 = vsel %vm4419, %v4501, %v4500
    %v4503 = vsub.s32 4, %v4479
    %v4504 = vsel %vm4419, %v4503, %v4479
    %v4505 = vsel %vm4418, %v4104, %v4502
    %v4506 = vsel %vm4418, 0, %v4504
    %v4507 = vcosq.f32.pop %v4505
    %v4508 = vsinq.f32.pop %v4505
    %vm4509 = vweird.f32 %v4104
    %v4510 = vand.u32 %v4506, 3
    %vm4511 = vcmp.lt.s32.totalorder %v4510, 2
    %vm4512 = vcmp.eq.s32.totalorder %v4510, 0
    %v4513 = vxor.u32 %v4508, 2147483648
    %v4514 = vsel %vm4512, %v4507, %v4513
    %vm4515 = vcmp.eq.s32.totalorder %v4510, 2
    %v4516 = vxor.u32 %v4507, 2147483648
    %v4517 = vsel %vm4515, %v4516, %v4508
    %v4518 = vsel %vm4511, %v4514, %v4517
    %v4519 = vsel %vm4509, nan, %v4518
    %v4520 = vmul.f32 %v4210, 1.5414666
    %v4521 = vmul.f32 %v4313, 1.5414666
    %v4522 = vmul.f32 %v4416, 1.5414666
    %v4523 = vmul.f32 %v4519, 1.5414666
    %v4524 = vsub.f32 1.5940298, %v4520
    %v4525 = vsub.f32 1.5940298, %v4521
    %v4526 = vsub.f32 1.5940298, %v4522
    %v4527 = vsub.f32 1.5940298, %v4523
    %v4528 = vrcp.pop %v4524
    %v4529 = vrcp.pop %v4525
    %v4530 = vrcp.pop %v4526
    %v4531 = vrcp.pop %v4527
    %v4532 = vmul.f32 %v4528, 0.05090673
    %v4533 = vmul.f32 %v4529, 0.05090673
    %v4534 = vmul.f32 %v4530, 0.05090673
    %v4535 = vmul.f32 %v4531, 0.05090673
    %v4536 = vsub.f32 1.0, %v4532
    %v4537 = vsub.f32 1.0, %v4533
    %v4538 = vsub.f32 1.0, %v4534
    %v4539 = vsub.f32 1.0, %v4535
    %s4540 = sadd.s32 %s606, 7
    %s4541 = sld [smem:[#allocation3 + %s4540]]
    %v4542 = vstv %s4541
    %v4543 = vmul.f32 %v4542, %v4536
    %v4544 = vmul.f32 %v4542, %v4537
    %v4545 = vmul.f32 %v4542, %v4538
    %v4546 = vmul.f32 %v4542, %v4539
    %v4547 = vadd.f32 %v3985, %v4543
    %v4548 = vadd.f32 %v3986, %v4544
    %v4549 = vadd.f32 %v3987, %v4545
    %v4550 = vadd.f32 %v3988, %v4546
    %s4551 = scalar_lea.vmem %s2, 32
    %v4552 = vld [vmem:[%s4551] sm:$0xf]
    %s4553 = scalar_lea.vmem [#allocation7], 64
    %v4554 = vld [vmem:[%s4553] sm:$0xff]
    %v4556 = vcombine.high %v4554, %v4554
    %v4558 = vunpack.c.l.s4 1983009808
    %v4559 = vunpack.c.0.s8 %v4558
    %v4560 = vlaneseq
    %v4561 = vshrl.u32 %v4560, 7
    %v4562 = vsub.s32 %v4559, %v4561
    %v4563 = vrot.slane %v4554, %v4562
    %v4565 = vunpack.c.l.s4 1983009808
    %v4566 = vunpack.c.0.s8 %v4565
    %v4567 = vlaneseq
    %v4568 = vshrl.u32 %v4567, 7
    %v4569 = vsub.s32 %v4566, %v4568
    %v4570 = vrot.slane %v4556, %v4569
    %v4571 = vcombine.high %v4563, %v4563
    %v4572 = vcombine.high %v4570, %v4570
    %v4574 = vsel %vm75, %v4552, 0
    %v4577 = vsel %vm79, %v4563, 0
    %v4580 = vsel %vm79, %v4571, 0
    %v4583 = vsel %vm79, %v4570, 0
    %v4586 = vsel %vm79, %v4572, 0
    %4588 = vmatprep.subr.bf16.mxu0 0
    %4589 = vmatpush1.bf16.msra.mxu0 0
    %4590 = vmatprep.subr.bf16.mxu0 0
    %4591 = vmatpush1.bf16.msra.mxu0 0
    %4592 = vmatprep.subr.bf16.mxu0 0
    %4593 = vmatpush1.bf16.msra.mxu0 0
    %4594 = vmatprep.subr.bf16.mxu0 0
    %4595 = vmatpush1.bf16.msra.mxu0 0
    %4596 = vmatprep.subr.bf16.mxu0 0
    %4597 = vmatpush1.bf16.msra.mxu0 0
    %4598 = vmatprep.subr.bf16.mxu0 0
    %4599 = vmatpush1.bf16.msra.mxu0 0
    %4600 = vmatprep.subr.bf16.mxu0 0
    %4601 = vmatpush1.bf16.msra.mxu0 0
    %4602 = vmatprep.subr.bf16.mxu0 %v4580
    %4603 = vmatpush1.bf16.msra.mxu0 %v4577
    %4604 = vmatprep.subr.bf16.mxu0 0
    %4605 = vmatpush2.bf16.msra.mxu0 0
    %4606 = vmatprep.subr.bf16.mxu0 0
    %4607 = vmatpush2.bf16.msra.mxu0 0
    %4608 = vmatprep.subr.bf16.mxu0 0
    %4609 = vmatpush2.bf16.msra.mxu0 0
    %4610 = vmatprep.subr.bf16.mxu0 0
    %4611 = vmatpush2.bf16.msra.mxu0 0
    %4612 = vmatprep.subr.bf16.mxu0 0
    %4613 = vmatpush2.bf16.msra.mxu0 0
    %4614 = vmatprep.subr.bf16.mxu0 0
    %4615 = vmatpush2.bf16.msra.mxu0 0
    %4616 = vmatprep.subr.bf16.mxu0 0
    %4617 = vmatpush2.bf16.msra.mxu0 0
    %4618 = vmatprep.subr.bf16.mxu0 0
    %4619 = vmatpush2.bf16.msra.mxu0 0
    %4620 = vmatprep.mubr.bf16.mxu0 0
    %4621 = vmatmul.mubr.bf16.gmra.mxu0 %v4574
    %v4622 = vpop.f32.mrf.mxu0
    %v4623 = vadd.f32 0.0, %v4622
    %v4624 = vpop.f32.mrf.mxu0
    %v4625 = vadd.f32 0.0, %v4624
    %v4626 = vpop.f32.mrf.mxu0
    %v4627 = vpop.f32.mrf.mxu0
    %4628 = vdwg.mxu0
    %4629 = vmatprep.subr.bf16.mxu0 0
    %4630 = vmatpush1.bf16.msra.mxu0 0
    %4631 = vmatprep.subr.bf16.mxu0 0
    %4632 = vmatpush1.bf16.msra.mxu0 0
    %4633 = vmatprep.subr.bf16.mxu0 0
    %4634 = vmatpush1.bf16.msra.mxu0 0
    %4635 = vmatprep.subr.bf16.mxu0 0
    %4636 = vmatpush1.bf16.msra.mxu0 0
    %4637 = vmatprep.subr.bf16.mxu0 0
    %4638 = vmatpush1.bf16.msra.mxu0 0
    %4639 = vmatprep.subr.bf16.mxu0 0
    %4640 = vmatpush1.bf16.msra.mxu0 0
    %4641 = vmatprep.subr.bf16.mxu0 0
    %4642 = vmatpush1.bf16.msra.mxu0 0
    %4643 = vmatprep.subr.bf16.mxu0 %v4586
    %4644 = vmatpush1.bf16.msra.mxu0 %v4583
    %4645 = vmatprep.subr.bf16.mxu0 0
    %4646 = vmatpush2.bf16.msra.mxu0 0
    %4647 = vmatprep.subr.bf16.mxu0 0
    %4648 = vmatpush2.bf16.msra.mxu0 0
    %4649 = vmatprep.subr.bf16.mxu0 0
    %4650 = vmatpush2.bf16.msra.mxu0 0
    %4651 = vmatprep.subr.bf16.mxu0 0
    %4652 = vmatpush2.bf16.msra.mxu0 0
    %4653 = vmatprep.subr.bf16.mxu0 0
    %4654 = vmatpush2.bf16.msra.mxu0 0
    %4655 = vmatprep.subr.bf16.mxu0 0
    %4656 = vmatpush2.bf16.msra.mxu0 0
    %4657 = vmatprep.subr.bf16.mxu0 0
    %4658 = vmatpush2.bf16.msra.mxu0 0
    %4659 = vmatprep.subr.bf16.mxu0 0
    %4660 = vmatpush2.bf16.msra.mxu0 0
    %4661 = vmatprep.mubr.bf16.mxu0 0
    %4662 = vmatmul.mubr.bf16.gmra.mxu0 %v4574
    %v4663 = vpop.f32.mrf.mxu0
    %v4664 = vadd.f32 0.0, %v4663
    %v4665 = vpop.f32.mrf.mxu0
    %v4666 = vadd.f32 0.0, %v4665
    %v4667 = vpop.f32.mrf.mxu0
    %v4668 = vpop.f32.mrf.mxu0
    %4669 = vdwg.mxu0
    %v4670 = vand.u32 2147483647, %v4623
    %vm4671 = vcmp.le.f32.partialorder %v4670, 0.7853982
    %vm4672 = vcmp.lt.s32.totalorder %v4623, 0
    %v4673 = vand.u32 %v4623, 2139095040
    %v4674 = vshrl.u32 %v4673, 23
    %v4675 = vsub.s32 %v4674, 127
    %v4676 = vand.u32 2147483647, %v4623
    %v4677 = vand.u32 %v4676, 8388607
    %v4678 = vor.u32 %v4677, 8388608
    %v4679 = vsub.s32 0, %v4678
    %v4680 = vadd.s32 %v4675, 1
    %vm4681 = vcmp.gt.s32.totalorder %v4680, 0
    %v4682 = vsel %vm4681, %v4680, 0
    %v4683 = vshrl.u32 %v4682, 5
    %v4684 = vand.u32 %v4682, 31
    %v4685 = vsub.s32 32, %v4684
    %v4686 = vshrl.u32 683565275, %v4685
    %v4687 = vshll.u32 683565275, %v4684
    %v4688 = vshrl.u32 2475754826, %v4685
    %v4689 = vor.u32 %v4687, %v4688
    %v4690 = vshll.u32 2475754826, %v4684
    %v4691 = vshrl.u32 2131351028, %v4685
    %v4692 = vor.u32 %v4690, %v4691
    %v4693 = vshll.u32 2131351028, %v4684
    %v4694 = vshrl.u32 2102212464, %v4685
    %v4695 = vor.u32 %v4693, %v4694
    %v4696 = vshll.u32 2102212464, %v4684
    %v4697 = vshrl.u32 920167782, %v4685
    %v4698 = vor.u32 %v4696, %v4697
    %v4699 = vshll.u32 920167782, %v4684
    %v4700 = vshrl.u32 1326507024, %v4685
    %v4701 = vor.u32 %v4699, %v4700
    %vm4702 = vcmp.lt.s32.totalorder %v4683, 1
    %vm4703 = vcmp.lt.s32.totalorder %v4683, 2
    %vm4704 = vcmp.lt.s32.totalorder %v4683, 3
    %vm4705 = vcmp.lt.s32.totalorder %v4683, 4
    %v4706 = vsel %vm4702, %v4686, %v4689
    %v4707 = vsel %vm4705, %v4695, 2102212464
    %v4708 = vsel %vm4704, %v4692, %v4707
    %v4709 = vsel %vm4703, %v4706, %v4708
    %v4710 = vsel %vm4702, %v4689, %v4692
    %v4711 = vsel %vm4705, %v4698, 920167782
    %v4712 = vsel %vm4704, %v4695, %v4711
    %v4713 = vsel %vm4703, %v4710, %v4712
    %v4714 = vsel %vm4702, %v4692, %v4695
    %v4715 = vsel %vm4705, %v4701, 1326507024
    %v4716 = vsel %vm4704, %v4698, %v4715
    %v4717 = vsel %vm4703, %v4714, %v4716
    %v4718 = vshll.u32 %v4678, 8
    %v4719 = vmul.u32.u64.compose %v4718, %v4717
    %v4720 = vextract.low.u32 %v4719
    %v4721 = vextract.high.u32 %v4719
    %v4722 = vmul.u32.u64.compose %v4718, %v4713
    %v4723 = vextract.low.u32 %v4722
    %v4724 = vextract.high.u32 %v4722
    %v4725 = vmul.u32 %v4718, %v4709
    %v4726 = vadd.s32 %v4721, %v4723
    %vm4727 = vc.u32 %v4721, %v4723
    %v4728 = vadd.s32 %v4724, 1
    %v4729 = vsel %vm4727, %v4728, %v4724
    %v4730 = vadd.s32 %v4725, %v4729
    %v4731 = vadd.s32 %v4730, 536870912
    %v4732 = vshrl.u32 %v4731, 30
    %v4733 = vshll.u32 %v4732, 30
    %v4734 = vsub.s32 %v4730, %v4733
    %vm4735 = vcmp.lt.s32.totalorder %v4734, 0
    %v4736 = vsub.s32 0, %v4734
    %v4737 = vsel %vm4735, %v4736, %v4734
    %v4738 = vclz %v4737
    %v4739 = vsub.s32 %v4738, 2
    %vm4740 = vcmp.gt.s32.totalorder 0, %v4739
    %v4741 = vsel %vm4740, 0, %v4739
    %v4742 = vsub.s32 32, %v4741
    %v4743 = vshll.u32 %v4734, %v4741
    %v4744 = vshrl.u32 %v4726, %v4742
    %v4745 = vor.u32 %v4743, %v4744
    %v4746 = vsub.s32 4294967266, %v4741
    %v4747 = vadd.s32 %v4746, 127
    %v4748 = vshll.u32 %v4747, 23
    %v4749 = vor.u32 4788187, %v4748
    %v4750 = vand.u32 2147483647, %v4749
    %v4752 = vcvt.s32.f32 %v4745
    %v4753 = vmul.f32 %v4752, %v4750
    %v4754 = vxor.u32 %v4753, 2147483648
    %v4755 = vsel %vm4672, %v4754, %v4753
    %v4756 = vsub.s32 4, %v4732
    %v4757 = vsel %vm4672, %v4756, %v4732
    %v4758 = vsel %vm4671, %v4623, %v4755
    %v4759 = vsel %vm4671, 0, %v4757
    %v4760 = vcosq.f32.pop %v4758
    %v4761 = vsinq.f32.pop %v4758
    %vm4762 = vweird.f32 %v4623
    %v4763 = vand.u32 %v4759, 3
    %vm4764 = vcmp.lt.s32.totalorder %v4763, 2
    %vm4765 = vcmp.eq.s32.totalorder %v4763, 0
    %v4766 = vxor.u32 %v4761, 2147483648
    %v4767 = vsel %vm4765, %v4760, %v4766
    %vm4768 = vcmp.eq.s32.totalorder %v4763, 2
    %v4769 = vxor.u32 %v4760, 2147483648
    %v4770 = vsel %vm4768, %v4769, %v4761
    %v4771 = vsel %vm4764, %v4767, %v4770
    %v4772 = vsel %vm4762, nan, %v4771
    %v4773 = vand.u32 2147483647, %v4625
    %vm4774 = vcmp.le.f32.partialorder %v4773, 0.7853982
    %vm4775 = vcmp.lt.s32.totalorder %v4625, 0
    %v4776 = vand.u32 %v4625, 2139095040
    %v4777 = vshrl.u32 %v4776, 23
    %v4778 = vsub.s32 %v4777, 127
    %v4779 = vand.u32 2147483647, %v4625
    %v4780 = vand.u32 %v4779, 8388607
    %v4781 = vor.u32 %v4780, 8388608
    %v4782 = vsub.s32 0, %v4781
    %v4783 = vadd.s32 %v4778, 1
    %vm4784 = vcmp.gt.s32.totalorder %v4783, 0
    %v4785 = vsel %vm4784, %v4783, 0
    %v4786 = vshrl.u32 %v4785, 5
    %v4787 = vand.u32 %v4785, 31
    %v4788 = vsub.s32 32, %v4787
    %v4789 = vshrl.u32 683565275, %v4788
    %v4790 = vshll.u32 683565275, %v4787
    %v4791 = vshrl.u32 2475754826, %v4788
    %v4792 = vor.u32 %v4790, %v4791
    %v4793 = vshll.u32 2475754826, %v4787
    %v4794 = vshrl.u32 2131351028, %v4788
    %v4795 = vor.u32 %v4793, %v4794
    %v4796 = vshll.u32 2131351028, %v4787
    %v4797 = vshrl.u32 2102212464, %v4788
    %v4798 = vor.u32 %v4796, %v4797
    %v4799 = vshll.u32 2102212464, %v4787
    %v4800 = vshrl.u32 920167782, %v4788
    %v4801 = vor.u32 %v4799, %v4800
    %v4802 = vshll.u32 920167782, %v4787
    %v4803 = vshrl.u32 1326507024, %v4788
    %v4804 = vor.u32 %v4802, %v4803
    %vm4805 = vcmp.lt.s32.totalorder %v4786, 1
    %vm4806 = vcmp.lt.s32.totalorder %v4786, 2
    %vm4807 = vcmp.lt.s32.totalorder %v4786, 3
    %vm4808 = vcmp.lt.s32.totalorder %v4786, 4
    %v4809 = vsel %vm4805, %v4789, %v4792
    %v4810 = vsel %vm4808, %v4798, 2102212464
    %v4811 = vsel %vm4807, %v4795, %v4810
    %v4812 = vsel %vm4806, %v4809, %v4811
    %v4813 = vsel %vm4805, %v4792, %v4795
    %v4814 = vsel %vm4808, %v4801, 920167782
    %v4815 = vsel %vm4807, %v4798, %v4814
    %v4816 = vsel %vm4806, %v4813, %v4815
    %v4817 = vsel %vm4805, %v4795, %v4798
    %v4818 = vsel %vm4808, %v4804, 1326507024
    %v4819 = vsel %vm4807, %v4801, %v4818
    %v4820 = vsel %vm4806, %v4817, %v4819
    %v4821 = vshll.u32 %v4781, 8
    %v4822 = vmul.u32.u64.compose %v4821, %v4820
    %v4823 = vextract.low.u32 %v4822
    %v4824 = vextract.high.u32 %v4822
    %v4825 = vmul.u32.u64.compose %v4821, %v4816
    %v4826 = vextract.low.u32 %v4825
    %v4827 = vextract.high.u32 %v4825
    %v4828 = vmul.u32 %v4821, %v4812
    %v4829 = vadd.s32 %v4824, %v4826
    %vm4830 = vc.u32 %v4824, %v4826
    %v4831 = vadd.s32 %v4827, 1
    %v4832 = vsel %vm4830, %v4831, %v4827
    %v4833 = vadd.s32 %v4828, %v4832
    %v4834 = vadd.s32 %v4833, 536870912
    %v4835 = vshrl.u32 %v4834, 30
    %v4836 = vshll.u32 %v4835, 30
    %v4837 = vsub.s32 %v4833, %v4836
    %vm4838 = vcmp.lt.s32.totalorder %v4837, 0
    %v4839 = vsub.s32 0, %v4837
    %v4840 = vsel %vm4838, %v4839, %v4837
    %v4841 = vclz %v4840
    %v4842 = vsub.s32 %v4841, 2
    %vm4843 = vcmp.gt.s32.totalorder 0, %v4842
    %v4844 = vsel %vm4843, 0, %v4842
    %v4845 = vsub.s32 32, %v4844
    %v4846 = vshll.u32 %v4837, %v4844
    %v4847 = vshrl.u32 %v4829, %v4845
    %v4848 = vor.u32 %v4846, %v4847
    %v4849 = vsub.s32 4294967266, %v4844
    %v4850 = vadd.s32 %v4849, 127
    %v4851 = vshll.u32 %v4850, 23
    %v4852 = vor.u32 4788187, %v4851
    %v4853 = vand.u32 2147483647, %v4852
    %v4855 = vcvt.s32.f32 %v4848
    %v4856 = vmul.f32 %v4855, %v4853
    %v4857 = vxor.u32 %v4856, 2147483648
    %v4858 = vsel %vm4775, %v4857, %v4856
    %v4859 = vsub.s32 4, %v4835
    %v4860 = vsel %vm4775, %v4859, %v4835
    %v4861 = vsel %vm4774, %v4625, %v4858
    %v4862 = vsel %vm4774, 0, %v4860
    %v4863 = vcosq.f32.pop %v4861
    %v4864 = vsinq.f32.pop %v4861
    %vm4865 = vweird.f32 %v4625
    %v4866 = vand.u32 %v4862, 3
    %vm4867 = vcmp.lt.s32.totalorder %v4866, 2
    %vm4868 = vcmp.eq.s32.totalorder %v4866, 0
    %v4869 = vxor.u32 %v4864, 2147483648
    %v4870 = vsel %vm4868, %v4863, %v4869
    %vm4871 = vcmp.eq.s32.totalorder %v4866, 2
    %v4872 = vxor.u32 %v4863, 2147483648
    %v4873 = vsel %vm4871, %v4872, %v4864
    %v4874 = vsel %vm4867, %v4870, %v4873
    %v4875 = vsel %vm4865, nan, %v4874
    %v4876 = vand.u32 2147483647, %v4664
    %vm4877 = vcmp.le.f32.partialorder %v4876, 0.7853982
    %vm4878 = vcmp.lt.s32.totalorder %v4664, 0
    %v4879 = vand.u32 %v4664, 2139095040
    %v4880 = vshrl.u32 %v4879, 23
    %v4881 = vsub.s32 %v4880, 127
    %v4882 = vand.u32 2147483647, %v4664
    %v4883 = vand.u32 %v4882, 8388607
    %v4884 = vor.u32 %v4883, 8388608
    %v4885 = vsub.s32 0, %v4884
    %v4886 = vadd.s32 %v4881, 1
    %vm4887 = vcmp.gt.s32.totalorder %v4886, 0
    %v4888 = vsel %vm4887, %v4886, 0
    %v4889 = vshrl.u32 %v4888, 5
    %v4890 = vand.u32 %v4888, 31
    %v4891 = vsub.s32 32, %v4890
    %v4892 = vshrl.u32 683565275, %v4891
    %v4893 = vshll.u32 683565275, %v4890
    %v4894 = vshrl.u32 2475754826, %v4891
    %v4895 = vor.u32 %v4893, %v4894
    %v4896 = vshll.u32 2475754826, %v4890
    %v4897 = vshrl.u32 2131351028, %v4891
    %v4898 = vor.u32 %v4896, %v4897
    %v4899 = vshll.u32 2131351028, %v4890
    %v4900 = vshrl.u32 2102212464, %v4891
    %v4901 = vor.u32 %v4899, %v4900
    %v4902 = vshll.u32 2102212464, %v4890
    %v4903 = vshrl.u32 920167782, %v4891
    %v4904 = vor.u32 %v4902, %v4903
    %v4905 = vshll.u32 920167782, %v4890
    %v4906 = vshrl.u32 1326507024, %v4891
    %v4907 = vor.u32 %v4905, %v4906
    %vm4908 = vcmp.lt.s32.totalorder %v4889, 1
    %vm4909 = vcmp.lt.s32.totalorder %v4889, 2
    %vm4910 = vcmp.lt.s32.totalorder %v4889, 3
    %vm4911 = vcmp.lt.s32.totalorder %v4889, 4
    %v4912 = vsel %vm4908, %v4892, %v4895
    %v4913 = vsel %vm4911, %v4901, 2102212464
    %v4914 = vsel %vm4910, %v4898, %v4913
    %v4915 = vsel %vm4909, %v4912, %v4914
    %v4916 = vsel %vm4908, %v4895, %v4898
    %v4917 = vsel %vm4911, %v4904, 920167782
    %v4918 = vsel %vm4910, %v4901, %v4917
    %v4919 = vsel %vm4909, %v4916, %v4918
    %v4920 = vsel %vm4908, %v4898, %v4901
    %v4921 = vsel %vm4911, %v4907, 1326507024
    %v4922 = vsel %vm4910, %v4904, %v4921
    %v4923 = vsel %vm4909, %v4920, %v4922
    %v4924 = vshll.u32 %v4884, 8
    %v4925 = vmul.u32.u64.compose %v4924, %v4923
    %v4926 = vextract.low.u32 %v4925
    %v4927 = vextract.high.u32 %v4925
    %v4928 = vmul.u32.u64.compose %v4924, %v4919
    %v4929 = vextract.low.u32 %v4928
    %v4930 = vextract.high.u32 %v4928
    %v4931 = vmul.u32 %v4924, %v4915
    %v4932 = vadd.s32 %v4927, %v4929
    %vm4933 = vc.u32 %v4927, %v4929
    %v4934 = vadd.s32 %v4930, 1
    %v4935 = vsel %vm4933, %v4934, %v4930
    %v4936 = vadd.s32 %v4931, %v4935
    %v4937 = vadd.s32 %v4936, 536870912
    %v4938 = vshrl.u32 %v4937, 30
    %v4939 = vshll.u32 %v4938, 30
    %v4940 = vsub.s32 %v4936, %v4939
    %vm4941 = vcmp.lt.s32.totalorder %v4940, 0
    %v4942 = vsub.s32 0, %v4940
    %v4943 = vsel %vm4941, %v4942, %v4940
    %v4944 = vclz %v4943
    %v4945 = vsub.s32 %v4944, 2
    %vm4946 = vcmp.gt.s32.totalorder 0, %v4945
    %v4947 = vsel %vm4946, 0, %v4945
    %v4948 = vsub.s32 32, %v4947
    %v4949 = vshll.u32 %v4940, %v4947
    %v4950 = vshrl.u32 %v4932, %v4948
    %v4951 = vor.u32 %v4949, %v4950
    %v4952 = vsub.s32 4294967266, %v4947
    %v4953 = vadd.s32 %v4952, 127
    %v4954 = vshll.u32 %v4953, 23
    %v4955 = vor.u32 4788187, %v4954
    %v4956 = vand.u32 2147483647, %v4955
    %v4958 = vcvt.s32.f32 %v4951
    %v4959 = vmul.f32 %v4958, %v4956
    %v4960 = vxor.u32 %v4959, 2147483648
    %v4961 = vsel %vm4878, %v4960, %v4959
    %v4962 = vsub.s32 4, %v4938
    %v4963 = vsel %vm4878, %v4962, %v4938
    %v4964 = vsel %vm4877, %v4664, %v4961
    %v4965 = vsel %vm4877, 0, %v4963
    %v4966 = vcosq.f32.pop %v4964
    %v4967 = vsinq.f32.pop %v4964
    %vm4968 = vweird.f32 %v4664
    %v4969 = vand.u32 %v4965, 3
    %vm4970 = vcmp.lt.s32.totalorder %v4969, 2
    %vm4971 = vcmp.eq.s32.totalorder %v4969, 0
    %v4972 = vxor.u32 %v4967, 2147483648
    %v4973 = vsel %vm4971, %v4966, %v4972
    %vm4974 = vcmp.eq.s32.totalorder %v4969, 2
    %v4975 = vxor.u32 %v4966, 2147483648
    %v4976 = vsel %vm4974, %v4975, %v4967
    %v4977 = vsel %vm4970, %v4973, %v4976
    %v4978 = vsel %vm4968, nan, %v4977
    %v4979 = vand.u32 2147483647, %v4666
    %vm4980 = vcmp.le.f32.partialorder %v4979, 0.7853982
    %vm4981 = vcmp.lt.s32.totalorder %v4666, 0
    %v4982 = vand.u32 %v4666, 2139095040
    %v4983 = vshrl.u32 %v4982, 23
    %v4984 = vsub.s32 %v4983, 127
    %v4985 = vand.u32 2147483647, %v4666
    %v4986 = vand.u32 %v4985, 8388607
    %v4987 = vor.u32 %v4986, 8388608
    %v4988 = vsub.s32 0, %v4987
    %v4989 = vadd.s32 %v4984, 1
    %vm4990 = vcmp.gt.s32.totalorder %v4989, 0
    %v4991 = vsel %vm4990, %v4989, 0
    %v4992 = vshrl.u32 %v4991, 5
    %v4993 = vand.u32 %v4991, 31
    %v4994 = vsub.s32 32, %v4993
    %v4995 = vshrl.u32 683565275, %v4994
    %v4996 = vshll.u32 683565275, %v4993
    %v4997 = vshrl.u32 2475754826, %v4994
    %v4998 = vor.u32 %v4996, %v4997
    %v4999 = vshll.u32 2475754826, %v4993
    %v5000 = vshrl.u32 2131351028, %v4994
    %v5001 = vor.u32 %v4999, %v5000
    %v5002 = vshll.u32 2131351028, %v4993
    %v5003 = vshrl.u32 2102212464, %v4994
    %v5004 = vor.u32 %v5002, %v5003
    %v5005 = vshll.u32 2102212464, %v4993
    %v5006 = vshrl.u32 920167782, %v4994
    %v5007 = vor.u32 %v5005, %v5006
    %v5008 = vshll.u32 920167782, %v4993
    %v5009 = vshrl.u32 1326507024, %v4994
    %v5010 = vor.u32 %v5008, %v5009
    %vm5011 = vcmp.lt.s32.totalorder %v4992, 1
    %vm5012 = vcmp.lt.s32.totalorder %v4992, 2
    %vm5013 = vcmp.lt.s32.totalorder %v4992, 3
    %vm5014 = vcmp.lt.s32.totalorder %v4992, 4
    %v5015 = vsel %vm5011, %v4995, %v4998
    %v5016 = vsel %vm5014, %v5004, 2102212464
    %v5017 = vsel %vm5013, %v5001, %v5016
    %v5018 = vsel %vm5012, %v5015, %v5017
    %v5019 = vsel %vm5011, %v4998, %v5001
    %v5020 = vsel %vm5014, %v5007, 920167782
    %v5021 = vsel %vm5013, %v5004, %v5020
    %v5022 = vsel %vm5012, %v5019, %v5021
    %v5023 = vsel %vm5011, %v5001, %v5004
    %v5024 = vsel %vm5014, %v5010, 1326507024
    %v5025 = vsel %vm5013, %v5007, %v5024
    %v5026 = vsel %vm5012, %v5023, %v5025
    %v5027 = vshll.u32 %v4987, 8
    %v5028 = vmul.u32.u64.compose %v5027, %v5026
    %v5029 = vextract.low.u32 %v5028
    %v5030 = vextract.high.u32 %v5028
    %v5031 = vmul.u32.u64.compose %v5027, %v5022
    %v5032 = vextract.low.u32 %v5031
    %v5033 = vextract.high.u32 %v5031
    %v5034 = vmul.u32 %v5027, %v5018
    %v5035 = vadd.s32 %v5030, %v5032
    %vm5036 = vc.u32 %v5030, %v5032
    %v5037 = vadd.s32 %v5033, 1
    %v5038 = vsel %vm5036, %v5037, %v5033
    %v5039 = vadd.s32 %v5034, %v5038
    %v5040 = vadd.s32 %v5039, 536870912
    %v5041 = vshrl.u32 %v5040, 30
    %v5042 = vshll.u32 %v5041, 30
    %v5043 = vsub.s32 %v5039, %v5042
    %vm5044 = vcmp.lt.s32.totalorder %v5043, 0
    %v5045 = vsub.s32 0, %v5043
    %v5046 = vsel %vm5044, %v5045, %v5043
    %v5047 = vclz %v5046
    %v5048 = vsub.s32 %v5047, 2
    %vm5049 = vcmp.gt.s32.totalorder 0, %v5048
    %v5050 = vsel %vm5049, 0, %v5048
    %v5051 = vsub.s32 32, %v5050
    %v5052 = vshll.u32 %v5043, %v5050
    %v5053 = vshrl.u32 %v5035, %v5051
    %v5054 = vor.u32 %v5052, %v5053
    %v5055 = vsub.s32 4294967266, %v5050
    %v5056 = vadd.s32 %v5055, 127
    %v5057 = vshll.u32 %v5056, 23
    %v5058 = vor.u32 4788187, %v5057
    %v5059 = vand.u32 2147483647, %v5058
    %v5061 = vcvt.s32.f32 %v5054
    %v5062 = vmul.f32 %v5061, %v5059
    %v5063 = vxor.u32 %v5062, 2147483648
    %v5064 = vsel %vm4981, %v5063, %v5062
    %v5065 = vsub.s32 4, %v5041
    %v5066 = vsel %vm4981, %v5065, %v5041
    %v5067 = vsel %vm4980, %v4666, %v5064
    %v5068 = vsel %vm4980, 0, %v5066
    %v5069 = vcosq.f32.pop %v5067
    %v5070 = vsinq.f32.pop %v5067
    %vm5071 = vweird.f32 %v4666
    %v5072 = vand.u32 %v5068, 3
    %vm5073 = vcmp.lt.s32.totalorder %v5072, 2
    %vm5074 = vcmp.eq.s32.totalorder %v5072, 0
    %v5075 = vxor.u32 %v5070, 2147483648
    %v5076 = vsel %vm5074, %v5069, %v5075
    %vm5077 = vcmp.eq.s32.totalorder %v5072, 2
    %v5078 = vxor.u32 %v5069, 2147483648
    %v5079 = vsel %vm5077, %v5078, %v5070
    %v5080 = vsel %vm5073, %v5076, %v5079
    %v5081 = vsel %vm5071, nan, %v5080
    %v5082 = vmul.f32 %v4772, 1.5414666
    %v5083 = vmul.f32 %v4875, 1.5414666
    %v5084 = vmul.f32 %v4978, 1.5414666
    %v5085 = vmul.f32 %v5081, 1.5414666
    %v5086 = vsub.f32 1.5940298, %v5082
    %v5087 = vsub.f32 1.5940298, %v5083
    %v5088 = vsub.f32 1.5940298, %v5084
    %v5089 = vsub.f32 1.5940298, %v5085
    %v5090 = vrcp.pop %v5086
    %v5091 = vrcp.pop %v5087
    %v5092 = vrcp.pop %v5088
    %v5093 = vrcp.pop %v5089
    %v5094 = vmul.f32 %v5090, 0.05090673
    %v5095 = vmul.f32 %v5091, 0.05090673
    %v5096 = vmul.f32 %v5092, 0.05090673
    %v5097 = vmul.f32 %v5093, 0.05090673
    %v5098 = vsub.f32 1.0, %v5094
    %v5099 = vsub.f32 1.0, %v5095
    %v5100 = vsub.f32 1.0, %v5096
    %v5101 = vsub.f32 1.0, %v5097
    %s5102 = sadd.s32 %s606, 8
    %s5103 = sld [smem:[#allocation3 + %s5102]]
    %v5104 = vstv %s5103
    %v5105 = vmul.f32 %v5104, %v5098
    %v5106 = vmul.f32 %v5104, %v5099
    %v5107 = vmul.f32 %v5104, %v5100
    %v5108 = vmul.f32 %v5104, %v5101
    %v5109 = vadd.f32 %v4547, %v5105
    %v5110 = vadd.f32 %v4548, %v5106
    %v5111 = vadd.f32 %v4549, %v5107
    %v5112 = vadd.f32 %v4550, %v5108
    %5113 = vst [vmem:[#allocation2] sm:$0xff] %v5109
    %5114 = vst [vmem:[#allocation2 + $0x8] sm:$0xff] %v5110
    %5115 = vst [vmem:[#allocation2 + $0x10] sm:$0xff] %v5111
    %5116 = vst [vmem:[#allocation2 + $0x18] sm:$0xff] %v5112
    // Predicated region
    $region26: #{tpu_custom_call.1} parent=1 // pred_check
      %p5117 = pneg %p43
    $region27: #{tpu_custom_call.1} parent=1 // pred_check_branch
      %5119 = sbr.rel (%p5117) target = $region29
    $region28: #{tpu_custom_call.1} parent=1 // pred_region
      %v5120 = vld [vmem:[#allocation2] sm:$0xff]
      %v5121 = vld [vmem:[#allocation2 + $0x8] sm:$0xff]
      %v5122 = vld [vmem:[#allocation2 + $0x10] sm:$0xff]
      %v5123 = vld [vmem:[#allocation2 + $0x18] sm:$0xff]
      %5124 = vst [vmem:[#allocation8] sm:$0xff] %v5120
      %5125 = vst [vmem:[#allocation8 + $0x8] sm:$0xff] %v5121
      %5126 = vst [vmem:[#allocation8 + $0x10] sm:$0xff] %v5122
      %5127 = vst [vmem:[#allocation8 + $0x18] sm:$0xff] %v5123
    $region29: #{tpu_custom_call.1} parent=1 // pred_fallthru
      _
    // Predicated region
    $region30: #{tpu_custom_call.1} parent=1 // pred_check
      _
    $region31: #{tpu_custom_call.1} parent=1 // pred_check_branch
      %5129 = sbr.rel (0) target = $region33
    $region32: #{tpu_custom_call.1} parent=1 // pred_region
      %s5131 = ssub.s32 512, 512
      %5132 = vsyncadd [#allocation5], %s5131
      %s5134 = sshll.u32 [#allocation8], 4
      %s5135 = int_to_ptr.vmem [resolvable:$true] %s5134
      %5137 = dma.vmem_to_hbm [thread:$0]  %s5135, 512, %s3, [#allocation5]
    $region33: #{tpu_custom_call.1} parent=1 // pred_fallthru
      _
    // Predicated region
    $region34: #{tpu_custom_call.1} parent=1 // pred_check
      _
    $region35: #{tpu_custom_call.1} parent=1 // pred_check_branch
      %5139 = sbr.rel (0) target = $region37
    $region36: #{tpu_custom_call.1} parent=1 // pred_region
      %5140 = dma.done [#allocation5], 512
    $region37: #{tpu_custom_call.1} parent=1 // pred_fallthru
      _
    %5141 = vsyncpa [#allocation4], 1
    %5142 = vsyncpa [#allocation5], 1
    %5143 = vsyncpa [#allocation6], 1

</llo_original>
